<compile_context>
chip_gen: v7x
topology: tpu7x:2x2x1
jax: 0.10.0
libtpu: 0.0.40
codegen_flags: <defaults>
</compile_context>

<pallas_src>
import math
import functools

import jax
import jax.numpy as jnp
from jax import lax
from jax.experimental import pallas as pl
from jax.experimental.pallas import tpu as pltpu


def _layer_norm(x, gamma, beta, eps=1e-5):
    mean = jnp.mean(x, axis=-1, keepdims=True)
    var = jnp.mean((x - mean) ** 2, axis=-1, keepdims=True)
    return (x - mean) * lax.rsqrt(var + eps) * gamma + beta


def _dot(a, b):
    return jnp.dot(a, b, preferred_element_type=jnp.float32)


def _dot_nt(a, b):
    # a (M, K) x b (N, K) -> (M, N), contraction on the last dim of both
    return lax.dot_general(a, b, (((1,), (1,)), ((), ())),
                           preferred_element_type=jnp.float32)


def transformer_kernel(
    x_ref, bpe_ref,
    we_ref, wqkv_ref, bqkv_ref,
    wo_ref, bo_ref,
    g1_ref, b1_ref,
    w1_ref, bf1_ref, w2_ref, bf2_ref,
    g2_ref, b2_ref,
    out_ref,
    *, num_heads, batch,
):
    x = x_ref[...].astype(jnp.float32)                    # (TB, D_in)

    # ---- embedding; bias + positional encoding pre-folded into bpe ----
    h0 = _dot(x, we_ref[...]) + bpe_ref[...]               # (TB, D)

    TB, D = h0.shape
    Dh = D // num_heads

    # ---- fused QKV projection (1/sqrt(Dh) already folded into Q weights) ----
    qkv = _dot(h0, wqkv_ref[...]) + bqkv_ref[...]          # (TB, 3D)

    # ---- same-batch mask: row i belongs to batch (i % B) ----
    ri = lax.broadcasted_iota(jnp.int32, (TB, TB), 0)
    ci = lax.broadcasted_iota(jnp.int32, (TB, TB), 1)
    same_batch = (ri % batch) == (ci % batch)

    # ---- multi-head self-attention (dropout identity in eval mode) ----
    wo = wo_ref[...]
    acc = jnp.zeros((TB, D), jnp.float32)
    for h in range(num_heads):                             # static unroll (4 heads)
        qh = qkv[:, h * Dh:(h + 1) * Dh]
        kh = qkv[:, D + h * Dh:D + (h + 1) * Dh]
        vh = qkv[:, 2 * D + h * Dh:2 * D + (h + 1) * Dh]
        s = _dot_nt(qh, kh)                                # (TB, TB), all batches at once
        s = jnp.where(same_batch, s, -1e30)                # kill cross-batch attention
        s = s - jnp.max(s, axis=-1, keepdims=True)
        e = jnp.exp(s)
        p = e * pl.reciprocal(jnp.sum(e, axis=-1, keepdims=True), approx=True)
        ctx = _dot(p, vh)                                  # (TB, Dh)
        # accumulate through the matching slice of the output projection
        acc = acc + _dot(ctx, wo[h * Dh:(h + 1) * Dh, :])  # (TB, D)
    attn_out = acc + bo_ref[...]

    # ---- post-norm encoder layer (PyTorch norm_first=False) ----
    h1 = _layer_norm(h0 + attn_out, g1_ref[...], b1_ref[...])
    ff = jnp.maximum(_dot(h1, w1_ref[...]) + bf1_ref[...], 0.0)   # relu, (TB, FF)
    ff = _dot(ff, w2_ref[...]) + bf2_ref[...]                     # (TB, D)
    h2 = _layer_norm(h1 + ff, g2_ref[...], b2_ref[...])

    # ---- module-level residual: x = x + transformer_encoder(x) ----
    out_ref[...] = (h0 + h2).astype(out_ref.dtype)


def positional_encoding(seq_len, d_model):
    position = jnp.arange(seq_len, dtype=jnp.float32)[:, None]
    div_term = jnp.exp(jnp.arange(0, d_model, 2, dtype=jnp.float32)
                       * (-math.log(10000.0) / d_model))
    ang = position * div_term                              # (seq_len, d_model//2)
    # interleave: even cols = sin, odd cols = cos
    return jnp.stack([jnp.sin(ang), jnp.cos(ang)], axis=-1).reshape(seq_len, d_model)


def multiturn_transformer_forward(x, params, num_heads=4):
    """x: (T, B, input_dim), same axis convention as the PyTorch module."""
    T, B, D_in = x.shape
    D = params["we"].shape[1]
    Dh = D // num_heads
    TB = T * B

    # ---- host-side one-time parameter prep (tiny) ----
    scale = 1.0 / math.sqrt(Dh)
    wqkv = jnp.concatenate([params["wq"] * scale, params["wk"], params["wv"]], axis=1)
    bqkv = jnp.concatenate([params["bq"] * scale, params["bk"], params["bv"]], axis=1)
    pe = positional_encoding(B, D)                          # (B, D): PE indexed by batch axis
    # embedding bias + PE for fused row ordering (row = t*B + b -> be + pe[b])
    bpe = jnp.tile(params["be"] + pe, (T, 1)).astype(jnp.float32)   # (TB, D), ~2 KB

    x_flat = x.reshape(TB, D_in)                            # free reshape, no transpose

    kernel_args = [
        x_flat, bpe,
        params["we"], wqkv, bqkv,
        params["wo"], params["bo"],
        params["g1"], params["b1"],
        params["w1"], params["bf1"], params["w2"], params["bf2"],
        params["g2"], params["b2"],
    ]

    def full_spec(a):
        return pl.BlockSpec(a.shape, lambda i: (0,) * a.ndim)

    out = pl.pallas_call(
        functools.partial(transformer_kernel, num_heads=num_heads, batch=B),
        out_shape=jax.ShapeDtypeStruct((TB, D), jnp.float32),
        grid=(1,),                                          # single invocation: whole problem in VMEM
        in_specs=[full_spec(a) for a in kernel_args],
        out_specs=pl.BlockSpec((TB, D), lambda i: (0, 0)),
        compiler_params=pltpu.CompilerParams(
            dimension_semantics=("arbitrary",)),
    )(*kernel_args)

    return out.reshape(T, B, D)                             # free reshape back to (T, B, D)


# ---------------- plain-JAX reference (for correctness check) ----------------
def reference_forward(x, params, num_heads=4):
    T, B, D_in = x.shape
    D = params["we"].shape[1]
    h0 = x @ params["we"] + params["be"]                    # (T, B, D)
    h0 = h0 + positional_encoding(B, D)                     # (B, D) bcast over T

    def per_b(hb):                                          # hb: (T, D)
        Dh = D // num_heads
        scale = 1.0 / math.sqrt(Dh)
        q = hb @ params["wq"] + params["bq"]
        k = hb @ params["wk"] + params["bk"]
        v = hb @ params["wv"] + params["bv"]
        ctx = []
        for h in range(num_heads):
            qh = q[:, h * Dh:(h + 1) * Dh]
            kh = k[:, h * Dh:(h + 1) * Dh]
            vh = v[:, h * Dh:(h + 1) * Dh]
            s = _dot_nt(qh, kh) * scale
            s = s - jnp.max(s, axis=-1, keepdims=True)
            e = jnp.exp(s)
            p = e / jnp.sum(e, axis=-1, keepdims=True)
            ctx.append(p @ vh)
        ctx = jnp.concatenate(ctx, axis=-1)
        attn_out = ctx @ params["wo"] + params["bo"]
        h1 = _layer_norm(hb + attn_out, params["g1"], params["b1"])
        ff = jnp.maximum(h1 @ params["w1"] + params["bf1"], 0.0)
        ff = ff @ params["w2"] + params["bf2"]
        return _layer_norm(h1 + ff, params["g2"], params["b2"])

    enc = jax.vmap(per_b, in_axes=1, out_axes=1)(h0)
    return h0 + enc


# ---------------- deterministic parameter init ----------------
def init_params(key, d_in, d_model, d_ff):
    keys = jax.random.split(key, 16)

    def dense(k, fan_in, fan_out):
        return (jax.random.normal(k, (fan_in, fan_out), jnp.float32)
                / jnp.sqrt(jnp.float32(fan_in)))

    def bias(k, n):
        return 0.05 * jax.random.normal(k, (1, n), jnp.float32)

    p = {}
    p["we"], p["be"] = dense(keys[0], d_in, d_model), bias(keys[1], d_model)
    p["wq"], p["bq"] = dense(keys[2], d_model, d_model), bias(keys[3], d_model)
    p["wk"], p["bk"] = dense(keys[4], d_model, d_model), bias(keys[5], d_model)
    p["wv"], p["bv"] = dense(keys[6], d_model, d_model), bias(keys[7], d_model)
    p["wo"], p["bo"] = dense(keys[8], d_model, d_model), bias(keys[9], d_model)
    p["w1"], p["bf1"] = dense(keys[10], d_model, d_ff), bias(keys[11], d_ff)
    p["w2"], p["bf2"] = dense(keys[12], d_ff, d_model), bias(keys[13], d_model)
    p["g1"] = jnp.ones((1, d_model), jnp.float32) + 0.05 * jax.random.normal(
        keys[14], (1, d_model), jnp.float32)
    p["b1"] = bias(keys[15], d_model)
    p["g2"] = jnp.ones((1, d_model), jnp.float32)
    p["b2"] = jnp.zeros((1, d_model), jnp.float32)
    return p


if __name__ == "__main__":
    INPUT_DIM, MODEL_DIM, NHEAD, FF = 16, 32, 4, 2048  # FF = PyTorch default dim_feedforward
    T, B = 8, 2                                        # x: (seq-for-attention, batch, input_dim)

    key = jax.random.PRNGKey(0)
    kx, kp = jax.random.split(key)
    x = jax.random.normal(kx, (T, B, INPUT_DIM), dtype=jnp.float32)
    params = init_params(kp, INPUT_DIM, MODEL_DIM, FF)

    out = multiturn_transformer_forward(x, params, num_heads=NHEAD)
    out = jax.block_until_ready(out)
    assert out.shape == (T, B, MODEL_DIM), out.shape

    ref = reference_forward(x, params, num_heads=NHEAD)
    max_err = float(jnp.max(jnp.abs(out - ref)))
    if not (max_err < 5e-2):
        raise SystemExit(f"mismatch vs reference: max_err={max_err}")

    print("KERNEL_OK")
</pallas_src>

<mosaic_0001>
module attributes {stable_mosaic.version = 11 : i64} {
  func.func @transformer_kernel(%arg0: i32, %arg1: memref<16x16xf32, #tpu.memory_space<vmem>>, %arg2: memref<16x32xf32, #tpu.memory_space<vmem>>, %arg3: memref<16x32xf32, #tpu.memory_space<vmem>>, %arg4: memref<32x96xf32, #tpu.memory_space<vmem>>, %arg5: memref<1x96xf32, #tpu.memory_space<vmem>>, %arg6: memref<32x32xf32, #tpu.memory_space<vmem>>, %arg7: memref<1x32xf32, #tpu.memory_space<vmem>>, %arg8: memref<1x32xf32, #tpu.memory_space<vmem>>, %arg9: memref<1x32xf32, #tpu.memory_space<vmem>>, %arg10: memref<32x2048xf32, #tpu.memory_space<vmem>>, %arg11: memref<1x2048xf32, #tpu.memory_space<vmem>>, %arg12: memref<2048x32xf32, #tpu.memory_space<vmem>>, %arg13: memref<1x32xf32, #tpu.memory_space<vmem>>, %arg14: memref<1x32xf32, #tpu.memory_space<vmem>>, %arg15: memref<1x32xf32, #tpu.memory_space<vmem>>, %arg16: memref<16x32xf32, #tpu.memory_space<vmem>>) attributes {dimension_semantics = [#tpu.dimension_semantics<arbitrary>], iteration_bounds = array<i64: 1>, scalar_prefetch = 0 : i64, scratch_operands = 0 : i64, tpu.core_type = #tpu.core_type<tc>, window_params = [{pipeline_mode = #tpu.pipeline_mode<synchronous>, transform_indices = @transform_0, window_bounds = array<i64: 16, 16>}, {pipeline_mode = #tpu.pipeline_mode<synchronous>, transform_indices = @transform_1, window_bounds = array<i64: 16, 32>}, {pipeline_mode = #tpu.pipeline_mode<synchronous>, transform_indices = @transform_2, window_bounds = array<i64: 16, 32>}, {pipeline_mode = #tpu.pipeline_mode<synchronous>, transform_indices = @transform_3, window_bounds = array<i64: 32, 96>}, {pipeline_mode = #tpu.pipeline_mode<synchronous>, transform_indices = @transform_4, window_bounds = array<i64: 1, 96>}, {pipeline_mode = #tpu.pipeline_mode<synchronous>, transform_indices = @transform_5, window_bounds = array<i64: 32, 32>}, {pipeline_mode = #tpu.pipeline_mode<synchronous>, transform_indices = @transform_6, window_bounds = array<i64: 1, 32>}, {pipeline_mode = #tpu.pipeline_mode<synchronous>, transform_indices = @transform_7, window_bounds = array<i64: 1, 32>}, {pipeline_mode = #tpu.pipeline_mode<synchronous>, transform_indices = @transform_8, window_bounds = array<i64: 1, 32>}, {pipeline_mode = #tpu.pipeline_mode<synchronous>, transform_indices = @transform_9, window_bounds = array<i64: 32, 2048>}, {pipeline_mode = #tpu.pipeline_mode<synchronous>, transform_indices = @transform_10, window_bounds = array<i64: 1, 2048>}, {pipeline_mode = #tpu.pipeline_mode<synchronous>, transform_indices = @transform_11, window_bounds = array<i64: 2048, 32>}, {pipeline_mode = #tpu.pipeline_mode<synchronous>, transform_indices = @transform_12, window_bounds = array<i64: 1, 32>}, {pipeline_mode = #tpu.pipeline_mode<synchronous>, transform_indices = @transform_13, window_bounds = array<i64: 1, 32>}, {pipeline_mode = #tpu.pipeline_mode<synchronous>, transform_indices = @transform_14, window_bounds = array<i64: 1, 32>}, {pipeline_mode = #tpu.pipeline_mode<synchronous>, transform_indices = @transform_15, window_bounds = array<i64: 16, 32>}]} {
    %c0 = arith.constant 0 : index
    %c0_0 = arith.constant 0 : index
    %0 = vector.load %arg1[%c0, %c0_0] : memref<16x16xf32, #tpu.memory_space<vmem>>, vector<16x16xf32>
    %c0_1 = arith.constant 0 : index
    %c0_2 = arith.constant 0 : index
    %1 = vector.load %arg3[%c0_1, %c0_2] : memref<16x32xf32, #tpu.memory_space<vmem>>, vector<16x32xf32>
    %cst = arith.constant dense<0.000000e+00> : vector<16x32xf32>
    %2 = tpu.matmul %0, %1, %cst {dimension_numbers = #tpu.dot_dimension_numbers<[1], [0], [0], [1], [0, 0, 1, 1], [], []>} : vector<16x16xf32>, vector<16x32xf32>, vector<16x32xf32> -> vector<16x32xf32>
    %c0_3 = arith.constant 0 : index
    %c0_4 = arith.constant 0 : index
    %3 = vector.load %arg2[%c0_3, %c0_4] : memref<16x32xf32, #tpu.memory_space<vmem>>, vector<16x32xf32>
    %4 = arith.addf %2, %3 : vector<16x32xf32>
    %c0_5 = arith.constant 0 : index
    %c0_6 = arith.constant 0 : index
    %5 = vector.load %arg4[%c0_5, %c0_6] : memref<32x96xf32, #tpu.memory_space<vmem>>, vector<32x96xf32>
    %cst_7 = arith.constant dense<0.000000e+00> : vector<16x96xf32>
    %6 = tpu.matmul %4, %5, %cst_7 {dimension_numbers = #tpu.dot_dimension_numbers<[1], [0], [0], [1], [0, 0, 1, 1], [], []>} : vector<16x32xf32>, vector<32x96xf32>, vector<16x96xf32> -> vector<16x96xf32>
    %c0_8 = arith.constant 0 : index
    %c0_9 = arith.constant 0 : index
    %7 = vector.load %arg5[%c0_8, %c0_9] : memref<1x96xf32, #tpu.memory_space<vmem>>, vector<1x96xf32>
    %8 = vector.broadcast %7 : vector<1x96xf32> to vector<16x96xf32>
    %9 = arith.addf %6, %8 : vector<16x96xf32>
    %10 = tpu.iota {dimensions = array<i32: 0>} : vector<16x16xi32>
    %11 = tpu.iota {dimensions = array<i32: 1>} : vector<16x16xi32>
    %c2_i32 = arith.constant 2 : i32
    %c0_i32 = arith.constant 0 : i32
    %12 = arith.cmpi eq, %c2_i32, %c0_i32 : i32
    %c1_i32 = arith.constant 1 : i32
    %13 = arith.select %12, %c1_i32, %c2_i32 : i32
    %14 = vector.broadcast %13 : i32 to vector<16x16xi32>
    %15 = arith.remsi %10, %14 : vector<16x16xi32>
    %c0_i32_10 = arith.constant 0 : i32
    %16 = vector.broadcast %c0_i32_10 : i32 to vector<16x16xi32>
    %17 = arith.cmpi ne, %15, %16 : vector<16x16xi32>
    %c0_i32_11 = arith.constant 0 : i32
    %18 = vector.broadcast %c0_i32_11 : i32 to vector<16x16xi32>
    %19 = arith.cmpi slt, %15, %18 : vector<16x16xi32>
    %c0_i32_12 = arith.constant 0 : i32
    %20 = arith.cmpi slt, %13, %c0_i32_12 : i32
    %21 = vector.broadcast %20 : i1 to vector<16x16xi1>
    %22 = vector.broadcast %21 : vector<16x16xi1> to vector<16x16xi1>
    %23 = arith.xori %19, %22 : vector<16x16xi1>
    %24 = arith.andi %23, %17 : vector<16x16xi1>
    %25 = vector.broadcast %13 : i32 to vector<16x16xi32>
    %26 = arith.addi %15, %25 : vector<16x16xi32>
    %27 = arith.select %24, %26, %15 : vector<16x16xi1>, vector<16x16xi32>
    %c2_i32_13 = arith.constant 2 : i32
    %c0_i32_14 = arith.constant 0 : i32
    %28 = arith.cmpi eq, %c2_i32_13, %c0_i32_14 : i32
    %c1_i32_15 = arith.constant 1 : i32
    %29 = arith.select %28, %c1_i32_15, %c2_i32_13 : i32
    %30 = vector.broadcast %29 : i32 to vector<16x16xi32>
    %31 = arith.remsi %11, %30 : vector<16x16xi32>
    %c0_i32_16 = arith.constant 0 : i32
    %32 = vector.broadcast %c0_i32_16 : i32 to vector<16x16xi32>
    %33 = arith.cmpi ne, %31, %32 : vector<16x16xi32>
    %c0_i32_17 = arith.constant 0 : i32
    %34 = vector.broadcast %c0_i32_17 : i32 to vector<16x16xi32>
    %35 = arith.cmpi slt, %31, %34 : vector<16x16xi32>
    %c0_i32_18 = arith.constant 0 : i32
    %36 = arith.cmpi slt, %29, %c0_i32_18 : i32
    %37 = vector.broadcast %36 : i1 to vector<16x16xi1>
    %38 = vector.broadcast %37 : vector<16x16xi1> to vector<16x16xi1>
    %39 = arith.xori %35, %38 : vector<16x16xi1>
    %40 = arith.andi %39, %33 : vector<16x16xi1>
    %41 = vector.broadcast %29 : i32 to vector<16x16xi32>
    %42 = arith.addi %31, %41 : vector<16x16xi32>
    %43 = arith.select %40, %42, %31 : vector<16x16xi1>, vector<16x16xi32>
    %44 = arith.cmpi eq, %27, %43 : vector<16x16xi32>
    %c0_19 = arith.constant 0 : index
    %c0_20 = arith.constant 0 : index
    %45 = vector.load %arg6[%c0_19, %c0_20] : memref<32x32xf32, #tpu.memory_space<vmem>>, vector<32x32xf32>
    %cst_21 = arith.constant 0.000000e+00 : f32
    %46 = vector.broadcast %cst_21 : f32 to vector<16x32xf32>
    %47 = vector.extract_strided_slice %9 {offsets = [0, 0], sizes = [16, 8], strides = [1, 1]} : vector<16x96xf32> to vector<16x8xf32>
    %48 = vector.extract_strided_slice %9 {offsets = [0, 32], sizes = [16, 8], strides = [1, 1]} : vector<16x96xf32> to vector<16x8xf32>
    %49 = vector.extract_strided_slice %9 {offsets = [0, 64], sizes = [16, 8], strides = [1, 1]} : vector<16x96xf32> to vector<16x8xf32>
    %cst_22 = arith.constant dense<0.000000e+00> : vector<16x16xf32>
    %50 = tpu.matmul %47, %48, %cst_22 {dimension_numbers = #tpu.dot_dimension_numbers<[1], [1], [0], [0], [0, 0, 1, 0], [], []>} : vector<16x8xf32>, vector<16x8xf32>, vector<16x16xf32> -> vector<16x16xf32>
    %cst_23 = arith.constant -1.000000e+30 : f32
    %51 = vector.broadcast %cst_23 : f32 to vector<16x16xf32>
    %52 = arith.select %44, %50, %51 : vector<16x16xi1>, vector<16x16xf32>
    %cst_24 = arith.constant dense<0xFF800000> : vector<16xf32>
    %53 = vector.multi_reduction <maximumf>, %52, %cst_24 [1] : vector<16x16xf32> to vector<16xf32>
    %54 = vector.shape_cast %53 : vector<16xf32> to vector<16x1xf32>
    %55 = vector.broadcast %54 : vector<16x1xf32> to vector<16x16xf32>
    %56 = arith.subf %52, %55 : vector<16x16xf32>
    %57 = math.exp %56 : vector<16x16xf32>
    %cst_25 = arith.constant dense<0.000000e+00> : vector<16xf32>
    %58 = vector.multi_reduction <add>, %57, %cst_25 [1] : vector<16x16xf32> to vector<16xf32>
    %59 = vector.shape_cast %58 : vector<16xf32> to vector<16x1xf32>
    %60 = tpu.reciprocal %59 {approx = true} : vector<16x1xf32> -> vector<16x1xf32>
    %61 = vector.broadcast %60 : vector<16x1xf32> to vector<16x16xf32>
    %62 = arith.mulf %57, %61 : vector<16x16xf32>
    %cst_26 = arith.constant dense<0.000000e+00> : vector<16x8xf32>
    %63 = tpu.matmul %62, %49, %cst_26 {dimension_numbers = #tpu.dot_dimension_numbers<[1], [0], [0], [1], [0, 0, 1, 1], [], []>} : vector<16x16xf32>, vector<16x8xf32>, vector<16x8xf32> -> vector<16x8xf32>
    %64 = vector.extract_strided_slice %45 {offsets = [0, 0], sizes = [8, 32], strides = [1, 1]} : vector<32x32xf32> to vector<8x32xf32>
    %cst_27 = arith.constant dense<0.000000e+00> : vector<16x32xf32>
    %65 = tpu.matmul %63, %64, %cst_27 {dimension_numbers = #tpu.dot_dimension_numbers<[1], [0], [0], [1], [0, 0, 1, 1], [], []>} : vector<16x8xf32>, vector<8x32xf32>, vector<16x32xf32> -> vector<16x32xf32>
    %66 = arith.addf %46, %65 : vector<16x32xf32>
    %67 = vector.extract_strided_slice %9 {offsets = [0, 8], sizes = [16, 8], strides = [1, 1]} : vector<16x96xf32> to vector<16x8xf32>
    %68 = vector.extract_strided_slice %9 {offsets = [0, 40], sizes = [16, 8], strides = [1, 1]} : vector<16x96xf32> to vector<16x8xf32>
    %69 = vector.extract_strided_slice %9 {offsets = [0, 72], sizes = [16, 8], strides = [1, 1]} : vector<16x96xf32> to vector<16x8xf32>
    %cst_28 = arith.constant dense<0.000000e+00> : vector<16x16xf32>
    %70 = tpu.matmul %67, %68, %cst_28 {dimension_numbers = #tpu.dot_dimension_numbers<[1], [1], [0], [0], [0, 0, 1, 0], [], []>} : vector<16x8xf32>, vector<16x8xf32>, vector<16x16xf32> -> vector<16x16xf32>
    %cst_29 = arith.constant -1.000000e+30 : f32
    %71 = vector.broadcast %cst_29 : f32 to vector<16x16xf32>
    %72 = arith.select %44, %70, %71 : vector<16x16xi1>, vector<16x16xf32>
    %cst_30 = arith.constant dense<0xFF800000> : vector<16xf32>
    %73 = vector.multi_reduction <maximumf>, %72, %cst_30 [1] : vector<16x16xf32> to vector<16xf32>
    %74 = vector.shape_cast %73 : vector<16xf32> to vector<16x1xf32>
    %75 = vector.broadcast %74 : vector<16x1xf32> to vector<16x16xf32>
    %76 = arith.subf %72, %75 : vector<16x16xf32>
    %77 = math.exp %76 : vector<16x16xf32>
    %cst_31 = arith.constant dense<0.000000e+00> : vector<16xf32>
    %78 = vector.multi_reduction <add>, %77, %cst_31 [1] : vector<16x16xf32> to vector<16xf32>
    %79 = vector.shape_cast %78 : vector<16xf32> to vector<16x1xf32>
    %80 = tpu.reciprocal %79 {approx = true} : vector<16x1xf32> -> vector<16x1xf32>
    %81 = vector.broadcast %80 : vector<16x1xf32> to vector<16x16xf32>
    %82 = arith.mulf %77, %81 : vector<16x16xf32>
    %cst_32 = arith.constant dense<0.000000e+00> : vector<16x8xf32>
    %83 = tpu.matmul %82, %69, %cst_32 {dimension_numbers = #tpu.dot_dimension_numbers<[1], [0], [0], [1], [0, 0, 1, 1], [], []>} : vector<16x16xf32>, vector<16x8xf32>, vector<16x8xf32> -> vector<16x8xf32>
    %84 = vector.extract_strided_slice %45 {offsets = [8, 0], sizes = [8, 32], strides = [1, 1]} : vector<32x32xf32> to vector<8x32xf32>
    %cst_33 = arith.constant dense<0.000000e+00> : vector<16x32xf32>
    %85 = tpu.matmul %83, %84, %cst_33 {dimension_numbers = #tpu.dot_dimension_numbers<[1], [0], [0], [1], [0, 0, 1, 1], [], []>} : vector<16x8xf32>, vector<8x32xf32>, vector<16x32xf32> -> vector<16x32xf32>
    %86 = arith.addf %66, %85 : vector<16x32xf32>
    %87 = vector.extract_strided_slice %9 {offsets = [0, 16], sizes = [16, 8], strides = [1, 1]} : vector<16x96xf32> to vector<16x8xf32>
    %88 = vector.extract_strided_slice %9 {offsets = [0, 48], sizes = [16, 8], strides = [1, 1]} : vector<16x96xf32> to vector<16x8xf32>
    %89 = vector.extract_strided_slice %9 {offsets = [0, 80], sizes = [16, 8], strides = [1, 1]} : vector<16x96xf32> to vector<16x8xf32>
    %cst_34 = arith.constant dense<0.000000e+00> : vector<16x16xf32>
    %90 = tpu.matmul %87, %88, %cst_34 {dimension_numbers = #tpu.dot_dimension_numbers<[1], [1], [0], [0], [0, 0, 1, 0], [], []>} : vector<16x8xf32>, vector<16x8xf32>, vector<16x16xf32> -> vector<16x16xf32>
    %cst_35 = arith.constant -1.000000e+30 : f32
    %91 = vector.broadcast %cst_35 : f32 to vector<16x16xf32>
    %92 = arith.select %44, %90, %91 : vector<16x16xi1>, vector<16x16xf32>
    %cst_36 = arith.constant dense<0xFF800000> : vector<16xf32>
    %93 = vector.multi_reduction <maximumf>, %92, %cst_36 [1] : vector<16x16xf32> to vector<16xf32>
    %94 = vector.shape_cast %93 : vector<16xf32> to vector<16x1xf32>
    %95 = vector.broadcast %94 : vector<16x1xf32> to vector<16x16xf32>
    %96 = arith.subf %92, %95 : vector<16x16xf32>
    %97 = math.exp %96 : vector<16x16xf32>
    %cst_37 = arith.constant dense<0.000000e+00> : vector<16xf32>
    %98 = vector.multi_reduction <add>, %97, %cst_37 [1] : vector<16x16xf32> to vector<16xf32>
    %99 = vector.shape_cast %98 : vector<16xf32> to vector<16x1xf32>
    %100 = tpu.reciprocal %99 {approx = true} : vector<16x1xf32> -> vector<16x1xf32>
    %101 = vector.broadcast %100 : vector<16x1xf32> to vector<16x16xf32>
    %102 = arith.mulf %97, %101 : vector<16x16xf32>
    %cst_38 = arith.constant dense<0.000000e+00> : vector<16x8xf32>
    %103 = tpu.matmul %102, %89, %cst_38 {dimension_numbers = #tpu.dot_dimension_numbers<[1], [0], [0], [1], [0, 0, 1, 1], [], []>} : vector<16x16xf32>, vector<16x8xf32>, vector<16x8xf32> -> vector<16x8xf32>
    %104 = vector.extract_strided_slice %45 {offsets = [16, 0], sizes = [8, 32], strides = [1, 1]} : vector<32x32xf32> to vector<8x32xf32>
    %cst_39 = arith.constant dense<0.000000e+00> : vector<16x32xf32>
    %105 = tpu.matmul %103, %104, %cst_39 {dimension_numbers = #tpu.dot_dimension_numbers<[1], [0], [0], [1], [0, 0, 1, 1], [], []>} : vector<16x8xf32>, vector<8x32xf32>, vector<16x32xf32> -> vector<16x32xf32>
    %106 = arith.addf %86, %105 : vector<16x32xf32>
    %107 = vector.extract_strided_slice %9 {offsets = [0, 24], sizes = [16, 8], strides = [1, 1]} : vector<16x96xf32> to vector<16x8xf32>
    %108 = vector.extract_strided_slice %9 {offsets = [0, 56], sizes = [16, 8], strides = [1, 1]} : vector<16x96xf32> to vector<16x8xf32>
    %109 = vector.extract_strided_slice %9 {offsets = [0, 88], sizes = [16, 8], strides = [1, 1]} : vector<16x96xf32> to vector<16x8xf32>
    %cst_40 = arith.constant dense<0.000000e+00> : vector<16x16xf32>
    %110 = tpu.matmul %107, %108, %cst_40 {dimension_numbers = #tpu.dot_dimension_numbers<[1], [1], [0], [0], [0, 0, 1, 0], [], []>} : vector<16x8xf32>, vector<16x8xf32>, vector<16x16xf32> -> vector<16x16xf32>
    %cst_41 = arith.constant -1.000000e+30 : f32
    %111 = vector.broadcast %cst_41 : f32 to vector<16x16xf32>
    %112 = arith.select %44, %110, %111 : vector<16x16xi1>, vector<16x16xf32>
    %cst_42 = arith.constant dense<0xFF800000> : vector<16xf32>
    %113 = vector.multi_reduction <maximumf>, %112, %cst_42 [1] : vector<16x16xf32> to vector<16xf32>
    %114 = vector.shape_cast %113 : vector<16xf32> to vector<16x1xf32>
    %115 = vector.broadcast %114 : vector<16x1xf32> to vector<16x16xf32>
    %116 = arith.subf %112, %115 : vector<16x16xf32>
    %117 = math.exp %116 : vector<16x16xf32>
    %cst_43 = arith.constant dense<0.000000e+00> : vector<16xf32>
    %118 = vector.multi_reduction <add>, %117, %cst_43 [1] : vector<16x16xf32> to vector<16xf32>
    %119 = vector.shape_cast %118 : vector<16xf32> to vector<16x1xf32>
    %120 = tpu.reciprocal %119 {approx = true} : vector<16x1xf32> -> vector<16x1xf32>
    %121 = vector.broadcast %120 : vector<16x1xf32> to vector<16x16xf32>
    %122 = arith.mulf %117, %121 : vector<16x16xf32>
    %cst_44 = arith.constant dense<0.000000e+00> : vector<16x8xf32>
    %123 = tpu.matmul %122, %109, %cst_44 {dimension_numbers = #tpu.dot_dimension_numbers<[1], [0], [0], [1], [0, 0, 1, 1], [], []>} : vector<16x16xf32>, vector<16x8xf32>, vector<16x8xf32> -> vector<16x8xf32>
    %124 = vector.extract_strided_slice %45 {offsets = [24, 0], sizes = [8, 32], strides = [1, 1]} : vector<32x32xf32> to vector<8x32xf32>
    %cst_45 = arith.constant dense<0.000000e+00> : vector<16x32xf32>
    %125 = tpu.matmul %123, %124, %cst_45 {dimension_numbers = #tpu.dot_dimension_numbers<[1], [0], [0], [1], [0, 0, 1, 1], [], []>} : vector<16x8xf32>, vector<8x32xf32>, vector<16x32xf32> -> vector<16x32xf32>
    %126 = arith.addf %106, %125 : vector<16x32xf32>
    %c0_46 = arith.constant 0 : index
    %c0_47 = arith.constant 0 : index
    %127 = vector.load %arg7[%c0_46, %c0_47] : memref<1x32xf32, #tpu.memory_space<vmem>>, vector<1x32xf32>
    %128 = vector.broadcast %127 : vector<1x32xf32> to vector<16x32xf32>
    %129 = arith.addf %126, %128 : vector<16x32xf32>
    %130 = arith.addf %4, %129 : vector<16x32xf32>
    %c0_48 = arith.constant 0 : index
    %c0_49 = arith.constant 0 : index
    %131 = vector.load %arg8[%c0_48, %c0_49] : memref<1x32xf32, #tpu.memory_space<vmem>>, vector<1x32xf32>
    %c0_50 = arith.constant 0 : index
    %c0_51 = arith.constant 0 : index
    %132 = vector.load %arg9[%c0_50, %c0_51] : memref<1x32xf32, #tpu.memory_space<vmem>>, vector<1x32xf32>
    %cst_52 = arith.constant dense<0.000000e+00> : vector<16xf32>
    %133 = vector.multi_reduction <add>, %130, %cst_52 [1] : vector<16x32xf32> to vector<16xf32>
    %134 = vector.shape_cast %133 : vector<16xf32> to vector<16x1xf32>
    %cst_53 = arith.constant 3.200000e+01 : f32
    %135 = vector.broadcast %cst_53 : f32 to vector<16x1xf32>
    %136 = arith.divf %134, %135 : vector<16x1xf32>
    %137 = vector.broadcast %136 : vector<16x1xf32> to vector<16x32xf32>
    %138 = arith.subf %130, %137 : vector<16x32xf32>
    %139 = arith.mulf %138, %138 : vector<16x32xf32>
    %cst_54 = arith.constant dense<0.000000e+00> : vector<16xf32>
    %140 = vector.multi_reduction <add>, %139, %cst_54 [1] : vector<16x32xf32> to vector<16xf32>
    %141 = vector.shape_cast %140 : vector<16xf32> to vector<16x1xf32>
    %cst_55 = arith.constant 3.200000e+01 : f32
    %142 = vector.broadcast %cst_55 : f32 to vector<16x1xf32>
    %143 = arith.divf %141, %142 : vector<16x1xf32>
    %144 = vector.broadcast %136 : vector<16x1xf32> to vector<16x32xf32>
    %145 = arith.subf %130, %144 : vector<16x32xf32>
    %cst_56 = arith.constant 9.99999974E-6 : f32
    %146 = vector.broadcast %cst_56 : f32 to vector<16x1xf32>
    %147 = arith.addf %143, %146 : vector<16x1xf32>
    %148 = math.rsqrt %147 : vector<16x1xf32>
    %149 = vector.broadcast %148 : vector<16x1xf32> to vector<16x32xf32>
    %150 = arith.mulf %145, %149 : vector<16x32xf32>
    %151 = vector.broadcast %131 : vector<1x32xf32> to vector<16x32xf32>
    %152 = arith.mulf %150, %151 : vector<16x32xf32>
    %153 = vector.broadcast %132 : vector<1x32xf32> to vector<16x32xf32>
    %154 = arith.addf %152, %153 : vector<16x32xf32>
    %c0_57 = arith.constant 0 : index
    %c0_58 = arith.constant 0 : index
    %155 = vector.load %arg10[%c0_57, %c0_58] : memref<32x2048xf32, #tpu.memory_space<vmem>>, vector<32x2048xf32>
    %cst_59 = arith.constant dense<0.000000e+00> : vector<16x2048xf32>
    %156 = tpu.matmul %154, %155, %cst_59 {dimension_numbers = #tpu.dot_dimension_numbers<[1], [0], [0], [1], [0, 0, 1, 1], [], []>} : vector<16x32xf32>, vector<32x2048xf32>, vector<16x2048xf32> -> vector<16x2048xf32>
    %c0_60 = arith.constant 0 : index
    %c0_61 = arith.constant 0 : index
    %157 = vector.load %arg11[%c0_60, %c0_61] : memref<1x2048xf32, #tpu.memory_space<vmem>>, vector<1x2048xf32>
    %158 = vector.broadcast %157 : vector<1x2048xf32> to vector<16x2048xf32>
    %159 = arith.addf %156, %158 : vector<16x2048xf32>
    %cst_62 = arith.constant 0.000000e+00 : f32
    %160 = vector.broadcast %cst_62 : f32 to vector<16x2048xf32>
    %161 = arith.maximumf %159, %160 : vector<16x2048xf32>
    %c0_63 = arith.constant 0 : index
    %c0_64 = arith.constant 0 : index
    %162 = vector.load %arg12[%c0_63, %c0_64] : memref<2048x32xf32, #tpu.memory_space<vmem>>, vector<2048x32xf32>
    %cst_65 = arith.constant dense<0.000000e+00> : vector<16x32xf32>
    %163 = tpu.matmul %161, %162, %cst_65 {dimension_numbers = #tpu.dot_dimension_numbers<[1], [0], [0], [1], [0, 0, 1, 1], [], []>} : vector<16x2048xf32>, vector<2048x32xf32>, vector<16x32xf32> -> vector<16x32xf32>
    %c0_66 = arith.constant 0 : index
    %c0_67 = arith.constant 0 : index
    %164 = vector.load %arg13[%c0_66, %c0_67] : memref<1x32xf32, #tpu.memory_space<vmem>>, vector<1x32xf32>
    %165 = vector.broadcast %164 : vector<1x32xf32> to vector<16x32xf32>
    %166 = arith.addf %163, %165 : vector<16x32xf32>
    %167 = arith.addf %154, %166 : vector<16x32xf32>
    %c0_68 = arith.constant 0 : index
    %c0_69 = arith.constant 0 : index
    %168 = vector.load %arg14[%c0_68, %c0_69] : memref<1x32xf32, #tpu.memory_space<vmem>>, vector<1x32xf32>
    %c0_70 = arith.constant 0 : index
    %c0_71 = arith.constant 0 : index
    %169 = vector.load %arg15[%c0_70, %c0_71] : memref<1x32xf32, #tpu.memory_space<vmem>>, vector<1x32xf32>
    %cst_72 = arith.constant dense<0.000000e+00> : vector<16xf32>
    %170 = vector.multi_reduction <add>, %167, %cst_72 [1] : vector<16x32xf32> to vector<16xf32>
    %171 = vector.shape_cast %170 : vector<16xf32> to vector<16x1xf32>
    %cst_73 = arith.constant 3.200000e+01 : f32
    %172 = vector.broadcast %cst_73 : f32 to vector<16x1xf32>
    %173 = arith.divf %171, %172 : vector<16x1xf32>
    %174 = vector.broadcast %173 : vector<16x1xf32> to vector<16x32xf32>
    %175 = arith.subf %167, %174 : vector<16x32xf32>
    %176 = arith.mulf %175, %175 : vector<16x32xf32>
    %cst_74 = arith.constant dense<0.000000e+00> : vector<16xf32>
    %177 = vector.multi_reduction <add>, %176, %cst_74 [1] : vector<16x32xf32> to vector<16xf32>
    %178 = vector.shape_cast %177 : vector<16xf32> to vector<16x1xf32>
    %cst_75 = arith.constant 3.200000e+01 : f32
    %179 = vector.broadcast %cst_75 : f32 to vector<16x1xf32>
    %180 = arith.divf %178, %179 : vector<16x1xf32>
    %181 = vector.broadcast %173 : vector<16x1xf32> to vector<16x32xf32>
    %182 = arith.subf %167, %181 : vector<16x32xf32>
    %cst_76 = arith.constant 9.99999974E-6 : f32
    %183 = vector.broadcast %cst_76 : f32 to vector<16x1xf32>
    %184 = arith.addf %180, %183 : vector<16x1xf32>
    %185 = math.rsqrt %184 : vector<16x1xf32>
    %186 = vector.broadcast %185 : vector<16x1xf32> to vector<16x32xf32>
    %187 = arith.mulf %182, %186 : vector<16x32xf32>
    %188 = vector.broadcast %168 : vector<1x32xf32> to vector<16x32xf32>
    %189 = arith.mulf %187, %188 : vector<16x32xf32>
    %190 = vector.broadcast %169 : vector<1x32xf32> to vector<16x32xf32>
    %191 = arith.addf %189, %190 : vector<16x32xf32>
    %192 = arith.addf %4, %191 : vector<16x32xf32>
    %c0_77 = arith.constant 0 : index
    %c0_78 = arith.constant 0 : index
    %193 = vector.load %arg16[%c0_77, %c0_78] : memref<16x32xf32, #tpu.memory_space<vmem>>, vector<16x32xf32>
    tpu.vector_store %arg16[%c0_77, %c0_78], %192 {strides = array<i32>} : memref<16x32xf32, #tpu.memory_space<vmem>>, vector<16x32xf32>,
    return
  }
  func.func @transform_0(%arg0: i32) -> (i32, i32) {
    %c0_i32 = arith.constant 0 : i32
    %c0_i32_0 = arith.constant 0 : i32
    %c0_i32_1 = arith.constant 0 : i32
    return %c0_i32, %c0_i32_0 : i32, i32
  }
  func.func @transform_1(%arg0: i32) -> (i32, i32) {
    %c0_i32 = arith.constant 0 : i32
    %c0_i32_0 = arith.constant 0 : i32
    %c0_i32_1 = arith.constant 0 : i32
    return %c0_i32, %c0_i32_0 : i32, i32
  }
  func.func @transform_2(%arg0: i32) -> (i32, i32) {
    %c0_i32 = arith.constant 0 : i32
    %c0_i32_0 = arith.constant 0 : i32
    %c0_i32_1 = arith.constant 0 : i32
    return %c0_i32, %c0_i32_0 : i32, i32
  }
  func.func @transform_3(%arg0: i32) -> (i32, i32) {
    %c0_i32 = arith.constant 0 : i32
    %c0_i32_0 = arith.constant 0 : i32
    %c0_i32_1 = arith.constant 0 : i32
    return %c0_i32, %c0_i32_0 : i32, i32
  }
  func.func @transform_4(%arg0: i32) -> (i32, i32) {
    %c0_i32 = arith.constant 0 : i32
    %c0_i32_0 = arith.constant 0 : i32
    %c0_i32_1 = arith.constant 0 : i32
    return %c0_i32, %c0_i32_0 : i32, i32
  }
  func.func @transform_5(%arg0: i32) -> (i32, i32) {
    %c0_i32 = arith.constant 0 : i32
    %c0_i32_0 = arith.constant 0 : i32
    %c0_i32_1 = arith.constant 0 : i32
    return %c0_i32, %c0_i32_0 : i32, i32
  }
  func.func @transform_6(%arg0: i32) -> (i32, i32) {
    %c0_i32 = arith.constant 0 : i32
    %c0_i32_0 = arith.constant 0 : i32
    %c0_i32_1 = arith.constant 0 : i32
    return %c0_i32, %c0_i32_0 : i32, i32
  }
  func.func @transform_7(%arg0: i32) -> (i32, i32) {
    %c0_i32 = arith.constant 0 : i32
    %c0_i32_0 = arith.constant 0 : i32
    %c0_i32_1 = arith.constant 0 : i32
    return %c0_i32, %c0_i32_0 : i32, i32
  }
  func.func @transform_8(%arg0: i32) -> (i32, i32) {
    %c0_i32 = arith.constant 0 : i32
    %c0_i32_0 = arith.constant 0 : i32
    %c0_i32_1 = arith.constant 0 : i32
    return %c0_i32, %c0_i32_0 : i32, i32
  }
  func.func @transform_9(%arg0: i32) -> (i32, i32) {
    %c0_i32 = arith.constant 0 : i32
    %c0_i32_0 = arith.constant 0 : i32
    %c0_i32_1 = arith.constant 0 : i32
    return %c0_i32, %c0_i32_0 : i32, i32
  }
  func.func @transform_10(%arg0: i32) -> (i32, i32) {
    %c0_i32 = arith.constant 0 : i32
    %c0_i32_0 = arith.constant 0 : i32
    %c0_i32_1 = arith.constant 0 : i32
    return %c0_i32, %c0_i32_0 : i32, i32
  }
  func.func @transform_11(%arg0: i32) -> (i32, i32) {
    %c0_i32 = arith.constant 0 : i32
    %c0_i32_0 = arith.constant 0 : i32
    %c0_i32_1 = arith.constant 0 : i32
    return %c0_i32, %c0_i32_0 : i32, i32
  }
  func.func @transform_12(%arg0: i32) -> (i32, i32) {
    %c0_i32 = arith.constant 0 : i32
    %c0_i32_0 = arith.constant 0 : i32
    %c0_i32_1 = arith.constant 0 : i32
    return %c0_i32, %c0_i32_0 : i32, i32
  }
  func.func @transform_13(%arg0: i32) -> (i32, i32) {
    %c0_i32 = arith.constant 0 : i32
    %c0_i32_0 = arith.constant 0 : i32
    %c0_i32_1 = arith.constant 0 : i32
    return %c0_i32, %c0_i32_0 : i32, i32
  }
  func.func @transform_14(%arg0: i32) -> (i32, i32) {
    %c0_i32 = arith.constant 0 : i32
    %c0_i32_0 = arith.constant 0 : i32
    %c0_i32_1 = arith.constant 0 : i32
    return %c0_i32, %c0_i32_0 : i32, i32
  }
  func.func @transform_15(%arg0: i32) -> (i32, i32) {
    %c0_i32 = arith.constant 0 : i32
    %c0_i32_0 = arith.constant 0 : i32
    %c0_i32_1 = arith.constant 0 : i32
    return %c0_i32, %c0_i32_0 : i32, i32
  }
}

</mosaic_0001>

<llo_original>
// kernel: tpu_custom_call.1
$region0: #{tpu_custom_call.1}
  #allocation0 [shape = 'u32[]', space=smem, size = 0x4, offset = 0x4, fixed_abs, tag = 'smem constant byte address 0x4 - core index']
  #allocation1 [shape = 'u32[144,128]{1,0:T(1,128)}', space=vmem, size = 0x12000, scoped, tag = 'internal scratch']
  %s0 = inlined_call_operand.vmem [shape: f32[16,16], index: 0, kind: input, shape index: {}]
  %s1 = inlined_call_operand.vmem [shape: f32[16,32], index: 1, kind: input, shape index: {}]
  %s2 = inlined_call_operand.vmem [shape: f32[16,32], index: 2, kind: input, shape index: {}]
  %s3 = inlined_call_operand.vmem [shape: f32[32,96], index: 3, kind: input, shape index: {}]
  %s4 = inlined_call_operand.vmem [shape: f32[1,96], index: 4, kind: input, shape index: {}]
  %s5 = inlined_call_operand.vmem [shape: f32[32,32], index: 5, kind: input, shape index: {}]
  %s6 = inlined_call_operand.vmem [shape: f32[1,32], index: 6, kind: input, shape index: {}]
  %s7 = inlined_call_operand.vmem [shape: f32[1,32], index: 7, kind: input, shape index: {}]
  %s8 = inlined_call_operand.vmem [shape: f32[1,32], index: 8, kind: input, shape index: {}]
  %s9 = inlined_call_operand.vmem [shape: f32[32,2048], index: 9, kind: input, shape index: {}]
  %s10 = inlined_call_operand.vmem [shape: f32[1,2048], index: 10, kind: input, shape index: {}]
  %s11 = inlined_call_operand.vmem [shape: f32[2048,32], index: 11, kind: input, shape index: {}]
  %s12 = inlined_call_operand.vmem [shape: f32[1,32], index: 12, kind: input, shape index: {}]
  %s13 = inlined_call_operand.vmem [shape: f32[1,32], index: 13, kind: input, shape index: {}]
  %s14 = inlined_call_operand.vmem [shape: f32[1,32], index: 14, kind: input, shape index: {}]
  %s15 = inlined_call_operand.hbm [shape: f32[16,32], index: 15, kind: output, shape index: {}]
  %s16 = sld [smem:[#allocation0]]
  $region70: #{tpu_custom_call.1} parent=0
    _
  %s18 = ssub.s32 1, %s16
  %s19 = scalar_select 0, %s18, %s16
  $region1: #{tpu_custom_call.1} parent=0
    #allocation2 [shape = 'u8[8192]{0}', space=vmem, size = 0x2000, scoped, tag = 'output window, operand 0, single buffered']
    #allocation3 [shape = 's32[1]{0}', space=sflag, size = 0x4, scoped, tag = 'scoped memory for tpu_custom_call.1']
    %20 = vsyncpa [#allocation3], 0
    // Predicated region
    $region2: #{tpu_custom_call.1} parent=1 // pred_check
      _
    $region3: #{tpu_custom_call.1} parent=1 // pred_check_branch
      %22 = sbr.rel (0) target = $region5
    $region4: #{tpu_custom_call.1} parent=1 // pred_region
      _
    $region5: #{tpu_custom_call.1} parent=1 // pred_fallthru
      _
    // Predicated region
    $region6: #{tpu_custom_call.1} parent=1 // pred_check
      _
    $region7: #{tpu_custom_call.1} parent=1 // pred_check_branch
      %24 = sbr.rel (0) target = $region9
    $region8: #{tpu_custom_call.1} parent=1 // pred_region
      _
    $region9: #{tpu_custom_call.1} parent=1 // pred_fallthru
      _
    // Predicated region
    $region10: #{tpu_custom_call.1} parent=1 // pred_check
      _
    $region11: #{tpu_custom_call.1} parent=1 // pred_check_branch
      %26 = sbr.rel (0) target = $region13
    $region12: #{tpu_custom_call.1} parent=1 // pred_region
      _
    $region13: #{tpu_custom_call.1} parent=1 // pred_fallthru
      _
    // Predicated region
    $region14: #{tpu_custom_call.1} parent=1 // pred_check
      _
    $region15: #{tpu_custom_call.1} parent=1 // pred_check_branch
      %28 = sbr.rel (0) target = $region17
    $region16: #{tpu_custom_call.1} parent=1 // pred_region
      _
    $region17: #{tpu_custom_call.1} parent=1 // pred_fallthru
      _
    // Predicated region
    $region18: #{tpu_custom_call.1} parent=1 // pred_check
      _
    $region19: #{tpu_custom_call.1} parent=1 // pred_check_branch
      %30 = sbr.rel (0) target = $region21
    $region20: #{tpu_custom_call.1} parent=1 // pred_region
      _
    $region21: #{tpu_custom_call.1} parent=1 // pred_fallthru
      _
    // Predicated region
    $region22: #{tpu_custom_call.1} parent=1 // pred_check
      _
    $region23: #{tpu_custom_call.1} parent=1 // pred_check_branch
      %32 = sbr.rel (0) target = $region25
    $region24: #{tpu_custom_call.1} parent=1 // pred_region
      _
    $region25: #{tpu_custom_call.1} parent=1 // pred_fallthru
      _
    // Predicated region
    $region26: #{tpu_custom_call.1} parent=1 // pred_check
      _
    $region27: #{tpu_custom_call.1} parent=1 // pred_check_branch
      %34 = sbr.rel (0) target = $region29
    $region28: #{tpu_custom_call.1} parent=1 // pred_region
      _
    $region29: #{tpu_custom_call.1} parent=1 // pred_fallthru
      _
    // Predicated region
    $region30: #{tpu_custom_call.1} parent=1 // pred_check
      _
    $region31: #{tpu_custom_call.1} parent=1 // pred_check_branch
      %36 = sbr.rel (0) target = $region33
    $region32: #{tpu_custom_call.1} parent=1 // pred_region
      _
    $region33: #{tpu_custom_call.1} parent=1 // pred_fallthru
      _
    // Predicated region
    $region34: #{tpu_custom_call.1} parent=1 // pred_check
      _
    $region35: #{tpu_custom_call.1} parent=1 // pred_check_branch
      %38 = sbr.rel (0) target = $region37
    $region36: #{tpu_custom_call.1} parent=1 // pred_region
      _
    $region37: #{tpu_custom_call.1} parent=1 // pred_fallthru
      _
    // Predicated region
    $region38: #{tpu_custom_call.1} parent=1 // pred_check
      _
    $region39: #{tpu_custom_call.1} parent=1 // pred_check_branch
      %40 = sbr.rel (0) target = $region41
    $region40: #{tpu_custom_call.1} parent=1 // pred_region
      _
    $region41: #{tpu_custom_call.1} parent=1 // pred_fallthru
      _
    // Predicated region
    $region42: #{tpu_custom_call.1} parent=1 // pred_check
      _
    $region43: #{tpu_custom_call.1} parent=1 // pred_check_branch
      %42 = sbr.rel (0) target = $region45
    $region44: #{tpu_custom_call.1} parent=1 // pred_region
      _
    $region45: #{tpu_custom_call.1} parent=1 // pred_fallthru
      _
    // Predicated region
    $region46: #{tpu_custom_call.1} parent=1 // pred_check
      _
    $region47: #{tpu_custom_call.1} parent=1 // pred_check_branch
      %44 = sbr.rel (0) target = $region49
    $region48: #{tpu_custom_call.1} parent=1 // pred_region
      _
    $region49: #{tpu_custom_call.1} parent=1 // pred_fallthru
      _
    // Predicated region
    $region50: #{tpu_custom_call.1} parent=1 // pred_check
      _
    $region51: #{tpu_custom_call.1} parent=1 // pred_check_branch
      %46 = sbr.rel (0) target = $region53
    $region52: #{tpu_custom_call.1} parent=1 // pred_region
      _
    $region53: #{tpu_custom_call.1} parent=1 // pred_fallthru
      _
    // Predicated region
    $region54: #{tpu_custom_call.1} parent=1 // pred_check
      _
    $region55: #{tpu_custom_call.1} parent=1 // pred_check_branch
      %48 = sbr.rel (0) target = $region57
    $region56: #{tpu_custom_call.1} parent=1 // pred_region
      _
    $region57: #{tpu_custom_call.1} parent=1 // pred_fallthru
      _
    // Predicated region
    $region58: #{tpu_custom_call.1} parent=1 // pred_check
      _
    $region59: #{tpu_custom_call.1} parent=1 // pred_check_branch
      %50 = sbr.rel (0) target = $region61
    $region60: #{tpu_custom_call.1} parent=1 // pred_region
      _
    $region61: #{tpu_custom_call.1} parent=1 // pred_fallthru
      _
    %v51 = vld [vmem:[%s0] sm:$0xff]
    %v52 = vld [vmem:[%s0 + $0x8] sm:$0xff]
    %v53 = vld [vmem:[%s2] sm:$0xff]
    %v54 = vld [vmem:[%s2 + $0x8] sm:$0xff]
    %v55 = vld [vmem:[%s1] sm:$0xff]
    %v56 = vld [vmem:[%s1 + $0x8] sm:$0xff]
    %vm57 = vcmask 130048
    %v59 = vsel %vm57, %v51, 0
    %v62 = vsel %vm57, %v52, 0
    %64 = vmatprep.subr.mxu0 0.0
    %65 = vmatpush1.msra.mxu0 %v53
    %66 = vmatprep.subr.mxu0 0.0
    %67 = vmatpush1.msra.mxu0 %v54
    %68 = vmatprep.subr.mxu0 0.0
    %69 = vmatpush1.msra.mxu0 0.0
    %70 = vmatprep.subr.mxu0 0.0
    %71 = vmatpush1.msra.mxu0 0.0
    %72 = vmatprep.subr.mxu0 0.0
    %73 = vmatpush1.msra.mxu0 0.0
    %74 = vmatprep.subr.mxu0 0.0
    %75 = vmatpush1.msra.mxu0 0.0
    %76 = vmatprep.subr.mxu0 0.0
    %77 = vmatpush1.msra.mxu0 0.0
    %78 = vmatprep.subr.mxu0 0.0
    %79 = vmatpush1.msra.mxu0 0.0
    %80 = vmatprep.subr.mxu0 0.0
    %81 = vmatpush1.msra.mxu0 0.0
    %82 = vmatprep.subr.mxu0 0.0
    %83 = vmatpush1.msra.mxu0 0.0
    %84 = vmatprep.subr.mxu0 0.0
    %85 = vmatpush1.msra.mxu0 0.0
    %86 = vmatprep.subr.mxu0 0.0
    %87 = vmatpush1.msra.mxu0 0.0
    %88 = vmatprep.subr.mxu0 0.0
    %89 = vmatpush1.msra.mxu0 0.0
    %90 = vmatprep.subr.mxu0 0.0
    %91 = vmatpush1.msra.mxu0 0.0
    %92 = vmatprep.subr.mxu0 0.0
    %93 = vmatpush1.msra.mxu0 0.0
    %94 = vmatprep.subr.mxu0 0.0
    %95 = vmatpush1.msra.mxu0 0.0
    %96 = vmatprep.subr.mxu0 0.0
    %97 = vmatpush1.msra.mxu0 0.0
    %98 = vmatprep.subr.mxu0 0.0
    %99 = vmatpush1.msra.mxu0 0.0
    %100 = vmatprep.subr.mxu0 0.0
    %101 = vmatpush1.msra.mxu0 0.0
    %102 = vmatprep.subr.mxu0 0.0
    %103 = vmatpush1.msra.mxu0 0.0
    %104 = vmatprep.subr.mxu0 0.0
    %105 = vmatpush1.msra.mxu0 0.0
    %106 = vmatprep.subr.mxu0 0.0
    %107 = vmatpush1.msra.mxu0 0.0
    %108 = vmatprep.subr.mxu0 0.0
    %109 = vmatpush1.msra.mxu0 0.0
    %110 = vmatprep.subr.mxu0 0.0
    %111 = vmatpush1.msra.mxu0 0.0
    %112 = vmatprep.subr.mxu0 0.0
    %113 = vmatpush1.msra.mxu0 0.0
    %114 = vmatprep.subr.mxu0 0.0
    %115 = vmatpush1.msra.mxu0 0.0
    %116 = vmatprep.subr.mxu0 0.0
    %117 = vmatpush1.msra.mxu0 0.0
    %118 = vmatprep.subr.mxu0 0.0
    %119 = vmatpush1.msra.mxu0 0.0
    %120 = vmatprep.subr.mxu0 0.0
    %121 = vmatpush1.msra.mxu0 0.0
    %122 = vmatprep.subr.mxu0 0.0
    %123 = vmatpush1.msra.mxu0 0.0
    %124 = vmatprep.subr.mxu0 0.0
    %125 = vmatpush1.msra.mxu0 0.0
    %126 = vmatprep.subr.mxu0 0.0
    %127 = vmatpush1.msra.mxu0 0.0
    %128 = vmatprep.mubr.f32.mxu0 0.0
    %129 = vmatmul.mubr.f32.gmra.mrb[0].mxu0 %v59
    %v130 = vpop.f32.mrb[0].mxu0
    %v131 = vadd.f32 %v55, %v130
    %v132 = vpop.f32.mrb[0].mxu0
    %133 = vmatprep.mubr.f32.mxu0 0.0
    %134 = vmatmul.mubr.f32.gmra.mrb[0].mxu0 %v62
    %v135 = vpop.f32.mrb[0].mxu0
    %v136 = vadd.f32 %v56, %v135
    %v137 = vpop.f32.mrb[0].mxu0
    %138 = vdwg.mxu0
    %v139 = vld [vmem:[%s3] sm:$0xff]
    %v140 = vld [vmem:[%s3 + $0x8] sm:$0xff]
    %v141 = vld [vmem:[%s3 + $0x10] sm:$0xff]
    %v142 = vld [vmem:[%s3 + $0x18] sm:$0xff]
    %v143 = vld [vmem:[%s4] sm:$0x1]
    %v145 = vlaneseq
    %v146 = vshrl.u32 %v145, 7
    %v147 = vsub.s32 0, %v146
    %v148 = vrot.slane %v143, %v147
    %vm150 = vcmask 261120
    %v152 = vsel %vm150, %v131, 0
    %v155 = vsel %vm150, %v136, 0
    %157 = vmatprep.subr.mxu0 0.0
    %158 = vmatpush1.msra.mxu0 %v139
    %159 = vmatprep.subr.mxu0 0.0
    %160 = vmatpush1.msra.mxu0 %v140
    %161 = vmatprep.subr.mxu0 0.0
    %162 = vmatpush1.msra.mxu0 %v141
    %163 = vmatprep.subr.mxu0 0.0
    %164 = vmatpush1.msra.mxu0 %v142
    %165 = vmatprep.subr.mxu0 0.0
    %166 = vmatpush1.msra.mxu0 0.0
    %167 = vmatprep.subr.mxu0 0.0
    %168 = vmatpush1.msra.mxu0 0.0
    %169 = vmatprep.subr.mxu0 0.0
    %170 = vmatpush1.msra.mxu0 0.0
    %171 = vmatprep.subr.mxu0 0.0
    %172 = vmatpush1.msra.mxu0 0.0
    %173 = vmatprep.subr.mxu0 0.0
    %174 = vmatpush1.msra.mxu0 0.0
    %175 = vmatprep.subr.mxu0 0.0
    %176 = vmatpush1.msra.mxu0 0.0
    %177 = vmatprep.subr.mxu0 0.0
    %178 = vmatpush1.msra.mxu0 0.0
    %179 = vmatprep.subr.mxu0 0.0
    %180 = vmatpush1.msra.mxu0 0.0
    %181 = vmatprep.subr.mxu0 0.0
    %182 = vmatpush1.msra.mxu0 0.0
    %183 = vmatprep.subr.mxu0 0.0
    %184 = vmatpush1.msra.mxu0 0.0
    %185 = vmatprep.subr.mxu0 0.0
    %186 = vmatpush1.msra.mxu0 0.0
    %187 = vmatprep.subr.mxu0 0.0
    %188 = vmatpush1.msra.mxu0 0.0
    %189 = vmatprep.subr.mxu0 0.0
    %190 = vmatpush1.msra.mxu0 0.0
    %191 = vmatprep.subr.mxu0 0.0
    %192 = vmatpush1.msra.mxu0 0.0
    %193 = vmatprep.subr.mxu0 0.0
    %194 = vmatpush1.msra.mxu0 0.0
    %195 = vmatprep.subr.mxu0 0.0
    %196 = vmatpush1.msra.mxu0 0.0
    %197 = vmatprep.subr.mxu0 0.0
    %198 = vmatpush1.msra.mxu0 0.0
    %199 = vmatprep.subr.mxu0 0.0
    %200 = vmatpush1.msra.mxu0 0.0
    %201 = vmatprep.subr.mxu0 0.0
    %202 = vmatpush1.msra.mxu0 0.0
    %203 = vmatprep.subr.mxu0 0.0
    %204 = vmatpush1.msra.mxu0 0.0
    %205 = vmatprep.subr.mxu0 0.0
    %206 = vmatpush1.msra.mxu0 0.0
    %207 = vmatprep.subr.mxu0 0.0
    %208 = vmatpush1.msra.mxu0 0.0
    %209 = vmatprep.subr.mxu0 0.0
    %210 = vmatpush1.msra.mxu0 0.0
    %211 = vmatprep.subr.mxu0 0.0
    %212 = vmatpush1.msra.mxu0 0.0
    %213 = vmatprep.subr.mxu0 0.0
    %214 = vmatpush1.msra.mxu0 0.0
    %215 = vmatprep.subr.mxu0 0.0
    %216 = vmatpush1.msra.mxu0 0.0
    %217 = vmatprep.subr.mxu0 0.0
    %218 = vmatpush1.msra.mxu0 0.0
    %219 = vmatprep.subr.mxu0 0.0
    %220 = vmatpush1.msra.mxu0 0.0
    %221 = vmatprep.mubr.f32.mxu0 0.0
    %222 = vmatmul.mubr.f32.gmra.mrb[0].mxu0 %v152
    %v223 = vpop.f32.mrb[0].mxu0
    %v224 = vadd.f32 %v148, %v223
    %v225 = vpop.f32.mrb[0].mxu0
    %226 = vmatprep.mubr.f32.mxu0 0.0
    %227 = vmatmul.mubr.f32.gmra.mrb[0].mxu0 %v155
    %v228 = vpop.f32.mrb[0].mxu0
    %v229 = vadd.f32 %v148, %v228
    %v230 = vpop.f32.mrb[0].mxu0
    %231 = vdwg.mxu0
    %v232 = vlaneseq
    %v233 = vshrl.u32 %v232, 7
    %v234 = vadd.s32 %v233, 8
    %v235 = vlaneseq
    %v236 = vand.u32 %v235, 127
    %vm237 = vcmp.lt.s32.totalorder %v233, 0
    %v238 = vsub.s32 0, %v233
    %v239 = vsel %vm237, %v238, %v233
    %v240 = vshrl.u32 %v239, 1
    %v241 = vand.u32 %v239, 1
    %v242 = vsub.s32 0, %v241
    %v243 = vsel %vm237, %v242, %v241
    %vm244 = vcmp.lt.s32.totalorder %v234, 0
    %v245 = vsub.s32 0, %v234
    %v246 = vsel %vm244, %v245, %v234
    %v247 = vshrl.u32 %v246, 1
    %v248 = vand.u32 %v246, 1
    %v249 = vsub.s32 0, %v248
    %v250 = vsel %vm244, %v249, %v248
    %vm251 = vcmp.ne.s32.totalorder %v243, 0
    %vm252 = vcmp.ne.s32.totalorder %v250, 0
    %vm253 = vcmp.lt.s32.totalorder %v243, 0
    %vm254 = vcmp.lt.s32.totalorder %v250, 0
    %vm255 = vmand %vm253, %vm251
    %vm256 = vmand %vm254, %vm252
    %v257 = vadd.s32 %v243, 2
    %v258 = vadd.s32 %v250, 2
    %v259 = vsel %vm255, %v257, %v243
    %v260 = vsel %vm256, %v258, %v250
    %vm261 = vcmp.lt.s32.totalorder %v236, 0
    %v262 = vsub.s32 0, %v236
    %v263 = vsel %vm261, %v262, %v236
    %v264 = vshrl.u32 %v263, 1
    %v265 = vand.u32 %v263, 1
    %v266 = vsub.s32 0, %v265
    %v267 = vsel %vm261, %v266, %v265
    %vm268 = vcmp.ne.s32.totalorder %v267, 0
    %vm269 = vcmp.lt.s32.totalorder %v267, 0
    %vm270 = vmand %vm269, %vm268
    %v271 = vadd.s32 %v267, 2
    %v272 = vsel %vm270, %v271, %v267
    %vm273 = vcmp.eq.s32.totalorder %v259, %v272
    %vm274 = vcmp.eq.s32.totalorder %v260, %v272
    %v275 = vld [vmem:[%s5] sm:$0xff]
    %v276 = vld [vmem:[%s5 + $0x8] sm:$0xff]
    %v277 = vld [vmem:[%s5 + $0x10] sm:$0xff]
    %v278 = vld [vmem:[%s5 + $0x18] sm:$0xff]
    %281 = vrot.lane.b32.xlu0 %v224, 96
    %v282 = vpop.permute.xlu0 %281
    %283 = vrot.lane.b32.xlu0 %v229, 96
    %v284 = vpop.permute.xlu0 %283
    %vm285 = vcmask 64512
    %v286 = vsel %vm285, %v224, 0
    %v288 = vsel %vm285, %v229, 0
    %v290 = vsel %vm285, %v282, 0
    %v292 = vsel %vm285, %v284, 0
    %294 = vmatprep.subr.mxu0 0.0
    %295 = vmatpush1.xpose.msra.mxu0 %v290
    %296 = vmatprep.subr.mxu0 0.0
    %297 = vmatpush1.xpose.msra.mxu0 %v292
    %298 = vmatprep.subr.mxu0 0.0
    %299 = vmatpush1.xpose.msra.mxu0 0.0
    %300 = vmatprep.subr.mxu0 0.0
    %301 = vmatpush1.xpose.msra.mxu0 0.0
    %302 = vmatprep.subr.mxu0 0.0
    %303 = vmatpush1.xpose.msra.mxu0 0.0
    %304 = vmatprep.subr.mxu0 0.0
    %305 = vmatpush1.xpose.msra.mxu0 0.0
    %306 = vmatprep.subr.mxu0 0.0
    %307 = vmatpush1.xpose.msra.mxu0 0.0
    %308 = vmatprep.subr.mxu0 0.0
    %309 = vmatpush1.xpose.msra.mxu0 0.0
    %310 = vmatprep.subr.mxu0 0.0
    %311 = vmatpush1.xpose.msra.mxu0 0.0
    %312 = vmatprep.subr.mxu0 0.0
    %313 = vmatpush1.xpose.msra.mxu0 0.0
    %314 = vmatprep.subr.mxu0 0.0
    %315 = vmatpush1.xpose.msra.mxu0 0.0
    %316 = vmatprep.subr.mxu0 0.0
    %317 = vmatpush1.xpose.msra.mxu0 0.0
    %318 = vmatprep.subr.mxu0 0.0
    %319 = vmatpush1.xpose.msra.mxu0 0.0
    %320 = vmatprep.subr.mxu0 0.0
    %321 = vmatpush1.xpose.msra.mxu0 0.0
    %322 = vmatprep.subr.mxu0 0.0
    %323 = vmatpush1.xpose.msra.mxu0 0.0
    %324 = vmatprep.subr.mxu0 0.0
    %325 = vmatpush1.xpose.msra.mxu0 0.0
    %326 = vmatprep.subr.mxu0 0.0
    %327 = vmatpush1.xpose.msra.mxu0 0.0
    %328 = vmatprep.subr.mxu0 0.0
    %329 = vmatpush1.xpose.msra.mxu0 0.0
    %330 = vmatprep.subr.mxu0 0.0
    %331 = vmatpush1.xpose.msra.mxu0 0.0
    %332 = vmatprep.subr.mxu0 0.0
    %333 = vmatpush1.xpose.msra.mxu0 0.0
    %334 = vmatprep.subr.mxu0 0.0
    %335 = vmatpush1.xpose.msra.mxu0 0.0
    %336 = vmatprep.subr.mxu0 0.0
    %337 = vmatpush1.xpose.msra.mxu0 0.0
    %338 = vmatprep.subr.mxu0 0.0
    %339 = vmatpush1.xpose.msra.mxu0 0.0
    %340 = vmatprep.subr.mxu0 0.0
    %341 = vmatpush1.xpose.msra.mxu0 0.0
    %342 = vmatprep.subr.mxu0 0.0
    %343 = vmatpush1.xpose.msra.mxu0 0.0
    %344 = vmatprep.subr.mxu0 0.0
    %345 = vmatpush1.xpose.msra.mxu0 0.0
    %346 = vmatprep.subr.mxu0 0.0
    %347 = vmatpush1.xpose.msra.mxu0 0.0
    %348 = vmatprep.subr.mxu0 0.0
    %349 = vmatpush1.xpose.msra.mxu0 0.0
    %350 = vmatprep.subr.mxu0 0.0
    %351 = vmatpush1.xpose.msra.mxu0 0.0
    %352 = vmatprep.subr.mxu0 0.0
    %353 = vmatpush1.xpose.msra.mxu0 0.0
    %354 = vmatprep.subr.mxu0 0.0
    %355 = vmatpush1.xpose.msra.mxu0 0.0
    %356 = vmatprep.subr.mxu0 0.0
    %357 = vmatpush1.xpose.msra.mxu0 0.0
    %358 = vmatprep.mubr.f32.mxu0 0.0
    %359 = vmatmul.mubr.f32.gmra.mrb[0].mxu0 %v286
    %v360 = vpop.f32.mrb[0].mxu0
    %v361 = vadd.f32 0.0, %v360
    %v362 = vpop.f32.mrb[0].mxu0
    %363 = vmatprep.mubr.f32.mxu0 0.0
    %364 = vmatmul.mubr.f32.gmra.mrb[0].mxu0 %v288
    %v365 = vpop.f32.mrb[0].mxu0
    %v366 = vadd.f32 0.0, %v365
    %v367 = vpop.f32.mrb[0].mxu0
    %368 = vdwg.mxu0
    %v369 = vsel %vm273, %v361, -1e+30
    %v370 = vsel %vm274, %v366, -1e+30
    %v371 = vsel %vm57, %v369, -inf
    %372 = vmax.xlane.f32.xlu0 %v371
    %v373 = vpop.xlane.xlu0 %372
    %v374 = vsel %vm57, %v370, -inf
    %375 = vmax.xlane.f32.xlu0 %v374
    %v376 = vpop.xlane.xlu0 %375
    %v377 = vsub.f32 %v369, %v373
    %v378 = vsub.f32 %v370, %v376
    %v379 = vmul.f32 %v377, 1.442695
    %v380 = vpow.pop %v379
    %v381 = vmul.f32 %v378, 1.442695
    %v382 = vpow.pop %v381
    %v383 = vsel %vm57, %v380, 0.0
    %384 = vadd.xlane.f32.xlu0 %v383
    %v385 = vpop.xlane.xlu0 %384
    %v386 = vsel %vm57, %v382, 0.0
    %387 = vadd.xlane.f32.xlu0 %v386
    %v388 = vpop.xlane.xlu0 %387
    %v389 = vrcp.pop %v385
    %v390 = vrcp.pop %v388
    %v391 = vmul.f32 %v380, %v389
    %v392 = vmul.f32 %v382, %v390
    %393 = vrot.lane.b32.xlu0 %v224, 64
    %v394 = vpop.permute.xlu0 %393
    %395 = vrot.lane.b32.xlu0 %v229, 64
    %v396 = vpop.permute.xlu0 %395
    %v400 = vsel %vm57, %v391, 0
    %v403 = vsel %vm57, %v392, 0
    %405 = vmatprep.subr.mxu0 0.0
    %406 = vmatpush1.msra.mxu0 %v394
    %407 = vmatprep.subr.mxu0 0.0
    %408 = vmatpush1.msra.mxu0 %v396
    %409 = vmatprep.subr.mxu0 0.0
    %410 = vmatpush1.msra.mxu0 0.0
    %411 = vmatprep.subr.mxu0 0.0
    %412 = vmatpush1.msra.mxu0 0.0
    %413 = vmatprep.subr.mxu0 0.0
    %414 = vmatpush1.msra.mxu0 0.0
    %415 = vmatprep.subr.mxu0 0.0
    %416 = vmatpush1.msra.mxu0 0.0
    %417 = vmatprep.subr.mxu0 0.0
    %418 = vmatpush1.msra.mxu0 0.0
    %419 = vmatprep.subr.mxu0 0.0
    %420 = vmatpush1.msra.mxu0 0.0
    %421 = vmatprep.subr.mxu0 0.0
    %422 = vmatpush1.msra.mxu0 0.0
    %423 = vmatprep.subr.mxu0 0.0
    %424 = vmatpush1.msra.mxu0 0.0
    %425 = vmatprep.subr.mxu0 0.0
    %426 = vmatpush1.msra.mxu0 0.0
    %427 = vmatprep.subr.mxu0 0.0
    %428 = vmatpush1.msra.mxu0 0.0
    %429 = vmatprep.subr.mxu0 0.0
    %430 = vmatpush1.msra.mxu0 0.0
    %431 = vmatprep.subr.mxu0 0.0
    %432 = vmatpush1.msra.mxu0 0.0
    %433 = vmatprep.subr.mxu0 0.0
    %434 = vmatpush1.msra.mxu0 0.0
    %435 = vmatprep.subr.mxu0 0.0
    %436 = vmatpush1.msra.mxu0 0.0
    %437 = vmatprep.subr.mxu0 0.0
    %438 = vmatpush1.msra.mxu0 0.0
    %439 = vmatprep.subr.mxu0 0.0
    %440 = vmatpush1.msra.mxu0 0.0
    %441 = vmatprep.subr.mxu0 0.0
    %442 = vmatpush1.msra.mxu0 0.0
    %443 = vmatprep.subr.mxu0 0.0
    %444 = vmatpush1.msra.mxu0 0.0
    %445 = vmatprep.subr.mxu0 0.0
    %446 = vmatpush1.msra.mxu0 0.0
    %447 = vmatprep.subr.mxu0 0.0
    %448 = vmatpush1.msra.mxu0 0.0
    %449 = vmatprep.subr.mxu0 0.0
    %450 = vmatpush1.msra.mxu0 0.0
    %451 = vmatprep.subr.mxu0 0.0
    %452 = vmatpush1.msra.mxu0 0.0
    %453 = vmatprep.subr.mxu0 0.0
    %454 = vmatpush1.msra.mxu0 0.0
    %455 = vmatprep.subr.mxu0 0.0
    %456 = vmatpush1.msra.mxu0 0.0
    %457 = vmatprep.subr.mxu0 0.0
    %458 = vmatpush1.msra.mxu0 0.0
    %459 = vmatprep.subr.mxu0 0.0
    %460 = vmatpush1.msra.mxu0 0.0
    %461 = vmatprep.subr.mxu0 0.0
    %462 = vmatpush1.msra.mxu0 0.0
    %463 = vmatprep.subr.mxu0 0.0
    %464 = vmatpush1.msra.mxu0 0.0
    %465 = vmatprep.subr.mxu0 0.0
    %466 = vmatpush1.msra.mxu0 0.0
    %467 = vmatprep.subr.mxu0 0.0
    %468 = vmatpush1.msra.mxu0 0.0
    %469 = vmatprep.mubr.f32.mxu0 0.0
    %470 = vmatmul.mubr.f32.gmra.mrb[0].mxu0 %v400
    %v471 = vpop.f32.mrb[0].mxu0
    %v472 = vadd.f32 0.0, %v471
    %v473 = vpop.f32.mrb[0].mxu0
    %474 = vmatprep.mubr.f32.mxu0 0.0
    %475 = vmatmul.mubr.f32.gmra.mrb[0].mxu0 %v403
    %v476 = vpop.f32.mrb[0].mxu0
    %v477 = vadd.f32 0.0, %v476
    %v478 = vpop.f32.mrb[0].mxu0
    %479 = vdwg.mxu0
    %480 = vrot.lane.b32.xlu0 %v224, 120
    %v481 = vpop.permute.xlu0 %480
    %482 = vrot.lane.b32.xlu0 %v229, 120
    %v483 = vpop.permute.xlu0 %482
    %484 = vrot.lane.b32.xlu0 %v224, 88
    %v485 = vpop.permute.xlu0 %484
    %486 = vrot.lane.b32.xlu0 %v229, 88
    %v487 = vpop.permute.xlu0 %486
    %v488 = vsel %vm285, %v481, 0
    %v490 = vsel %vm285, %v483, 0
    %v492 = vsel %vm285, %v485, 0
    %v494 = vsel %vm285, %v487, 0
    %496 = vmatprep.subr.mxu0 0.0
    %497 = vmatpush1.xpose.msra.mxu0 %v492
    %498 = vmatprep.subr.mxu0 0.0
    %499 = vmatpush1.xpose.msra.mxu0 %v494
    %500 = vmatprep.subr.mxu0 0.0
    %501 = vmatpush1.xpose.msra.mxu0 0.0
    %502 = vmatprep.subr.mxu0 0.0
    %503 = vmatpush1.xpose.msra.mxu0 0.0
    %504 = vmatprep.subr.mxu0 0.0
    %505 = vmatpush1.xpose.msra.mxu0 0.0
    %506 = vmatprep.subr.mxu0 0.0
    %507 = vmatpush1.xpose.msra.mxu0 0.0
    %508 = vmatprep.subr.mxu0 0.0
    %509 = vmatpush1.xpose.msra.mxu0 0.0
    %510 = vmatprep.subr.mxu0 0.0
    %511 = vmatpush1.xpose.msra.mxu0 0.0
    %512 = vmatprep.subr.mxu0 0.0
    %513 = vmatpush1.xpose.msra.mxu0 0.0
    %514 = vmatprep.subr.mxu0 0.0
    %515 = vmatpush1.xpose.msra.mxu0 0.0
    %516 = vmatprep.subr.mxu0 0.0
    %517 = vmatpush1.xpose.msra.mxu0 0.0
    %518 = vmatprep.subr.mxu0 0.0
    %519 = vmatpush1.xpose.msra.mxu0 0.0
    %520 = vmatprep.subr.mxu0 0.0
    %521 = vmatpush1.xpose.msra.mxu0 0.0
    %522 = vmatprep.subr.mxu0 0.0
    %523 = vmatpush1.xpose.msra.mxu0 0.0
    %524 = vmatprep.subr.mxu0 0.0
    %525 = vmatpush1.xpose.msra.mxu0 0.0
    %526 = vmatprep.subr.mxu0 0.0
    %527 = vmatpush1.xpose.msra.mxu0 0.0
    %528 = vmatprep.subr.mxu0 0.0
    %529 = vmatpush1.xpose.msra.mxu0 0.0
    %530 = vmatprep.subr.mxu0 0.0
    %531 = vmatpush1.xpose.msra.mxu0 0.0
    %532 = vmatprep.subr.mxu0 0.0
    %533 = vmatpush1.xpose.msra.mxu0 0.0
    %534 = vmatprep.subr.mxu0 0.0
    %535 = vmatpush1.xpose.msra.mxu0 0.0
    %536 = vmatprep.subr.mxu0 0.0
    %537 = vmatpush1.xpose.msra.mxu0 0.0
    %538 = vmatprep.subr.mxu0 0.0
    %539 = vmatpush1.xpose.msra.mxu0 0.0
    %540 = vmatprep.subr.mxu0 0.0
    %541 = vmatpush1.xpose.msra.mxu0 0.0
    %542 = vmatprep.subr.mxu0 0.0
    %543 = vmatpush1.xpose.msra.mxu0 0.0
    %544 = vmatprep.subr.mxu0 0.0
    %545 = vmatpush1.xpose.msra.mxu0 0.0
    %546 = vmatprep.subr.mxu0 0.0
    %547 = vmatpush1.xpose.msra.mxu0 0.0
    %548 = vmatprep.subr.mxu0 0.0
    %549 = vmatpush1.xpose.msra.mxu0 0.0
    %550 = vmatprep.subr.mxu0 0.0
    %551 = vmatpush1.xpose.msra.mxu0 0.0
    %552 = vmatprep.subr.mxu0 0.0
    %553 = vmatpush1.xpose.msra.mxu0 0.0
    %554 = vmatprep.subr.mxu0 0.0
    %555 = vmatpush1.xpose.msra.mxu0 0.0
    %556 = vmatprep.subr.mxu0 0.0
    %557 = vmatpush1.xpose.msra.mxu0 0.0
    %558 = vmatprep.subr.mxu0 0.0
    %559 = vmatpush1.xpose.msra.mxu0 0.0
    %560 = vmatprep.mubr.f32.mxu0 0.0
    %561 = vmatmul.mubr.f32.gmra.mrb[0].mxu0 %v488
    %v562 = vpop.f32.mrb[0].mxu0
    %v563 = vadd.f32 0.0, %v562
    %v564 = vpop.f32.mrb[0].mxu0
    %565 = vmatprep.mubr.f32.mxu0 0.0
    %566 = vmatmul.mubr.f32.gmra.mrb[0].mxu0 %v490
    %v567 = vpop.f32.mrb[0].mxu0
    %v568 = vadd.f32 0.0, %v567
    %v569 = vpop.f32.mrb[0].mxu0
    %570 = vdwg.mxu0
    %v571 = vsel %vm273, %v563, -1e+30
    %v572 = vsel %vm274, %v568, -1e+30
    %v573 = vsel %vm57, %v571, -inf
    %574 = vmax.xlane.f32.xlu0 %v573
    %v575 = vpop.xlane.xlu0 %574
    %v576 = vsel %vm57, %v572, -inf
    %577 = vmax.xlane.f32.xlu0 %v576
    %v578 = vpop.xlane.xlu0 %577
    %v579 = vsub.f32 %v571, %v575
    %v580 = vsub.f32 %v572, %v578
    %v581 = vmul.f32 %v579, 1.442695
    %v582 = vpow.pop %v581
    %v583 = vmul.f32 %v580, 1.442695
    %v584 = vpow.pop %v583
    %v585 = vsel %vm57, %v582, 0.0
    %586 = vadd.xlane.f32.xlu0 %v585
    %v587 = vpop.xlane.xlu0 %586
    %v588 = vsel %vm57, %v584, 0.0
    %589 = vadd.xlane.f32.xlu0 %v588
    %v590 = vpop.xlane.xlu0 %589
    %v591 = vrcp.pop %v587
    %v592 = vrcp.pop %v590
    %v593 = vmul.f32 %v582, %v591
    %v594 = vmul.f32 %v584, %v592
    %595 = vrot.lane.b32.xlu0 %v224, 56
    %v596 = vpop.permute.xlu0 %595
    %597 = vrot.lane.b32.xlu0 %v229, 56
    %v598 = vpop.permute.xlu0 %597
    %v602 = vsel %vm57, %v593, 0
    %v605 = vsel %vm57, %v594, 0
    %607 = vmatprep.subr.mxu0 0.0
    %608 = vmatpush1.msra.mxu0 %v596
    %609 = vmatprep.subr.mxu0 0.0
    %610 = vmatpush1.msra.mxu0 %v598
    %611 = vmatprep.subr.mxu0 0.0
    %612 = vmatpush1.msra.mxu0 0.0
    %613 = vmatprep.subr.mxu0 0.0
    %614 = vmatpush1.msra.mxu0 0.0
    %615 = vmatprep.subr.mxu0 0.0
    %616 = vmatpush1.msra.mxu0 0.0
    %617 = vmatprep.subr.mxu0 0.0
    %618 = vmatpush1.msra.mxu0 0.0
    %619 = vmatprep.subr.mxu0 0.0
    %620 = vmatpush1.msra.mxu0 0.0
    %621 = vmatprep.subr.mxu0 0.0
    %622 = vmatpush1.msra.mxu0 0.0
    %623 = vmatprep.subr.mxu0 0.0
    %624 = vmatpush1.msra.mxu0 0.0
    %625 = vmatprep.subr.mxu0 0.0
    %626 = vmatpush1.msra.mxu0 0.0
    %627 = vmatprep.subr.mxu0 0.0
    %628 = vmatpush1.msra.mxu0 0.0
    %629 = vmatprep.subr.mxu0 0.0
    %630 = vmatpush1.msra.mxu0 0.0
    %631 = vmatprep.subr.mxu0 0.0
    %632 = vmatpush1.msra.mxu0 0.0
    %633 = vmatprep.subr.mxu0 0.0
    %634 = vmatpush1.msra.mxu0 0.0
    %635 = vmatprep.subr.mxu0 0.0
    %636 = vmatpush1.msra.mxu0 0.0
    %637 = vmatprep.subr.mxu0 0.0
    %638 = vmatpush1.msra.mxu0 0.0
    %639 = vmatprep.subr.mxu0 0.0
    %640 = vmatpush1.msra.mxu0 0.0
    %641 = vmatprep.subr.mxu0 0.0
    %642 = vmatpush1.msra.mxu0 0.0
    %643 = vmatprep.subr.mxu0 0.0
    %644 = vmatpush1.msra.mxu0 0.0
    %645 = vmatprep.subr.mxu0 0.0
    %646 = vmatpush1.msra.mxu0 0.0
    %647 = vmatprep.subr.mxu0 0.0
    %648 = vmatpush1.msra.mxu0 0.0
    %649 = vmatprep.subr.mxu0 0.0
    %650 = vmatpush1.msra.mxu0 0.0
    %651 = vmatprep.subr.mxu0 0.0
    %652 = vmatpush1.msra.mxu0 0.0
    %653 = vmatprep.subr.mxu0 0.0
    %654 = vmatpush1.msra.mxu0 0.0
    %655 = vmatprep.subr.mxu0 0.0
    %656 = vmatpush1.msra.mxu0 0.0
    %657 = vmatprep.subr.mxu0 0.0
    %658 = vmatpush1.msra.mxu0 0.0
    %659 = vmatprep.subr.mxu0 0.0
    %660 = vmatpush1.msra.mxu0 0.0
    %661 = vmatprep.subr.mxu0 0.0
    %662 = vmatpush1.msra.mxu0 0.0
    %663 = vmatprep.subr.mxu0 0.0
    %664 = vmatpush1.msra.mxu0 0.0
    %665 = vmatprep.subr.mxu0 0.0
    %666 = vmatpush1.msra.mxu0 0.0
    %667 = vmatprep.subr.mxu0 0.0
    %668 = vmatpush1.msra.mxu0 0.0
    %669 = vmatprep.subr.mxu0 0.0
    %670 = vmatpush1.msra.mxu0 0.0
    %671 = vmatprep.mubr.f32.mxu0 0.0
    %672 = vmatmul.mubr.f32.gmra.mrb[0].mxu0 %v602
    %v673 = vpop.f32.mrb[0].mxu0
    %v674 = vadd.f32 0.0, %v673
    %v675 = vpop.f32.mrb[0].mxu0
    %676 = vmatprep.mubr.f32.mxu0 0.0
    %677 = vmatmul.mubr.f32.gmra.mrb[0].mxu0 %v605
    %v678 = vpop.f32.mrb[0].mxu0
    %v679 = vadd.f32 0.0, %v678
    %v680 = vpop.f32.mrb[0].mxu0
    %681 = vdwg.mxu0
    %v683 = vsel %vm285, %v674, 0
    %v686 = vsel %vm285, %v679, 0
    %688 = vmatprep.subr.mxu0 0.0
    %689 = vmatpush1.msra.mxu0 %v276
    %690 = vmatprep.subr.mxu0 0.0
    %691 = vmatpush1.msra.mxu0 0.0
    %692 = vmatprep.subr.mxu0 0.0
    %693 = vmatpush1.msra.mxu0 0.0
    %694 = vmatprep.subr.mxu0 0.0
    %695 = vmatpush1.msra.mxu0 0.0
    %696 = vmatprep.subr.mxu0 0.0
    %697 = vmatpush1.msra.mxu0 0.0
    %698 = vmatprep.subr.mxu0 0.0
    %699 = vmatpush1.msra.mxu0 0.0
    %700 = vmatprep.subr.mxu0 0.0
    %701 = vmatpush1.msra.mxu0 0.0
    %702 = vmatprep.subr.mxu0 0.0
    %703 = vmatpush1.msra.mxu0 0.0
    %704 = vmatprep.subr.mxu0 0.0
    %705 = vmatpush1.msra.mxu0 0.0
    %706 = vmatprep.subr.mxu0 0.0
    %707 = vmatpush1.msra.mxu0 0.0
    %708 = vmatprep.subr.mxu0 0.0
    %709 = vmatpush1.msra.mxu0 0.0
    %710 = vmatprep.subr.mxu0 0.0
    %711 = vmatpush1.msra.mxu0 0.0
    %712 = vmatprep.subr.mxu0 0.0
    %713 = vmatpush1.msra.mxu0 0.0
    %714 = vmatprep.subr.mxu0 0.0
    %715 = vmatpush1.msra.mxu0 0.0
    %716 = vmatprep.subr.mxu0 0.0
    %717 = vmatpush1.msra.mxu0 0.0
    %718 = vmatprep.subr.mxu0 0.0
    %719 = vmatpush1.msra.mxu0 0.0
    %720 = vmatprep.subr.mxu0 0.0
    %721 = vmatpush1.msra.mxu0 0.0
    %722 = vmatprep.subr.mxu0 0.0
    %723 = vmatpush1.msra.mxu0 0.0
    %724 = vmatprep.subr.mxu0 0.0
    %725 = vmatpush1.msra.mxu0 0.0
    %726 = vmatprep.subr.mxu0 0.0
    %727 = vmatpush1.msra.mxu0 0.0
    %728 = vmatprep.subr.mxu0 0.0
    %729 = vmatpush1.msra.mxu0 0.0
    %730 = vmatprep.subr.mxu0 0.0
    %731 = vmatpush1.msra.mxu0 0.0
    %732 = vmatprep.subr.mxu0 0.0
    %733 = vmatpush1.msra.mxu0 0.0
    %734 = vmatprep.subr.mxu0 0.0
    %735 = vmatpush1.msra.mxu0 0.0
    %736 = vmatprep.subr.mxu0 0.0
    %737 = vmatpush1.msra.mxu0 0.0
    %738 = vmatprep.subr.mxu0 0.0
    %739 = vmatpush1.msra.mxu0 0.0
    %740 = vmatprep.subr.mxu0 0.0
    %741 = vmatpush1.msra.mxu0 0.0
    %742 = vmatprep.subr.mxu0 0.0
    %743 = vmatpush1.msra.mxu0 0.0
    %744 = vmatprep.subr.mxu0 0.0
    %745 = vmatpush1.msra.mxu0 0.0
    %746 = vmatprep.subr.mxu0 0.0
    %747 = vmatpush1.msra.mxu0 0.0
    %748 = vmatprep.subr.mxu0 0.0
    %749 = vmatpush1.msra.mxu0 0.0
    %750 = vmatprep.subr.mxu0 0.0
    %751 = vmatpush1.msra.mxu0 0.0
    %752 = vmatprep.mubr.f32.mxu0 0.0
    %753 = vmatmul.mubr.f32.gmra.mrb[0].mxu0 %v683
    %v754 = vpop.f32.mrb[0].mxu0
    %v755 = vadd.f32 0.0, %v754
    %v756 = vpop.f32.mrb[0].mxu0
    %757 = vmatprep.mubr.f32.mxu0 0.0
    %758 = vmatmul.mubr.f32.gmra.mrb[0].mxu0 %v686
    %v759 = vpop.f32.mrb[0].mxu0
    %v760 = vadd.f32 0.0, %v759
    %v761 = vpop.f32.mrb[0].mxu0
    %762 = vdwg.mxu0
    %v764 = vsel %vm285, %v472, 0
    %v767 = vsel %vm285, %v477, 0
    %769 = vmatprep.subr.mxu0 0.0
    %770 = vmatpush1.msra.mxu0 %v275
    %771 = vmatprep.subr.mxu0 0.0
    %772 = vmatpush1.msra.mxu0 0.0
    %773 = vmatprep.subr.mxu0 0.0
    %774 = vmatpush1.msra.mxu0 0.0
    %775 = vmatprep.subr.mxu0 0.0
    %776 = vmatpush1.msra.mxu0 0.0
    %777 = vmatprep.subr.mxu0 0.0
    %778 = vmatpush1.msra.mxu0 0.0
    %779 = vmatprep.subr.mxu0 0.0
    %780 = vmatpush1.msra.mxu0 0.0
    %781 = vmatprep.subr.mxu0 0.0
    %782 = vmatpush1.msra.mxu0 0.0
    %783 = vmatprep.subr.mxu0 0.0
    %784 = vmatpush1.msra.mxu0 0.0
    %785 = vmatprep.subr.mxu0 0.0
    %786 = vmatpush1.msra.mxu0 0.0
    %787 = vmatprep.subr.mxu0 0.0
    %788 = vmatpush1.msra.mxu0 0.0
    %789 = vmatprep.subr.mxu0 0.0
    %790 = vmatpush1.msra.mxu0 0.0
    %791 = vmatprep.subr.mxu0 0.0
    %792 = vmatpush1.msra.mxu0 0.0
    %793 = vmatprep.subr.mxu0 0.0
    %794 = vmatpush1.msra.mxu0 0.0
    %795 = vmatprep.subr.mxu0 0.0
    %796 = vmatpush1.msra.mxu0 0.0
    %797 = vmatprep.subr.mxu0 0.0
    %798 = vmatpush1.msra.mxu0 0.0
    %799 = vmatprep.subr.mxu0 0.0
    %800 = vmatpush1.msra.mxu0 0.0
    %801 = vmatprep.subr.mxu0 0.0
    %802 = vmatpush1.msra.mxu0 0.0
    %803 = vmatprep.subr.mxu0 0.0
    %804 = vmatpush1.msra.mxu0 0.0
    %805 = vmatprep.subr.mxu0 0.0
    %806 = vmatpush1.msra.mxu0 0.0
    %807 = vmatprep.subr.mxu0 0.0
    %808 = vmatpush1.msra.mxu0 0.0
    %809 = vmatprep.subr.mxu0 0.0
    %810 = vmatpush1.msra.mxu0 0.0
    %811 = vmatprep.subr.mxu0 0.0
    %812 = vmatpush1.msra.mxu0 0.0
    %813 = vmatprep.subr.mxu0 0.0
    %814 = vmatpush1.msra.mxu0 0.0
    %815 = vmatprep.subr.mxu0 0.0
    %816 = vmatpush1.msra.mxu0 0.0
    %817 = vmatprep.subr.mxu0 0.0
    %818 = vmatpush1.msra.mxu0 0.0
    %819 = vmatprep.subr.mxu0 0.0
    %820 = vmatpush1.msra.mxu0 0.0
    %821 = vmatprep.subr.mxu0 0.0
    %822 = vmatpush1.msra.mxu0 0.0
    %823 = vmatprep.subr.mxu0 0.0
    %824 = vmatpush1.msra.mxu0 0.0
    %825 = vmatprep.subr.mxu0 0.0
    %826 = vmatpush1.msra.mxu0 0.0
    %827 = vmatprep.subr.mxu0 0.0
    %828 = vmatpush1.msra.mxu0 0.0
    %829 = vmatprep.subr.mxu0 0.0
    %830 = vmatpush1.msra.mxu0 0.0
    %831 = vmatprep.subr.mxu0 0.0
    %832 = vmatpush1.msra.mxu0 0.0
    %833 = vmatprep.mubr.f32.mxu0 0.0
    %834 = vmatmul.mubr.f32.gmra.mrb[0].mxu0 %v764
    %v835 = vpop.f32.mrb[0].mxu0
    %v836 = vadd.f32 %v755, %v835
    %v837 = vpop.f32.mrb[0].mxu0
    %838 = vmatprep.mubr.f32.mxu0 0.0
    %839 = vmatmul.mubr.f32.gmra.mrb[0].mxu0 %v767
    %v840 = vpop.f32.mrb[0].mxu0
    %v841 = vadd.f32 %v760, %v840
    %v842 = vpop.f32.mrb[0].mxu0
    %843 = vdwg.mxu0
    %844 = vrot.lane.b32.xlu0 %v224, 112
    %v845 = vpop.permute.xlu0 %844
    %846 = vrot.lane.b32.xlu0 %v229, 112
    %v847 = vpop.permute.xlu0 %846
    %848 = vrot.lane.b32.xlu0 %v224, 80
    %v849 = vpop.permute.xlu0 %848
    %850 = vrot.lane.b32.xlu0 %v229, 80
    %v851 = vpop.permute.xlu0 %850
    %v852 = vsel %vm285, %v845, 0
    %v854 = vsel %vm285, %v847, 0
    %v856 = vsel %vm285, %v849, 0
    %v858 = vsel %vm285, %v851, 0
    %860 = vmatprep.subr.mxu0 0.0
    %861 = vmatpush1.xpose.msra.mxu0 %v856
    %862 = vmatprep.subr.mxu0 0.0
    %863 = vmatpush1.xpose.msra.mxu0 %v858
    %864 = vmatprep.subr.mxu0 0.0
    %865 = vmatpush1.xpose.msra.mxu0 0.0
    %866 = vmatprep.subr.mxu0 0.0
    %867 = vmatpush1.xpose.msra.mxu0 0.0
    %868 = vmatprep.subr.mxu0 0.0
    %869 = vmatpush1.xpose.msra.mxu0 0.0
    %870 = vmatprep.subr.mxu0 0.0
    %871 = vmatpush1.xpose.msra.mxu0 0.0
    %872 = vmatprep.subr.mxu0 0.0
    %873 = vmatpush1.xpose.msra.mxu0 0.0
    %874 = vmatprep.subr.mxu0 0.0
    %875 = vmatpush1.xpose.msra.mxu0 0.0
    %876 = vmatprep.subr.mxu0 0.0
    %877 = vmatpush1.xpose.msra.mxu0 0.0
    %878 = vmatprep.subr.mxu0 0.0
    %879 = vmatpush1.xpose.msra.mxu0 0.0
    %880 = vmatprep.subr.mxu0 0.0
    %881 = vmatpush1.xpose.msra.mxu0 0.0
    %882 = vmatprep.subr.mxu0 0.0
    %883 = vmatpush1.xpose.msra.mxu0 0.0
    %884 = vmatprep.subr.mxu0 0.0
    %885 = vmatpush1.xpose.msra.mxu0 0.0
    %886 = vmatprep.subr.mxu0 0.0
    %887 = vmatpush1.xpose.msra.mxu0 0.0
    %888 = vmatprep.subr.mxu0 0.0
    %889 = vmatpush1.xpose.msra.mxu0 0.0
    %890 = vmatprep.subr.mxu0 0.0
    %891 = vmatpush1.xpose.msra.mxu0 0.0
    %892 = vmatprep.subr.mxu0 0.0
    %893 = vmatpush1.xpose.msra.mxu0 0.0
    %894 = vmatprep.subr.mxu0 0.0
    %895 = vmatpush1.xpose.msra.mxu0 0.0
    %896 = vmatprep.subr.mxu0 0.0
    %897 = vmatpush1.xpose.msra.mxu0 0.0
    %898 = vmatprep.subr.mxu0 0.0
    %899 = vmatpush1.xpose.msra.mxu0 0.0
    %900 = vmatprep.subr.mxu0 0.0
    %901 = vmatpush1.xpose.msra.mxu0 0.0
    %902 = vmatprep.subr.mxu0 0.0
    %903 = vmatpush1.xpose.msra.mxu0 0.0
    %904 = vmatprep.subr.mxu0 0.0
    %905 = vmatpush1.xpose.msra.mxu0 0.0
    %906 = vmatprep.subr.mxu0 0.0
    %907 = vmatpush1.xpose.msra.mxu0 0.0
    %908 = vmatprep.subr.mxu0 0.0
    %909 = vmatpush1.xpose.msra.mxu0 0.0
    %910 = vmatprep.subr.mxu0 0.0
    %911 = vmatpush1.xpose.msra.mxu0 0.0
    %912 = vmatprep.subr.mxu0 0.0
    %913 = vmatpush1.xpose.msra.mxu0 0.0
    %914 = vmatprep.subr.mxu0 0.0
    %915 = vmatpush1.xpose.msra.mxu0 0.0
    %916 = vmatprep.subr.mxu0 0.0
    %917 = vmatpush1.xpose.msra.mxu0 0.0
    %918 = vmatprep.subr.mxu0 0.0
    %919 = vmatpush1.xpose.msra.mxu0 0.0
    %920 = vmatprep.subr.mxu0 0.0
    %921 = vmatpush1.xpose.msra.mxu0 0.0
    %922 = vmatprep.subr.mxu0 0.0
    %923 = vmatpush1.xpose.msra.mxu0 0.0
    %924 = vmatprep.mubr.f32.mxu0 0.0
    %925 = vmatmul.mubr.f32.gmra.mrb[0].mxu0 %v852
    %v926 = vpop.f32.mrb[0].mxu0
    %v927 = vadd.f32 0.0, %v926
    %v928 = vpop.f32.mrb[0].mxu0
    %929 = vmatprep.mubr.f32.mxu0 0.0
    %930 = vmatmul.mubr.f32.gmra.mrb[0].mxu0 %v854
    %v931 = vpop.f32.mrb[0].mxu0
    %v932 = vadd.f32 0.0, %v931
    %v933 = vpop.f32.mrb[0].mxu0
    %934 = vdwg.mxu0
    %v935 = vsel %vm273, %v927, -1e+30
    %v936 = vsel %vm274, %v932, -1e+30
    %v937 = vsel %vm57, %v935, -inf
    %938 = vmax.xlane.f32.xlu0 %v937
    %v939 = vpop.xlane.xlu0 %938
    %v940 = vsel %vm57, %v936, -inf
    %941 = vmax.xlane.f32.xlu0 %v940
    %v942 = vpop.xlane.xlu0 %941
    %v943 = vsub.f32 %v935, %v939
    %v944 = vsub.f32 %v936, %v942
    %v945 = vmul.f32 %v943, 1.442695
    %v946 = vpow.pop %v945
    %v947 = vmul.f32 %v944, 1.442695
    %v948 = vpow.pop %v947
    %v949 = vsel %vm57, %v946, 0.0
    %950 = vadd.xlane.f32.xlu0 %v949
    %v951 = vpop.xlane.xlu0 %950
    %v952 = vsel %vm57, %v948, 0.0
    %953 = vadd.xlane.f32.xlu0 %v952
    %v954 = vpop.xlane.xlu0 %953
    %v955 = vrcp.pop %v951
    %v956 = vrcp.pop %v954
    %v957 = vmul.f32 %v946, %v955
    %v958 = vmul.f32 %v948, %v956
    %959 = vrot.lane.b32.xlu0 %v224, 48
    %v960 = vpop.permute.xlu0 %959
    %961 = vrot.lane.b32.xlu0 %v229, 48
    %v962 = vpop.permute.xlu0 %961
    %v966 = vsel %vm57, %v957, 0
    %v969 = vsel %vm57, %v958, 0
    %971 = vmatprep.subr.mxu0 0.0
    %972 = vmatpush1.msra.mxu0 %v960
    %973 = vmatprep.subr.mxu0 0.0
    %974 = vmatpush1.msra.mxu0 %v962
    %975 = vmatprep.subr.mxu0 0.0
    %976 = vmatpush1.msra.mxu0 0.0
    %977 = vmatprep.subr.mxu0 0.0
    %978 = vmatpush1.msra.mxu0 0.0
    %979 = vmatprep.subr.mxu0 0.0
    %980 = vmatpush1.msra.mxu0 0.0
    %981 = vmatprep.subr.mxu0 0.0
    %982 = vmatpush1.msra.mxu0 0.0
    %983 = vmatprep.subr.mxu0 0.0
    %984 = vmatpush1.msra.mxu0 0.0
    %985 = vmatprep.subr.mxu0 0.0
    %986 = vmatpush1.msra.mxu0 0.0
    %987 = vmatprep.subr.mxu0 0.0
    %988 = vmatpush1.msra.mxu0 0.0
    %989 = vmatprep.subr.mxu0 0.0
    %990 = vmatpush1.msra.mxu0 0.0
    %991 = vmatprep.subr.mxu0 0.0
    %992 = vmatpush1.msra.mxu0 0.0
    %993 = vmatprep.subr.mxu0 0.0
    %994 = vmatpush1.msra.mxu0 0.0
    %995 = vmatprep.subr.mxu0 0.0
    %996 = vmatpush1.msra.mxu0 0.0
    %997 = vmatprep.subr.mxu0 0.0
    %998 = vmatpush1.msra.mxu0 0.0
    %999 = vmatprep.subr.mxu0 0.0
    %1000 = vmatpush1.msra.mxu0 0.0
    %1001 = vmatprep.subr.mxu0 0.0
    %1002 = vmatpush1.msra.mxu0 0.0
    %1003 = vmatprep.subr.mxu0 0.0
    %1004 = vmatpush1.msra.mxu0 0.0
    %1005 = vmatprep.subr.mxu0 0.0
    %1006 = vmatpush1.msra.mxu0 0.0
    %1007 = vmatprep.subr.mxu0 0.0
    %1008 = vmatpush1.msra.mxu0 0.0
    %1009 = vmatprep.subr.mxu0 0.0
    %1010 = vmatpush1.msra.mxu0 0.0
    %1011 = vmatprep.subr.mxu0 0.0
    %1012 = vmatpush1.msra.mxu0 0.0
    %1013 = vmatprep.subr.mxu0 0.0
    %1014 = vmatpush1.msra.mxu0 0.0
    %1015 = vmatprep.subr.mxu0 0.0
    %1016 = vmatpush1.msra.mxu0 0.0
    %1017 = vmatprep.subr.mxu0 0.0
    %1018 = vmatpush1.msra.mxu0 0.0
    %1019 = vmatprep.subr.mxu0 0.0
    %1020 = vmatpush1.msra.mxu0 0.0
    %1021 = vmatprep.subr.mxu0 0.0
    %1022 = vmatpush1.msra.mxu0 0.0
    %1023 = vmatprep.subr.mxu0 0.0
    %1024 = vmatpush1.msra.mxu0 0.0
    %1025 = vmatprep.subr.mxu0 0.0
    %1026 = vmatpush1.msra.mxu0 0.0
    %1027 = vmatprep.subr.mxu0 0.0
    %1028 = vmatpush1.msra.mxu0 0.0
    %1029 = vmatprep.subr.mxu0 0.0
    %1030 = vmatpush1.msra.mxu0 0.0
    %1031 = vmatprep.subr.mxu0 0.0
    %1032 = vmatpush1.msra.mxu0 0.0
    %1033 = vmatprep.subr.mxu0 0.0
    %1034 = vmatpush1.msra.mxu0 0.0
    %1035 = vmatprep.mubr.f32.mxu0 0.0
    %1036 = vmatmul.mubr.f32.gmra.mrb[0].mxu0 %v966
    %v1037 = vpop.f32.mrb[0].mxu0
    %v1038 = vadd.f32 0.0, %v1037
    %v1039 = vpop.f32.mrb[0].mxu0
    %1040 = vmatprep.mubr.f32.mxu0 0.0
    %1041 = vmatmul.mubr.f32.gmra.mrb[0].mxu0 %v969
    %v1042 = vpop.f32.mrb[0].mxu0
    %v1043 = vadd.f32 0.0, %v1042
    %v1044 = vpop.f32.mrb[0].mxu0
    %1045 = vdwg.mxu0
    %v1047 = vsel %vm285, %v1038, 0
    %v1050 = vsel %vm285, %v1043, 0
    %1052 = vmatprep.subr.mxu0 0.0
    %1053 = vmatpush1.msra.mxu0 %v277
    %1054 = vmatprep.subr.mxu0 0.0
    %1055 = vmatpush1.msra.mxu0 0.0
    %1056 = vmatprep.subr.mxu0 0.0
    %1057 = vmatpush1.msra.mxu0 0.0
    %1058 = vmatprep.subr.mxu0 0.0
    %1059 = vmatpush1.msra.mxu0 0.0
    %1060 = vmatprep.subr.mxu0 0.0
    %1061 = vmatpush1.msra.mxu0 0.0
    %1062 = vmatprep.subr.mxu0 0.0
    %1063 = vmatpush1.msra.mxu0 0.0
    %1064 = vmatprep.subr.mxu0 0.0
    %1065 = vmatpush1.msra.mxu0 0.0
    %1066 = vmatprep.subr.mxu0 0.0
    %1067 = vmatpush1.msra.mxu0 0.0
    %1068 = vmatprep.subr.mxu0 0.0
    %1069 = vmatpush1.msra.mxu0 0.0
    %1070 = vmatprep.subr.mxu0 0.0
    %1071 = vmatpush1.msra.mxu0 0.0
    %1072 = vmatprep.subr.mxu0 0.0
    %1073 = vmatpush1.msra.mxu0 0.0
    %1074 = vmatprep.subr.mxu0 0.0
    %1075 = vmatpush1.msra.mxu0 0.0
    %1076 = vmatprep.subr.mxu0 0.0
    %1077 = vmatpush1.msra.mxu0 0.0
    %1078 = vmatprep.subr.mxu0 0.0
    %1079 = vmatpush1.msra.mxu0 0.0
    %1080 = vmatprep.subr.mxu0 0.0
    %1081 = vmatpush1.msra.mxu0 0.0
    %1082 = vmatprep.subr.mxu0 0.0
    %1083 = vmatpush1.msra.mxu0 0.0
    %1084 = vmatprep.subr.mxu0 0.0
    %1085 = vmatpush1.msra.mxu0 0.0
    %1086 = vmatprep.subr.mxu0 0.0
    %1087 = vmatpush1.msra.mxu0 0.0
    %1088 = vmatprep.subr.mxu0 0.0
    %1089 = vmatpush1.msra.mxu0 0.0
    %1090 = vmatprep.subr.mxu0 0.0
    %1091 = vmatpush1.msra.mxu0 0.0
    %1092 = vmatprep.subr.mxu0 0.0
    %1093 = vmatpush1.msra.mxu0 0.0
    %1094 = vmatprep.subr.mxu0 0.0
    %1095 = vmatpush1.msra.mxu0 0.0
    %1096 = vmatprep.subr.mxu0 0.0
    %1097 = vmatpush1.msra.mxu0 0.0
    %1098 = vmatprep.subr.mxu0 0.0
    %1099 = vmatpush1.msra.mxu0 0.0
    %1100 = vmatprep.subr.mxu0 0.0
    %1101 = vmatpush1.msra.mxu0 0.0
    %1102 = vmatprep.subr.mxu0 0.0
    %1103 = vmatpush1.msra.mxu0 0.0
    %1104 = vmatprep.subr.mxu0 0.0
    %1105 = vmatpush1.msra.mxu0 0.0
    %1106 = vmatprep.subr.mxu0 0.0
    %1107 = vmatpush1.msra.mxu0 0.0
    %1108 = vmatprep.subr.mxu0 0.0
    %1109 = vmatpush1.msra.mxu0 0.0
    %1110 = vmatprep.subr.mxu0 0.0
    %1111 = vmatpush1.msra.mxu0 0.0
    %1112 = vmatprep.subr.mxu0 0.0
    %1113 = vmatpush1.msra.mxu0 0.0
    %1114 = vmatprep.subr.mxu0 0.0
    %1115 = vmatpush1.msra.mxu0 0.0
    %1116 = vmatprep.mubr.f32.mxu0 0.0
    %1117 = vmatmul.mubr.f32.gmra.mrb[0].mxu0 %v1047
    %v1118 = vpop.f32.mrb[0].mxu0
    %v1119 = vadd.f32 0.0, %v1118
    %v1120 = vpop.f32.mrb[0].mxu0
    %1121 = vmatprep.mubr.f32.mxu0 0.0
    %1122 = vmatmul.mubr.f32.gmra.mrb[0].mxu0 %v1050
    %v1123 = vpop.f32.mrb[0].mxu0
    %v1124 = vadd.f32 0.0, %v1123
    %v1125 = vpop.f32.mrb[0].mxu0
    %1126 = vdwg.mxu0
    %v1127 = vadd.f32 %v836, %v1119
    %v1128 = vadd.f32 %v841, %v1124
    %1129 = vrot.lane.b32.xlu0 %v224, 104
    %v1130 = vpop.permute.xlu0 %1129
    %1131 = vrot.lane.b32.xlu0 %v229, 104
    %v1132 = vpop.permute.xlu0 %1131
    %1133 = vrot.lane.b32.xlu0 %v224, 72
    %v1134 = vpop.permute.xlu0 %1133
    %1135 = vrot.lane.b32.xlu0 %v229, 72
    %v1136 = vpop.permute.xlu0 %1135
    %v1137 = vsel %vm285, %v1130, 0
    %v1139 = vsel %vm285, %v1132, 0
    %v1141 = vsel %vm285, %v1134, 0
    %v1143 = vsel %vm285, %v1136, 0
    %1145 = vmatprep.subr.mxu0 0.0
    %1146 = vmatpush1.xpose.msra.mxu0 %v1141
    %1147 = vmatprep.subr.mxu0 0.0
    %1148 = vmatpush1.xpose.msra.mxu0 %v1143
    %1149 = vmatprep.subr.mxu0 0.0
    %1150 = vmatpush1.xpose.msra.mxu0 0.0
    %1151 = vmatprep.subr.mxu0 0.0
    %1152 = vmatpush1.xpose.msra.mxu0 0.0
    %1153 = vmatprep.subr.mxu0 0.0
    %1154 = vmatpush1.xpose.msra.mxu0 0.0
    %1155 = vmatprep.subr.mxu0 0.0
    %1156 = vmatpush1.xpose.msra.mxu0 0.0
    %1157 = vmatprep.subr.mxu0 0.0
    %1158 = vmatpush1.xpose.msra.mxu0 0.0
    %1159 = vmatprep.subr.mxu0 0.0
    %1160 = vmatpush1.xpose.msra.mxu0 0.0
    %1161 = vmatprep.subr.mxu0 0.0
    %1162 = vmatpush1.xpose.msra.mxu0 0.0
    %1163 = vmatprep.subr.mxu0 0.0
    %1164 = vmatpush1.xpose.msra.mxu0 0.0
    %1165 = vmatprep.subr.mxu0 0.0
    %1166 = vmatpush1.xpose.msra.mxu0 0.0
    %1167 = vmatprep.subr.mxu0 0.0
    %1168 = vmatpush1.xpose.msra.mxu0 0.0
    %1169 = vmatprep.subr.mxu0 0.0
    %1170 = vmatpush1.xpose.msra.mxu0 0.0
    %1171 = vmatprep.subr.mxu0 0.0
    %1172 = vmatpush1.xpose.msra.mxu0 0.0
    %1173 = vmatprep.subr.mxu0 0.0
    %1174 = vmatpush1.xpose.msra.mxu0 0.0
    %1175 = vmatprep.subr.mxu0 0.0
    %1176 = vmatpush1.xpose.msra.mxu0 0.0
    %1177 = vmatprep.subr.mxu0 0.0
    %1178 = vmatpush1.xpose.msra.mxu0 0.0
    %1179 = vmatprep.subr.mxu0 0.0
    %1180 = vmatpush1.xpose.msra.mxu0 0.0
    %1181 = vmatprep.subr.mxu0 0.0
    %1182 = vmatpush1.xpose.msra.mxu0 0.0
    %1183 = vmatprep.subr.mxu0 0.0
    %1184 = vmatpush1.xpose.msra.mxu0 0.0
    %1185 = vmatprep.subr.mxu0 0.0
    %1186 = vmatpush1.xpose.msra.mxu0 0.0
    %1187 = vmatprep.subr.mxu0 0.0
    %1188 = vmatpush1.xpose.msra.mxu0 0.0
    %1189 = vmatprep.subr.mxu0 0.0
    %1190 = vmatpush1.xpose.msra.mxu0 0.0
    %1191 = vmatprep.subr.mxu0 0.0
    %1192 = vmatpush1.xpose.msra.mxu0 0.0
    %1193 = vmatprep.subr.mxu0 0.0
    %1194 = vmatpush1.xpose.msra.mxu0 0.0
    %1195 = vmatprep.subr.mxu0 0.0
    %1196 = vmatpush1.xpose.msra.mxu0 0.0
    %1197 = vmatprep.subr.mxu0 0.0
    %1198 = vmatpush1.xpose.msra.mxu0 0.0
    %1199 = vmatprep.subr.mxu0 0.0
    %1200 = vmatpush1.xpose.msra.mxu0 0.0
    %1201 = vmatprep.subr.mxu0 0.0
    %1202 = vmatpush1.xpose.msra.mxu0 0.0
    %1203 = vmatprep.subr.mxu0 0.0
    %1204 = vmatpush1.xpose.msra.mxu0 0.0
    %1205 = vmatprep.subr.mxu0 0.0
    %1206 = vmatpush1.xpose.msra.mxu0 0.0
    %1207 = vmatprep.subr.mxu0 0.0
    %1208 = vmatpush1.xpose.msra.mxu0 0.0
    %1209 = vmatprep.mubr.f32.mxu0 0.0
    %1210 = vmatmul.mubr.f32.gmra.mrb[0].mxu0 %v1137
    %v1211 = vpop.f32.mrb[0].mxu0
    %v1212 = vadd.f32 0.0, %v1211
    %v1213 = vpop.f32.mrb[0].mxu0
    %1214 = vmatprep.mubr.f32.mxu0 0.0
    %1215 = vmatmul.mubr.f32.gmra.mrb[0].mxu0 %v1139
    %v1216 = vpop.f32.mrb[0].mxu0
    %v1217 = vadd.f32 0.0, %v1216
    %v1218 = vpop.f32.mrb[0].mxu0
    %1219 = vdwg.mxu0
    %v1220 = vsel %vm273, %v1212, -1e+30
    %v1221 = vsel %vm274, %v1217, -1e+30
    %v1222 = vsel %vm57, %v1220, -inf
    %1223 = vmax.xlane.f32.xlu0 %v1222
    %v1224 = vpop.xlane.xlu0 %1223
    %v1225 = vsel %vm57, %v1221, -inf
    %1226 = vmax.xlane.f32.xlu0 %v1225
    %v1227 = vpop.xlane.xlu0 %1226
    %v1228 = vsub.f32 %v1220, %v1224
    %v1229 = vsub.f32 %v1221, %v1227
    %v1230 = vmul.f32 %v1228, 1.442695
    %v1231 = vpow.pop %v1230
    %v1232 = vmul.f32 %v1229, 1.442695
    %v1233 = vpow.pop %v1232
    %v1234 = vsel %vm57, %v1231, 0.0
    %1235 = vadd.xlane.f32.xlu0 %v1234
    %v1236 = vpop.xlane.xlu0 %1235
    %v1237 = vsel %vm57, %v1233, 0.0
    %1238 = vadd.xlane.f32.xlu0 %v1237
    %v1239 = vpop.xlane.xlu0 %1238
    %v1240 = vrcp.pop %v1236
    %v1241 = vrcp.pop %v1239
    %v1242 = vmul.f32 %v1231, %v1240
    %v1243 = vmul.f32 %v1233, %v1241
    %1244 = vrot.lane.b32.xlu0 %v224, 40
    %v1245 = vpop.permute.xlu0 %1244
    %1246 = vrot.lane.b32.xlu0 %v229, 40
    %v1247 = vpop.permute.xlu0 %1246
    %v1251 = vsel %vm57, %v1242, 0
    %v1254 = vsel %vm57, %v1243, 0
    %1256 = vmatprep.subr.mxu0 0.0
    %1257 = vmatpush1.msra.mxu0 %v1245
    %1258 = vmatprep.subr.mxu0 0.0
    %1259 = vmatpush1.msra.mxu0 %v1247
    %1260 = vmatprep.subr.mxu0 0.0
    %1261 = vmatpush1.msra.mxu0 0.0
    %1262 = vmatprep.subr.mxu0 0.0
    %1263 = vmatpush1.msra.mxu0 0.0
    %1264 = vmatprep.subr.mxu0 0.0
    %1265 = vmatpush1.msra.mxu0 0.0
    %1266 = vmatprep.subr.mxu0 0.0
    %1267 = vmatpush1.msra.mxu0 0.0
    %1268 = vmatprep.subr.mxu0 0.0
    %1269 = vmatpush1.msra.mxu0 0.0
    %1270 = vmatprep.subr.mxu0 0.0
    %1271 = vmatpush1.msra.mxu0 0.0
    %1272 = vmatprep.subr.mxu0 0.0
    %1273 = vmatpush1.msra.mxu0 0.0
    %1274 = vmatprep.subr.mxu0 0.0
    %1275 = vmatpush1.msra.mxu0 0.0
    %1276 = vmatprep.subr.mxu0 0.0
    %1277 = vmatpush1.msra.mxu0 0.0
    %1278 = vmatprep.subr.mxu0 0.0
    %1279 = vmatpush1.msra.mxu0 0.0
    %1280 = vmatprep.subr.mxu0 0.0
    %1281 = vmatpush1.msra.mxu0 0.0
    %1282 = vmatprep.subr.mxu0 0.0
    %1283 = vmatpush1.msra.mxu0 0.0
    %1284 = vmatprep.subr.mxu0 0.0
    %1285 = vmatpush1.msra.mxu0 0.0
    %1286 = vmatprep.subr.mxu0 0.0
    %1287 = vmatpush1.msra.mxu0 0.0
    %1288 = vmatprep.subr.mxu0 0.0
    %1289 = vmatpush1.msra.mxu0 0.0
    %1290 = vmatprep.subr.mxu0 0.0
    %1291 = vmatpush1.msra.mxu0 0.0
    %1292 = vmatprep.subr.mxu0 0.0
    %1293 = vmatpush1.msra.mxu0 0.0
    %1294 = vmatprep.subr.mxu0 0.0
    %1295 = vmatpush1.msra.mxu0 0.0
    %1296 = vmatprep.subr.mxu0 0.0
    %1297 = vmatpush1.msra.mxu0 0.0
    %1298 = vmatprep.subr.mxu0 0.0
    %1299 = vmatpush1.msra.mxu0 0.0
    %1300 = vmatprep.subr.mxu0 0.0
    %1301 = vmatpush1.msra.mxu0 0.0
    %1302 = vmatprep.subr.mxu0 0.0
    %1303 = vmatpush1.msra.mxu0 0.0
    %1304 = vmatprep.subr.mxu0 0.0
    %1305 = vmatpush1.msra.mxu0 0.0
    %1306 = vmatprep.subr.mxu0 0.0
    %1307 = vmatpush1.msra.mxu0 0.0
    %1308 = vmatprep.subr.mxu0 0.0
    %1309 = vmatpush1.msra.mxu0 0.0
    %1310 = vmatprep.subr.mxu0 0.0
    %1311 = vmatpush1.msra.mxu0 0.0
    %1312 = vmatprep.subr.mxu0 0.0
    %1313 = vmatpush1.msra.mxu0 0.0
    %1314 = vmatprep.subr.mxu0 0.0
    %1315 = vmatpush1.msra.mxu0 0.0
    %1316 = vmatprep.subr.mxu0 0.0
    %1317 = vmatpush1.msra.mxu0 0.0
    %1318 = vmatprep.subr.mxu0 0.0
    %1319 = vmatpush1.msra.mxu0 0.0
    %1320 = vmatprep.mubr.f32.mxu0 0.0
    %1321 = vmatmul.mubr.f32.gmra.mrb[0].mxu0 %v1251
    %v1322 = vpop.f32.mrb[0].mxu0
    %v1323 = vadd.f32 0.0, %v1322
    %v1324 = vpop.f32.mrb[0].mxu0
    %1325 = vmatprep.mubr.f32.mxu0 0.0
    %1326 = vmatmul.mubr.f32.gmra.mrb[0].mxu0 %v1254
    %v1327 = vpop.f32.mrb[0].mxu0
    %v1328 = vadd.f32 0.0, %v1327
    %v1329 = vpop.f32.mrb[0].mxu0
    %1330 = vdwg.mxu0
    %v1332 = vsel %vm285, %v1323, 0
    %v1335 = vsel %vm285, %v1328, 0
    %1337 = vmatprep.subr.mxu0 0.0
    %1338 = vmatpush1.msra.mxu0 %v278
    %1339 = vmatprep.subr.mxu0 0.0
    %1340 = vmatpush1.msra.mxu0 0.0
    %1341 = vmatprep.subr.mxu0 0.0
    %1342 = vmatpush1.msra.mxu0 0.0
    %1343 = vmatprep.subr.mxu0 0.0
    %1344 = vmatpush1.msra.mxu0 0.0
    %1345 = vmatprep.subr.mxu0 0.0
    %1346 = vmatpush1.msra.mxu0 0.0
    %1347 = vmatprep.subr.mxu0 0.0
    %1348 = vmatpush1.msra.mxu0 0.0
    %1349 = vmatprep.subr.mxu0 0.0
    %1350 = vmatpush1.msra.mxu0 0.0
    %1351 = vmatprep.subr.mxu0 0.0
    %1352 = vmatpush1.msra.mxu0 0.0
    %1353 = vmatprep.subr.mxu0 0.0
    %1354 = vmatpush1.msra.mxu0 0.0
    %1355 = vmatprep.subr.mxu0 0.0
    %1356 = vmatpush1.msra.mxu0 0.0
    %1357 = vmatprep.subr.mxu0 0.0
    %1358 = vmatpush1.msra.mxu0 0.0
    %1359 = vmatprep.subr.mxu0 0.0
    %1360 = vmatpush1.msra.mxu0 0.0
    %1361 = vmatprep.subr.mxu0 0.0
    %1362 = vmatpush1.msra.mxu0 0.0
    %1363 = vmatprep.subr.mxu0 0.0
    %1364 = vmatpush1.msra.mxu0 0.0
    %1365 = vmatprep.subr.mxu0 0.0
    %1366 = vmatpush1.msra.mxu0 0.0
    %1367 = vmatprep.subr.mxu0 0.0
    %1368 = vmatpush1.msra.mxu0 0.0
    %1369 = vmatprep.subr.mxu0 0.0
    %1370 = vmatpush1.msra.mxu0 0.0
    %1371 = vmatprep.subr.mxu0 0.0
    %1372 = vmatpush1.msra.mxu0 0.0
    %1373 = vmatprep.subr.mxu0 0.0
    %1374 = vmatpush1.msra.mxu0 0.0
    %1375 = vmatprep.subr.mxu0 0.0
    %1376 = vmatpush1.msra.mxu0 0.0
    %1377 = vmatprep.subr.mxu0 0.0
    %1378 = vmatpush1.msra.mxu0 0.0
    %1379 = vmatprep.subr.mxu0 0.0
    %1380 = vmatpush1.msra.mxu0 0.0
    %1381 = vmatprep.subr.mxu0 0.0
    %1382 = vmatpush1.msra.mxu0 0.0
    %1383 = vmatprep.subr.mxu0 0.0
    %1384 = vmatpush1.msra.mxu0 0.0
    %1385 = vmatprep.subr.mxu0 0.0
    %1386 = vmatpush1.msra.mxu0 0.0
    %1387 = vmatprep.subr.mxu0 0.0
    %1388 = vmatpush1.msra.mxu0 0.0
    %1389 = vmatprep.subr.mxu0 0.0
    %1390 = vmatpush1.msra.mxu0 0.0
    %1391 = vmatprep.subr.mxu0 0.0
    %1392 = vmatpush1.msra.mxu0 0.0
    %1393 = vmatprep.subr.mxu0 0.0
    %1394 = vmatpush1.msra.mxu0 0.0
    %1395 = vmatprep.subr.mxu0 0.0
    %1396 = vmatpush1.msra.mxu0 0.0
    %1397 = vmatprep.subr.mxu0 0.0
    %1398 = vmatpush1.msra.mxu0 0.0
    %1399 = vmatprep.subr.mxu0 0.0
    %1400 = vmatpush1.msra.mxu0 0.0
    %1401 = vmatprep.mubr.f32.mxu0 0.0
    %1402 = vmatmul.mubr.f32.gmra.mrb[0].mxu0 %v1332
    %v1403 = vpop.f32.mrb[0].mxu0
    %v1404 = vadd.f32 0.0, %v1403
    %v1405 = vpop.f32.mrb[0].mxu0
    %1406 = vmatprep.mubr.f32.mxu0 0.0
    %1407 = vmatmul.mubr.f32.gmra.mrb[0].mxu0 %v1335
    %v1408 = vpop.f32.mrb[0].mxu0
    %v1409 = vadd.f32 0.0, %v1408
    %v1410 = vpop.f32.mrb[0].mxu0
    %1411 = vdwg.mxu0
    %v1412 = vadd.f32 %v1127, %v1404
    %v1413 = vadd.f32 %v1128, %v1409
    %v1414 = vld [vmem:[%s6] sm:$0x1]
    %v1416 = vlaneseq
    %v1417 = vshrl.u32 %v1416, 7
    %v1418 = vsub.s32 0, %v1417
    %v1419 = vrot.slane %v1414, %v1418
    %v1421 = vadd.f32 %v1412, %v1419
    %v1422 = vadd.f32 %v1413, %v1419
    %v1423 = vadd.f32 %v131, %v1421
    %v1424 = vadd.f32 %v136, %v1422
    %v1425 = vld [vmem:[%s7] sm:$0x1]
    %v1426 = vld [vmem:[%s8] sm:$0x1]
    %v1427 = vsel %vm150, %v1423, 0.0
    %1428 = vadd.xlane.f32.xlu0 %v1427
    %v1429 = vpop.xlane.xlu0 %1428
    %v1430 = vsel %vm150, %v1424, 0.0
    %1431 = vadd.xlane.f32.xlu0 %v1430
    %v1432 = vpop.xlane.xlu0 %1431
    %v1433 = vrcp.pop 32.0
    %v1434 = vmul.f32 %v1429, %v1433
    %v1435 = vmul.f32 %v1432, %v1433
    %v1436 = vsub.f32 %v1423, %v1434
    %v1437 = vsub.f32 %v1424, %v1435
    %v1438 = vmul.f32 %v1436, %v1436
    %v1439 = vmul.f32 %v1437, %v1437
    %v1440 = vsel %vm150, %v1438, 0.0
    %1441 = vadd.xlane.f32.xlu0 %v1440
    %v1442 = vpop.xlane.xlu0 %1441
    %v1443 = vsel %vm150, %v1439, 0.0
    %1444 = vadd.xlane.f32.xlu0 %v1443
    %v1445 = vpop.xlane.xlu0 %1444
    %v1446 = vmul.f32 %v1442, %v1433
    %v1447 = vmul.f32 %v1445, %v1433
    %v1448 = vadd.f32 %v1446, 1e-05
    %v1449 = vadd.f32 %v1447, 1e-05
    %v1450 = vrsqrt.pop %v1448
    %v1451 = vrsqrt.pop %v1449
    %v1452 = vmul.f32 %v1436, %v1450
    %v1453 = vmul.f32 %v1437, %v1451
    %v1455 = vlaneseq
    %v1456 = vshrl.u32 %v1455, 7
    %v1457 = vsub.s32 0, %v1456
    %v1458 = vrot.slane %v1425, %v1457
    %v1460 = vmul.f32 %v1452, %v1458
    %v1461 = vmul.f32 %v1453, %v1458
    %v1463 = vlaneseq
    %v1464 = vshrl.u32 %v1463, 7
    %v1465 = vsub.s32 0, %v1464
    %v1466 = vrot.slane %v1426, %v1465
    %v1468 = vadd.f32 %v1460, %v1466
    %v1469 = vadd.f32 %v1461, %v1466
    %v1470 = vld [vmem:[%s9] sm:$0xff]
    %v1471 = vld [vmem:[%s9 + $0x8] sm:$0xff]
    %v1472 = vld [vmem:[%s9 + $0x10] sm:$0xff]
    %v1473 = vld [vmem:[%s9 + $0x18] sm:$0xff]
    %v1474 = vld [vmem:[%s9 + $0x20] sm:$0xff]
    %v1475 = vld [vmem:[%s9 + $0x28] sm:$0xff]
    %v1476 = vld [vmem:[%s9 + $0x30] sm:$0xff]
    %v1477 = vld [vmem:[%s9 + $0x38] sm:$0xff]
    %v1478 = vld [vmem:[%s9 + $0x40] sm:$0xff]
    %v1479 = vld [vmem:[%s9 + $0x48] sm:$0xff]
    %v1480 = vld [vmem:[%s9 + $0x50] sm:$0xff]
    %v1481 = vld [vmem:[%s9 + $0x58] sm:$0xff]
    %v1482 = vld [vmem:[%s9 + $0x60] sm:$0xff]
    %v1483 = vld [vmem:[%s9 + $0x68] sm:$0xff]
    %v1484 = vld [vmem:[%s9 + $0x70] sm:$0xff]
    %v1485 = vld [vmem:[%s9 + $0x78] sm:$0xff]
    %v1486 = vld [vmem:[%s9 + $0x80] sm:$0xff]
    %v1487 = vld [vmem:[%s9 + $0x88] sm:$0xff]
    %v1488 = vld [vmem:[%s9 + $0x90] sm:$0xff]
    %v1489 = vld [vmem:[%s9 + $0x98] sm:$0xff]
    %v1490 = vld [vmem:[%s9 + $0xa0] sm:$0xff]
    %v1491 = vld [vmem:[%s9 + $0xa8] sm:$0xff]
    %v1492 = vld [vmem:[%s9 + $0xb0] sm:$0xff]
    %v1493 = vld [vmem:[%s9 + $0xb8] sm:$0xff]
    %v1494 = vld [vmem:[%s9 + $0xc0] sm:$0xff]
    %v1495 = vld [vmem:[%s9 + $0xc8] sm:$0xff]
    %v1496 = vld [vmem:[%s9 + $0xd0] sm:$0xff]
    %v1497 = vld [vmem:[%s9 + $0xd8] sm:$0xff]
    %v1498 = vld [vmem:[%s9 + $0xe0] sm:$0xff]
    %v1499 = vld [vmem:[%s9 + $0xe8] sm:$0xff]
    %v1500 = vld [vmem:[%s9 + $0xf0] sm:$0xff]
    %v1501 = vld [vmem:[%s9 + $0xf8] sm:$0xff]
    %v1502 = vld [vmem:[%s9 + $0x100] sm:$0xff]
    %v1503 = vld [vmem:[%s9 + $0x108] sm:$0xff]
    %v1504 = vld [vmem:[%s9 + $0x110] sm:$0xff]
    %v1505 = vld [vmem:[%s9 + $0x118] sm:$0xff]
    %v1506 = vld [vmem:[%s9 + $0x120] sm:$0xff]
    %v1507 = vld [vmem:[%s9 + $0x128] sm:$0xff]
    %v1508 = vld [vmem:[%s9 + $0x130] sm:$0xff]
    %v1509 = vld [vmem:[%s9 + $0x138] sm:$0xff]
    %v1510 = vld [vmem:[%s9 + $0x140] sm:$0xff]
    %v1511 = vld [vmem:[%s9 + $0x148] sm:$0xff]
    %v1512 = vld [vmem:[%s9 + $0x150] sm:$0xff]
    %v1513 = vld [vmem:[%s9 + $0x158] sm:$0xff]
    %v1514 = vld [vmem:[%s9 + $0x160] sm:$0xff]
    %v1515 = vld [vmem:[%s9 + $0x168] sm:$0xff]
    %v1516 = vld [vmem:[%s9 + $0x170] sm:$0xff]
    %v1517 = vld [vmem:[%s9 + $0x178] sm:$0xff]
    %v1518 = vld [vmem:[%s9 + $0x180] sm:$0xff]
    %v1519 = vld [vmem:[%s9 + $0x188] sm:$0xff]
    %v1520 = vld [vmem:[%s9 + $0x190] sm:$0xff]
    %v1521 = vld [vmem:[%s9 + $0x198] sm:$0xff]
    %v1522 = vld [vmem:[%s9 + $0x1a0] sm:$0xff]
    %v1523 = vld [vmem:[%s9 + $0x1a8] sm:$0xff]
    %v1524 = vld [vmem:[%s9 + $0x1b0] sm:$0xff]
    %v1525 = vld [vmem:[%s9 + $0x1b8] sm:$0xff]
    %v1526 = vld [vmem:[%s9 + $0x1c0] sm:$0xff]
    %v1527 = vld [vmem:[%s9 + $0x1c8] sm:$0xff]
    %v1528 = vld [vmem:[%s9 + $0x1d0] sm:$0xff]
    %v1529 = vld [vmem:[%s9 + $0x1d8] sm:$0xff]
    %v1530 = vld [vmem:[%s9 + $0x1e0] sm:$0xff]
    %v1531 = vld [vmem:[%s9 + $0x1e8] sm:$0xff]
    %v1532 = vld [vmem:[%s9 + $0x1f0] sm:$0xff]
    %v1533 = vld [vmem:[%s9 + $0x1f8] sm:$0xff]
    %v1534 = vld [vmem:[%s10] sm:$0xff]
    %v1535 = vld [vmem:[%s10 + $0x8] sm:$0xff]
    %v1538 = vlaneseq
    %v1539 = vshrl.u32 %v1538, 7
    %v1540 = vsub.s32 0, %v1539
    %v1541 = vrot.slane %v1534, %v1540
    %v1542 = vlaneseq
    %v1543 = vshrl.u32 %v1542, 7
    %v1544 = vsub.s32 1, %v1543
    %v1545 = vrot.slane %v1534, %v1544
    %v1546 = vlaneseq
    %v1547 = vshrl.u32 %v1546, 7
    %v1548 = vsub.s32 2, %v1547
    %v1549 = vrot.slane %v1534, %v1548
    %v1550 = vlaneseq
    %v1551 = vshrl.u32 %v1550, 7
    %v1552 = vsub.s32 3, %v1551
    %v1553 = vrot.slane %v1534, %v1552
    %v1554 = vlaneseq
    %v1555 = vshrl.u32 %v1554, 7
    %v1556 = vsub.s32 4, %v1555
    %v1557 = vrot.slane %v1534, %v1556
    %v1558 = vlaneseq
    %v1559 = vshrl.u32 %v1558, 7
    %v1560 = vsub.s32 5, %v1559
    %v1561 = vrot.slane %v1534, %v1560
    %v1562 = vlaneseq
    %v1563 = vshrl.u32 %v1562, 7
    %v1564 = vsub.s32 6, %v1563
    %v1565 = vrot.slane %v1534, %v1564
    %v1566 = vlaneseq
    %v1567 = vshrl.u32 %v1566, 7
    %v1568 = vsub.s32 7, %v1567
    %v1569 = vrot.slane %v1534, %v1568
    %v1570 = vlaneseq
    %v1571 = vshrl.u32 %v1570, 7
    %v1572 = vsub.s32 0, %v1571
    %v1573 = vrot.slane %v1535, %v1572
    %v1574 = vlaneseq
    %v1575 = vshrl.u32 %v1574, 7
    %v1576 = vsub.s32 1, %v1575
    %v1577 = vrot.slane %v1535, %v1576
    %v1578 = vlaneseq
    %v1579 = vshrl.u32 %v1578, 7
    %v1580 = vsub.s32 2, %v1579
    %v1581 = vrot.slane %v1535, %v1580
    %v1582 = vlaneseq
    %v1583 = vshrl.u32 %v1582, 7
    %v1584 = vsub.s32 3, %v1583
    %v1585 = vrot.slane %v1535, %v1584
    %v1586 = vlaneseq
    %v1587 = vshrl.u32 %v1586, 7
    %v1588 = vsub.s32 4, %v1587
    %v1589 = vrot.slane %v1535, %v1588
    %v1590 = vlaneseq
    %v1591 = vshrl.u32 %v1590, 7
    %v1592 = vsub.s32 5, %v1591
    %v1593 = vrot.slane %v1535, %v1592
    %v1594 = vlaneseq
    %v1595 = vshrl.u32 %v1594, 7
    %v1596 = vsub.s32 6, %v1595
    %v1597 = vrot.slane %v1535, %v1596
    %v1598 = vlaneseq
    %v1599 = vshrl.u32 %v1598, 7
    %v1600 = vsub.s32 7, %v1599
    %v1601 = vrot.slane %v1535, %v1600
    %v1619 = vsel %vm150, %v1468, 0
    %v1622 = vsel %vm150, %v1469, 0
    %1624 = vmatprep.subr.mxu0 %v1471
    %1625 = vmatpush1.msra.mxu0 %v1470
    %1626 = vmatprep.subr.mxu0 %v1487
    %1627 = vmatpush1.msra.mxu0 %v1486
    %1628 = vmatprep.subr.mxu0 %v1503
    %1629 = vmatpush1.msra.mxu0 %v1502
    %1630 = vmatprep.subr.mxu0 %v1519
    %1631 = vmatpush1.msra.mxu0 %v1518
    %1632 = vmatprep.subr.mxu0 0.0
    %1633 = vmatpush1.msra.mxu0 0.0
    %1634 = vmatprep.subr.mxu0 0.0
    %1635 = vmatpush1.msra.mxu0 0.0
    %1636 = vmatprep.subr.mxu0 0.0
    %1637 = vmatpush1.msra.mxu0 0.0
    %1638 = vmatprep.subr.mxu0 0.0
    %1639 = vmatpush1.msra.mxu0 0.0
    %1640 = vmatprep.subr.mxu0 0.0
    %1641 = vmatpush1.msra.mxu0 0.0
    %1642 = vmatprep.subr.mxu0 0.0
    %1643 = vmatpush1.msra.mxu0 0.0
    %1644 = vmatprep.subr.mxu0 0.0
    %1645 = vmatpush1.msra.mxu0 0.0
    %1646 = vmatprep.subr.mxu0 0.0
    %1647 = vmatpush1.msra.mxu0 0.0
    %1648 = vmatprep.subr.mxu0 0.0
    %1649 = vmatpush1.msra.mxu0 0.0
    %1650 = vmatprep.subr.mxu0 0.0
    %1651 = vmatpush1.msra.mxu0 0.0
    %1652 = vmatprep.subr.mxu0 0.0
    %1653 = vmatpush1.msra.mxu0 0.0
    %1654 = vmatprep.subr.mxu0 0.0
    %1655 = vmatpush1.msra.mxu0 0.0
    %1656 = vmatprep.subr.mxu0 0.0
    %1657 = vmatpush1.msra.mxu0 0.0
    %1658 = vmatprep.subr.mxu0 0.0
    %1659 = vmatpush1.msra.mxu0 0.0
    %1660 = vmatprep.subr.mxu0 0.0
    %1661 = vmatpush1.msra.mxu0 0.0
    %1662 = vmatprep.subr.mxu0 0.0
    %1663 = vmatpush1.msra.mxu0 0.0
    %1664 = vmatprep.subr.mxu0 0.0
    %1665 = vmatpush1.msra.mxu0 0.0
    %1666 = vmatprep.subr.mxu0 0.0
    %1667 = vmatpush1.msra.mxu0 0.0
    %1668 = vmatprep.subr.mxu0 0.0
    %1669 = vmatpush1.msra.mxu0 0.0
    %1670 = vmatprep.subr.mxu0 0.0
    %1671 = vmatpush1.msra.mxu0 0.0
    %1672 = vmatprep.subr.mxu0 0.0
    %1673 = vmatpush1.msra.mxu0 0.0
    %1674 = vmatprep.subr.mxu0 0.0
    %1675 = vmatpush1.msra.mxu0 0.0
    %1676 = vmatprep.subr.mxu0 0.0
    %1677 = vmatpush1.msra.mxu0 0.0
    %1678 = vmatprep.subr.mxu0 0.0
    %1679 = vmatpush1.msra.mxu0 0.0
    %1680 = vmatprep.subr.mxu0 0.0
    %1681 = vmatpush1.msra.mxu0 0.0
    %1682 = vmatprep.subr.mxu0 0.0
    %1683 = vmatpush1.msra.mxu0 0.0
    %1684 = vmatprep.subr.mxu0 0.0
    %1685 = vmatpush1.msra.mxu0 0.0
    %1686 = vmatprep.subr.mxu0 0.0
    %1687 = vmatpush1.msra.mxu0 0.0
    %1688 = vmatprep.mubr.f32.mxu0 0.0
    %1689 = vmatmul.mubr.f32.gmra.mrb[0].mxu0 %v1619
    %v1690 = vpop.f32.mrb[0].mxu0
    %v1691 = vadd.f32 %v1541, %v1690
    %v1692 = vpop.f32.mrb[0].mxu0
    %v1693 = vadd.f32 %v1545, %v1692
    %1694 = vmatprep.mubr.f32.mxu0 0.0
    %1695 = vmatmul.mubr.f32.gmra.mrb[0].mxu0 %v1622
    %v1696 = vpop.f32.mrb[0].mxu0
    %v1697 = vadd.f32 %v1541, %v1696
    %v1698 = vpop.f32.mrb[0].mxu0
    %v1699 = vadd.f32 %v1545, %v1698
    %1700 = vdwg.mxu0
    %1701 = vmatprep.subr.mxu0 %v1473
    %1702 = vmatpush1.msra.mxu0 %v1472
    %1703 = vmatprep.subr.mxu0 %v1489
    %1704 = vmatpush1.msra.mxu0 %v1488
    %1705 = vmatprep.subr.mxu0 %v1505
    %1706 = vmatpush1.msra.mxu0 %v1504
    %1707 = vmatprep.subr.mxu0 %v1521
    %1708 = vmatpush1.msra.mxu0 %v1520
    %1709 = vmatprep.subr.mxu0 0.0
    %1710 = vmatpush1.msra.mxu0 0.0
    %1711 = vmatprep.subr.mxu0 0.0
    %1712 = vmatpush1.msra.mxu0 0.0
    %1713 = vmatprep.subr.mxu0 0.0
    %1714 = vmatpush1.msra.mxu0 0.0
    %1715 = vmatprep.subr.mxu0 0.0
    %1716 = vmatpush1.msra.mxu0 0.0
    %1717 = vmatprep.subr.mxu0 0.0
    %1718 = vmatpush1.msra.mxu0 0.0
    %1719 = vmatprep.subr.mxu0 0.0
    %1720 = vmatpush1.msra.mxu0 0.0
    %1721 = vmatprep.subr.mxu0 0.0
    %1722 = vmatpush1.msra.mxu0 0.0
    %1723 = vmatprep.subr.mxu0 0.0
    %1724 = vmatpush1.msra.mxu0 0.0
    %1725 = vmatprep.subr.mxu0 0.0
    %1726 = vmatpush1.msra.mxu0 0.0
    %1727 = vmatprep.subr.mxu0 0.0
    %1728 = vmatpush1.msra.mxu0 0.0
    %1729 = vmatprep.subr.mxu0 0.0
    %1730 = vmatpush1.msra.mxu0 0.0
    %1731 = vmatprep.subr.mxu0 0.0
    %1732 = vmatpush1.msra.mxu0 0.0
    %1733 = vmatprep.subr.mxu0 0.0
    %1734 = vmatpush1.msra.mxu0 0.0
    %1735 = vmatprep.subr.mxu0 0.0
    %1736 = vmatpush1.msra.mxu0 0.0
    %1737 = vmatprep.subr.mxu0 0.0
    %1738 = vmatpush1.msra.mxu0 0.0
    %1739 = vmatprep.subr.mxu0 0.0
    %1740 = vmatpush1.msra.mxu0 0.0
    %1741 = vmatprep.subr.mxu0 0.0
    %1742 = vmatpush1.msra.mxu0 0.0
    %1743 = vmatprep.subr.mxu0 0.0
    %1744 = vmatpush1.msra.mxu0 0.0
    %1745 = vmatprep.subr.mxu0 0.0
    %1746 = vmatpush1.msra.mxu0 0.0
    %1747 = vmatprep.subr.mxu0 0.0
    %1748 = vmatpush1.msra.mxu0 0.0
    %1749 = vmatprep.subr.mxu0 0.0
    %1750 = vmatpush1.msra.mxu0 0.0
    %1751 = vmatprep.subr.mxu0 0.0
    %1752 = vmatpush1.msra.mxu0 0.0
    %1753 = vmatprep.subr.mxu0 0.0
    %1754 = vmatpush1.msra.mxu0 0.0
    %1755 = vmatprep.subr.mxu0 0.0
    %1756 = vmatpush1.msra.mxu0 0.0
    %1757 = vmatprep.subr.mxu0 0.0
    %1758 = vmatpush1.msra.mxu0 0.0
    %1759 = vmatprep.subr.mxu0 0.0
    %1760 = vmatpush1.msra.mxu0 0.0
    %1761 = vmatprep.subr.mxu0 0.0
    %1762 = vmatpush1.msra.mxu0 0.0
    %1763 = vmatprep.subr.mxu0 0.0
    %1764 = vmatpush1.msra.mxu0 0.0
    %1765 = vmatprep.mubr.f32.mxu0 0.0
    %1766 = vmatmul.mubr.f32.gmra.mrb[0].mxu0 %v1619
    %v1767 = vpop.f32.mrb[0].mxu0
    %v1768 = vadd.f32 %v1549, %v1767
    %v1769 = vpop.f32.mrb[0].mxu0
    %v1770 = vadd.f32 %v1553, %v1769
    %1771 = vmatprep.mubr.f32.mxu0 0.0
    %1772 = vmatmul.mubr.f32.gmra.mrb[0].mxu0 %v1622
    %v1773 = vpop.f32.mrb[0].mxu0
    %v1774 = vadd.f32 %v1549, %v1773
    %v1775 = vpop.f32.mrb[0].mxu0
    %v1776 = vadd.f32 %v1553, %v1775
    %1777 = vdwg.mxu0
    %1778 = vmatprep.subr.mxu0 %v1475
    %1779 = vmatpush1.msra.mxu0 %v1474
    %1780 = vmatprep.subr.mxu0 %v1491
    %1781 = vmatpush1.msra.mxu0 %v1490
    %1782 = vmatprep.subr.mxu0 %v1507
    %1783 = vmatpush1.msra.mxu0 %v1506
    %1784 = vmatprep.subr.mxu0 %v1523
    %1785 = vmatpush1.msra.mxu0 %v1522
    %1786 = vmatprep.subr.mxu0 0.0
    %1787 = vmatpush1.msra.mxu0 0.0
    %1788 = vmatprep.subr.mxu0 0.0
    %1789 = vmatpush1.msra.mxu0 0.0
    %1790 = vmatprep.subr.mxu0 0.0
    %1791 = vmatpush1.msra.mxu0 0.0
    %1792 = vmatprep.subr.mxu0 0.0
    %1793 = vmatpush1.msra.mxu0 0.0
    %1794 = vmatprep.subr.mxu0 0.0
    %1795 = vmatpush1.msra.mxu0 0.0
    %1796 = vmatprep.subr.mxu0 0.0
    %1797 = vmatpush1.msra.mxu0 0.0
    %1798 = vmatprep.subr.mxu0 0.0
    %1799 = vmatpush1.msra.mxu0 0.0
    %1800 = vmatprep.subr.mxu0 0.0
    %1801 = vmatpush1.msra.mxu0 0.0
    %1802 = vmatprep.subr.mxu0 0.0
    %1803 = vmatpush1.msra.mxu0 0.0
    %1804 = vmatprep.subr.mxu0 0.0
    %1805 = vmatpush1.msra.mxu0 0.0
    %1806 = vmatprep.subr.mxu0 0.0
    %1807 = vmatpush1.msra.mxu0 0.0
    %1808 = vmatprep.subr.mxu0 0.0
    %1809 = vmatpush1.msra.mxu0 0.0
    %1810 = vmatprep.subr.mxu0 0.0
    %1811 = vmatpush1.msra.mxu0 0.0
    %1812 = vmatprep.subr.mxu0 0.0
    %1813 = vmatpush1.msra.mxu0 0.0
    %1814 = vmatprep.subr.mxu0 0.0
    %1815 = vmatpush1.msra.mxu0 0.0
    %1816 = vmatprep.subr.mxu0 0.0
    %1817 = vmatpush1.msra.mxu0 0.0
    %1818 = vmatprep.subr.mxu0 0.0
    %1819 = vmatpush1.msra.mxu0 0.0
    %1820 = vmatprep.subr.mxu0 0.0
    %1821 = vmatpush1.msra.mxu0 0.0
    %1822 = vmatprep.subr.mxu0 0.0
    %1823 = vmatpush1.msra.mxu0 0.0
    %1824 = vmatprep.subr.mxu0 0.0
    %1825 = vmatpush1.msra.mxu0 0.0
    %1826 = vmatprep.subr.mxu0 0.0
    %1827 = vmatpush1.msra.mxu0 0.0
    %1828 = vmatprep.subr.mxu0 0.0
    %1829 = vmatpush1.msra.mxu0 0.0
    %1830 = vmatprep.subr.mxu0 0.0
    %1831 = vmatpush1.msra.mxu0 0.0
    %1832 = vmatprep.subr.mxu0 0.0
    %1833 = vmatpush1.msra.mxu0 0.0
    %1834 = vmatprep.subr.mxu0 0.0
    %1835 = vmatpush1.msra.mxu0 0.0
    %1836 = vmatprep.subr.mxu0 0.0
    %1837 = vmatpush1.msra.mxu0 0.0
    %1838 = vmatprep.subr.mxu0 0.0
    %1839 = vmatpush1.msra.mxu0 0.0
    %1840 = vmatprep.subr.mxu0 0.0
    %1841 = vmatpush1.msra.mxu0 0.0
    %1842 = vmatprep.mubr.f32.mxu0 0.0
    %1843 = vmatmul.mubr.f32.gmra.mrb[0].mxu0 %v1619
    %v1844 = vpop.f32.mrb[0].mxu0
    %v1845 = vadd.f32 %v1557, %v1844
    %v1846 = vpop.f32.mrb[0].mxu0
    %v1847 = vadd.f32 %v1561, %v1846
    %1848 = vmatprep.mubr.f32.mxu0 0.0
    %1849 = vmatmul.mubr.f32.gmra.mrb[0].mxu0 %v1622
    %v1850 = vpop.f32.mrb[0].mxu0
    %v1851 = vadd.f32 %v1557, %v1850
    %v1852 = vpop.f32.mrb[0].mxu0
    %v1853 = vadd.f32 %v1561, %v1852
    %1854 = vdwg.mxu0
    %1855 = vmatprep.subr.mxu0 %v1477
    %1856 = vmatpush1.msra.mxu0 %v1476
    %1857 = vmatprep.subr.mxu0 %v1493
    %1858 = vmatpush1.msra.mxu0 %v1492
    %1859 = vmatprep.subr.mxu0 %v1509
    %1860 = vmatpush1.msra.mxu0 %v1508
    %1861 = vmatprep.subr.mxu0 %v1525
    %1862 = vmatpush1.msra.mxu0 %v1524
    %1863 = vmatprep.subr.mxu0 0.0
    %1864 = vmatpush1.msra.mxu0 0.0
    %1865 = vmatprep.subr.mxu0 0.0
    %1866 = vmatpush1.msra.mxu0 0.0
    %1867 = vmatprep.subr.mxu0 0.0
    %1868 = vmatpush1.msra.mxu0 0.0
    %1869 = vmatprep.subr.mxu0 0.0
    %1870 = vmatpush1.msra.mxu0 0.0
    %1871 = vmatprep.subr.mxu0 0.0
    %1872 = vmatpush1.msra.mxu0 0.0
    %1873 = vmatprep.subr.mxu0 0.0
    %1874 = vmatpush1.msra.mxu0 0.0
    %1875 = vmatprep.subr.mxu0 0.0
    %1876 = vmatpush1.msra.mxu0 0.0
    %1877 = vmatprep.subr.mxu0 0.0
    %1878 = vmatpush1.msra.mxu0 0.0
    %1879 = vmatprep.subr.mxu0 0.0
    %1880 = vmatpush1.msra.mxu0 0.0
    %1881 = vmatprep.subr.mxu0 0.0
    %1882 = vmatpush1.msra.mxu0 0.0
    %1883 = vmatprep.subr.mxu0 0.0
    %1884 = vmatpush1.msra.mxu0 0.0
    %1885 = vmatprep.subr.mxu0 0.0
    %1886 = vmatpush1.msra.mxu0 0.0
    %1887 = vmatprep.subr.mxu0 0.0
    %1888 = vmatpush1.msra.mxu0 0.0
    %1889 = vmatprep.subr.mxu0 0.0
    %1890 = vmatpush1.msra.mxu0 0.0
    %1891 = vmatprep.subr.mxu0 0.0
    %1892 = vmatpush1.msra.mxu0 0.0
    %1893 = vmatprep.subr.mxu0 0.0
    %1894 = vmatpush1.msra.mxu0 0.0
    %1895 = vmatprep.subr.mxu0 0.0
    %1896 = vmatpush1.msra.mxu0 0.0
    %1897 = vmatprep.subr.mxu0 0.0
    %1898 = vmatpush1.msra.mxu0 0.0
    %1899 = vmatprep.subr.mxu0 0.0
    %1900 = vmatpush1.msra.mxu0 0.0
    %1901 = vmatprep.subr.mxu0 0.0
    %1902 = vmatpush1.msra.mxu0 0.0
    %1903 = vmatprep.subr.mxu0 0.0
    %1904 = vmatpush1.msra.mxu0 0.0
    %1905 = vmatprep.subr.mxu0 0.0
    %1906 = vmatpush1.msra.mxu0 0.0
    %1907 = vmatprep.subr.mxu0 0.0
    %1908 = vmatpush1.msra.mxu0 0.0
    %1909 = vmatprep.subr.mxu0 0.0
    %1910 = vmatpush1.msra.mxu0 0.0
    %1911 = vmatprep.subr.mxu0 0.0
    %1912 = vmatpush1.msra.mxu0 0.0
    %1913 = vmatprep.subr.mxu0 0.0
    %1914 = vmatpush1.msra.mxu0 0.0
    %1915 = vmatprep.subr.mxu0 0.0
    %1916 = vmatpush1.msra.mxu0 0.0
    %1917 = vmatprep.subr.mxu0 0.0
    %1918 = vmatpush1.msra.mxu0 0.0
    %1919 = vmatprep.mubr.f32.mxu0 0.0
    %1920 = vmatmul.mubr.f32.gmra.mrb[0].mxu0 %v1619
    %v1921 = vpop.f32.mrb[0].mxu0
    %v1922 = vadd.f32 %v1565, %v1921
    %v1923 = vpop.f32.mrb[0].mxu0
    %v1924 = vadd.f32 %v1569, %v1923
    %1925 = vmatprep.mubr.f32.mxu0 0.0
    %1926 = vmatmul.mubr.f32.gmra.mrb[0].mxu0 %v1622
    %v1927 = vpop.f32.mrb[0].mxu0
    %v1928 = vadd.f32 %v1565, %v1927
    %v1929 = vpop.f32.mrb[0].mxu0
    %v1930 = vadd.f32 %v1569, %v1929
    %1931 = vdwg.mxu0
    %1932 = vmatprep.subr.mxu0 %v1479
    %1933 = vmatpush1.msra.mxu0 %v1478
    %1934 = vmatprep.subr.mxu0 %v1495
    %1935 = vmatpush1.msra.mxu0 %v1494
    %1936 = vmatprep.subr.mxu0 %v1511
    %1937 = vmatpush1.msra.mxu0 %v1510
    %1938 = vmatprep.subr.mxu0 %v1527
    %1939 = vmatpush1.msra.mxu0 %v1526
    %1940 = vmatprep.subr.mxu0 0.0
    %1941 = vmatpush1.msra.mxu0 0.0
    %1942 = vmatprep.subr.mxu0 0.0
    %1943 = vmatpush1.msra.mxu0 0.0
    %1944 = vmatprep.subr.mxu0 0.0
    %1945 = vmatpush1.msra.mxu0 0.0
    %1946 = vmatprep.subr.mxu0 0.0
    %1947 = vmatpush1.msra.mxu0 0.0
    %1948 = vmatprep.subr.mxu0 0.0
    %1949 = vmatpush1.msra.mxu0 0.0
    %1950 = vmatprep.subr.mxu0 0.0
    %1951 = vmatpush1.msra.mxu0 0.0
    %1952 = vmatprep.subr.mxu0 0.0
    %1953 = vmatpush1.msra.mxu0 0.0
    %1954 = vmatprep.subr.mxu0 0.0
    %1955 = vmatpush1.msra.mxu0 0.0
    %1956 = vmatprep.subr.mxu0 0.0
    %1957 = vmatpush1.msra.mxu0 0.0
    %1958 = vmatprep.subr.mxu0 0.0
    %1959 = vmatpush1.msra.mxu0 0.0
    %1960 = vmatprep.subr.mxu0 0.0
    %1961 = vmatpush1.msra.mxu0 0.0
    %1962 = vmatprep.subr.mxu0 0.0
    %1963 = vmatpush1.msra.mxu0 0.0
    %1964 = vmatprep.subr.mxu0 0.0
    %1965 = vmatpush1.msra.mxu0 0.0
    %1966 = vmatprep.subr.mxu0 0.0
    %1967 = vmatpush1.msra.mxu0 0.0
    %1968 = vmatprep.subr.mxu0 0.0
    %1969 = vmatpush1.msra.mxu0 0.0
    %1970 = vmatprep.subr.mxu0 0.0
    %1971 = vmatpush1.msra.mxu0 0.0
    %1972 = vmatprep.subr.mxu0 0.0
    %1973 = vmatpush1.msra.mxu0 0.0
    %1974 = vmatprep.subr.mxu0 0.0
    %1975 = vmatpush1.msra.mxu0 0.0
    %1976 = vmatprep.subr.mxu0 0.0
    %1977 = vmatpush1.msra.mxu0 0.0
    %1978 = vmatprep.subr.mxu0 0.0
    %1979 = vmatpush1.msra.mxu0 0.0
    %1980 = vmatprep.subr.mxu0 0.0
    %1981 = vmatpush1.msra.mxu0 0.0
    %1982 = vmatprep.subr.mxu0 0.0
    %1983 = vmatpush1.msra.mxu0 0.0
    %1984 = vmatprep.subr.mxu0 0.0
    %1985 = vmatpush1.msra.mxu0 0.0
    %1986 = vmatprep.subr.mxu0 0.0
    %1987 = vmatpush1.msra.mxu0 0.0
    %1988 = vmatprep.subr.mxu0 0.0
    %1989 = vmatpush1.msra.mxu0 0.0
    %1990 = vmatprep.subr.mxu0 0.0
    %1991 = vmatpush1.msra.mxu0 0.0
    %1992 = vmatprep.subr.mxu0 0.0
    %1993 = vmatpush1.msra.mxu0 0.0
    %1994 = vmatprep.subr.mxu0 0.0
    %1995 = vmatpush1.msra.mxu0 0.0
    %1996 = vmatprep.mubr.f32.mxu0 0.0
    %1997 = vmatmul.mubr.f32.gmra.mrb[0].mxu0 %v1619
    %v1998 = vpop.f32.mrb[0].mxu0
    %v1999 = vadd.f32 %v1573, %v1998
    %v2000 = vpop.f32.mrb[0].mxu0
    %v2001 = vadd.f32 %v1577, %v2000
    %2002 = vmatprep.mubr.f32.mxu0 0.0
    %2003 = vmatmul.mubr.f32.gmra.mrb[0].mxu0 %v1622
    %v2004 = vpop.f32.mrb[0].mxu0
    %v2005 = vadd.f32 %v1573, %v2004
    %v2006 = vpop.f32.mrb[0].mxu0
    %v2007 = vadd.f32 %v1577, %v2006
    %2008 = vdwg.mxu0
    %2009 = vmatprep.subr.mxu0 %v1481
    %2010 = vmatpush1.msra.mxu0 %v1480
    %2011 = vmatprep.subr.mxu0 %v1497
    %2012 = vmatpush1.msra.mxu0 %v1496
    %2013 = vmatprep.subr.mxu0 %v1513
    %2014 = vmatpush1.msra.mxu0 %v1512
    %2015 = vmatprep.subr.mxu0 %v1529
    %2016 = vmatpush1.msra.mxu0 %v1528
    %2017 = vmatprep.subr.mxu0 0.0
    %2018 = vmatpush1.msra.mxu0 0.0
    %2019 = vmatprep.subr.mxu0 0.0
    %2020 = vmatpush1.msra.mxu0 0.0
    %2021 = vmatprep.subr.mxu0 0.0
    %2022 = vmatpush1.msra.mxu0 0.0
    %2023 = vmatprep.subr.mxu0 0.0
    %2024 = vmatpush1.msra.mxu0 0.0
    %2025 = vmatprep.subr.mxu0 0.0
    %2026 = vmatpush1.msra.mxu0 0.0
    %2027 = vmatprep.subr.mxu0 0.0
    %2028 = vmatpush1.msra.mxu0 0.0
    %2029 = vmatprep.subr.mxu0 0.0
    %2030 = vmatpush1.msra.mxu0 0.0
    %2031 = vmatprep.subr.mxu0 0.0
    %2032 = vmatpush1.msra.mxu0 0.0
    %2033 = vmatprep.subr.mxu0 0.0
    %2034 = vmatpush1.msra.mxu0 0.0
    %2035 = vmatprep.subr.mxu0 0.0
    %2036 = vmatpush1.msra.mxu0 0.0
    %2037 = vmatprep.subr.mxu0 0.0
    %2038 = vmatpush1.msra.mxu0 0.0
    %2039 = vmatprep.subr.mxu0 0.0
    %2040 = vmatpush1.msra.mxu0 0.0
    %2041 = vmatprep.subr.mxu0 0.0
    %2042 = vmatpush1.msra.mxu0 0.0
    %2043 = vmatprep.subr.mxu0 0.0
    %2044 = vmatpush1.msra.mxu0 0.0
    %2045 = vmatprep.subr.mxu0 0.0
    %2046 = vmatpush1.msra.mxu0 0.0
    %2047 = vmatprep.subr.mxu0 0.0
    %2048 = vmatpush1.msra.mxu0 0.0
    %2049 = vmatprep.subr.mxu0 0.0
    %2050 = vmatpush1.msra.mxu0 0.0
    %2051 = vmatprep.subr.mxu0 0.0
    %2052 = vmatpush1.msra.mxu0 0.0
    %2053 = vmatprep.subr.mxu0 0.0
    %2054 = vmatpush1.msra.mxu0 0.0
    %2055 = vmatprep.subr.mxu0 0.0
    %2056 = vmatpush1.msra.mxu0 0.0
    %2057 = vmatprep.subr.mxu0 0.0
    %2058 = vmatpush1.msra.mxu0 0.0
    %2059 = vmatprep.subr.mxu0 0.0
    %2060 = vmatpush1.msra.mxu0 0.0
    %2061 = vmatprep.subr.mxu0 0.0
    %2062 = vmatpush1.msra.mxu0 0.0
    %2063 = vmatprep.subr.mxu0 0.0
    %2064 = vmatpush1.msra.mxu0 0.0
    %2065 = vmatprep.subr.mxu0 0.0
    %2066 = vmatpush1.msra.mxu0 0.0
    %2067 = vmatprep.subr.mxu0 0.0
    %2068 = vmatpush1.msra.mxu0 0.0
    %2069 = vmatprep.subr.mxu0 0.0
    %2070 = vmatpush1.msra.mxu0 0.0
    %2071 = vmatprep.subr.mxu0 0.0
    %2072 = vmatpush1.msra.mxu0 0.0
    %2073 = vmatprep.mubr.f32.mxu0 0.0
    %2074 = vmatmul.mubr.f32.gmra.mrb[0].mxu0 %v1619
    %v2075 = vpop.f32.mrb[0].mxu0
    %v2076 = vadd.f32 %v1581, %v2075
    %v2077 = vpop.f32.mrb[0].mxu0
    %v2078 = vadd.f32 %v1585, %v2077
    %2079 = vmatprep.mubr.f32.mxu0 0.0
    %2080 = vmatmul.mubr.f32.gmra.mrb[0].mxu0 %v1622
    %v2081 = vpop.f32.mrb[0].mxu0
    %v2082 = vadd.f32 %v1581, %v2081
    %v2083 = vpop.f32.mrb[0].mxu0
    %v2084 = vadd.f32 %v1585, %v2083
    %2085 = vdwg.mxu0
    %2086 = vmatprep.subr.mxu0 %v1483
    %2087 = vmatpush1.msra.mxu0 %v1482
    %2088 = vmatprep.subr.mxu0 %v1499
    %2089 = vmatpush1.msra.mxu0 %v1498
    %2090 = vmatprep.subr.mxu0 %v1515
    %2091 = vmatpush1.msra.mxu0 %v1514
    %2092 = vmatprep.subr.mxu0 %v1531
    %2093 = vmatpush1.msra.mxu0 %v1530
    %2094 = vmatprep.subr.mxu0 0.0
    %2095 = vmatpush1.msra.mxu0 0.0
    %2096 = vmatprep.subr.mxu0 0.0
    %2097 = vmatpush1.msra.mxu0 0.0
    %2098 = vmatprep.subr.mxu0 0.0
    %2099 = vmatpush1.msra.mxu0 0.0
    %2100 = vmatprep.subr.mxu0 0.0
    %2101 = vmatpush1.msra.mxu0 0.0
    %2102 = vmatprep.subr.mxu0 0.0
    %2103 = vmatpush1.msra.mxu0 0.0
    %2104 = vmatprep.subr.mxu0 0.0
    %2105 = vmatpush1.msra.mxu0 0.0
    %2106 = vmatprep.subr.mxu0 0.0
    %2107 = vmatpush1.msra.mxu0 0.0
    %2108 = vmatprep.subr.mxu0 0.0
    %2109 = vmatpush1.msra.mxu0 0.0
    %2110 = vmatprep.subr.mxu0 0.0
    %2111 = vmatpush1.msra.mxu0 0.0
    %2112 = vmatprep.subr.mxu0 0.0
    %2113 = vmatpush1.msra.mxu0 0.0
    %2114 = vmatprep.subr.mxu0 0.0
    %2115 = vmatpush1.msra.mxu0 0.0
    %2116 = vmatprep.subr.mxu0 0.0
    %2117 = vmatpush1.msra.mxu0 0.0
    %2118 = vmatprep.subr.mxu0 0.0
    %2119 = vmatpush1.msra.mxu0 0.0
    %2120 = vmatprep.subr.mxu0 0.0
    %2121 = vmatpush1.msra.mxu0 0.0
    %2122 = vmatprep.subr.mxu0 0.0
    %2123 = vmatpush1.msra.mxu0 0.0
    %2124 = vmatprep.subr.mxu0 0.0
    %2125 = vmatpush1.msra.mxu0 0.0
    %2126 = vmatprep.subr.mxu0 0.0
    %2127 = vmatpush1.msra.mxu0 0.0
    %2128 = vmatprep.subr.mxu0 0.0
    %2129 = vmatpush1.msra.mxu0 0.0
    %2130 = vmatprep.subr.mxu0 0.0
    %2131 = vmatpush1.msra.mxu0 0.0
    %2132 = vmatprep.subr.mxu0 0.0
    %2133 = vmatpush1.msra.mxu0 0.0
    %2134 = vmatprep.subr.mxu0 0.0
    %2135 = vmatpush1.msra.mxu0 0.0
    %2136 = vmatprep.subr.mxu0 0.0
    %2137 = vmatpush1.msra.mxu0 0.0
    %2138 = vmatprep.subr.mxu0 0.0
    %2139 = vmatpush1.msra.mxu0 0.0
    %2140 = vmatprep.subr.mxu0 0.0
    %2141 = vmatpush1.msra.mxu0 0.0
    %2142 = vmatprep.subr.mxu0 0.0
    %2143 = vmatpush1.msra.mxu0 0.0
    %2144 = vmatprep.subr.mxu0 0.0
    %2145 = vmatpush1.msra.mxu0 0.0
    %2146 = vmatprep.subr.mxu0 0.0
    %2147 = vmatpush1.msra.mxu0 0.0
    %2148 = vmatprep.subr.mxu0 0.0
    %2149 = vmatpush1.msra.mxu0 0.0
    %2150 = vmatprep.mubr.f32.mxu0 0.0
    %2151 = vmatmul.mubr.f32.gmra.mrb[0].mxu0 %v1619
    %v2152 = vpop.f32.mrb[0].mxu0
    %v2153 = vadd.f32 %v1589, %v2152
    %v2154 = vpop.f32.mrb[0].mxu0
    %v2155 = vadd.f32 %v1593, %v2154
    %2156 = vmatprep.mubr.f32.mxu0 0.0
    %2157 = vmatmul.mubr.f32.gmra.mrb[0].mxu0 %v1622
    %v2158 = vpop.f32.mrb[0].mxu0
    %v2159 = vadd.f32 %v1589, %v2158
    %v2160 = vpop.f32.mrb[0].mxu0
    %v2161 = vadd.f32 %v1593, %v2160
    %2162 = vdwg.mxu0
    %2163 = vmatprep.subr.mxu0 %v1485
    %2164 = vmatpush1.msra.mxu0 %v1484
    %2165 = vmatprep.subr.mxu0 %v1501
    %2166 = vmatpush1.msra.mxu0 %v1500
    %2167 = vmatprep.subr.mxu0 %v1517
    %2168 = vmatpush1.msra.mxu0 %v1516
    %2169 = vmatprep.subr.mxu0 %v1533
    %2170 = vmatpush1.msra.mxu0 %v1532
    %2171 = vmatprep.subr.mxu0 0.0
    %2172 = vmatpush1.msra.mxu0 0.0
    %2173 = vmatprep.subr.mxu0 0.0
    %2174 = vmatpush1.msra.mxu0 0.0
    %2175 = vmatprep.subr.mxu0 0.0
    %2176 = vmatpush1.msra.mxu0 0.0
    %2177 = vmatprep.subr.mxu0 0.0
    %2178 = vmatpush1.msra.mxu0 0.0
    %2179 = vmatprep.subr.mxu0 0.0
    %2180 = vmatpush1.msra.mxu0 0.0
    %2181 = vmatprep.subr.mxu0 0.0
    %2182 = vmatpush1.msra.mxu0 0.0
    %2183 = vmatprep.subr.mxu0 0.0
    %2184 = vmatpush1.msra.mxu0 0.0
    %2185 = vmatprep.subr.mxu0 0.0
    %2186 = vmatpush1.msra.mxu0 0.0
    %2187 = vmatprep.subr.mxu0 0.0
    %2188 = vmatpush1.msra.mxu0 0.0
    %2189 = vmatprep.subr.mxu0 0.0
    %2190 = vmatpush1.msra.mxu0 0.0
    %2191 = vmatprep.subr.mxu0 0.0
    %2192 = vmatpush1.msra.mxu0 0.0
    %2193 = vmatprep.subr.mxu0 0.0
    %2194 = vmatpush1.msra.mxu0 0.0
    %2195 = vmatprep.subr.mxu0 0.0
    %2196 = vmatpush1.msra.mxu0 0.0
    %2197 = vmatprep.subr.mxu0 0.0
    %2198 = vmatpush1.msra.mxu0 0.0
    %2199 = vmatprep.subr.mxu0 0.0
    %2200 = vmatpush1.msra.mxu0 0.0
    %2201 = vmatprep.subr.mxu0 0.0
    %2202 = vmatpush1.msra.mxu0 0.0
    %2203 = vmatprep.subr.mxu0 0.0
    %2204 = vmatpush1.msra.mxu0 0.0
    %2205 = vmatprep.subr.mxu0 0.0
    %2206 = vmatpush1.msra.mxu0 0.0
    %2207 = vmatprep.subr.mxu0 0.0
    %2208 = vmatpush1.msra.mxu0 0.0
    %2209 = vmatprep.subr.mxu0 0.0
    %2210 = vmatpush1.msra.mxu0 0.0
    %2211 = vmatprep.subr.mxu0 0.0
    %2212 = vmatpush1.msra.mxu0 0.0
    %2213 = vmatprep.subr.mxu0 0.0
    %2214 = vmatpush1.msra.mxu0 0.0
    %2215 = vmatprep.subr.mxu0 0.0
    %2216 = vmatpush1.msra.mxu0 0.0
    %2217 = vmatprep.subr.mxu0 0.0
    %2218 = vmatpush1.msra.mxu0 0.0
    %2219 = vmatprep.subr.mxu0 0.0
    %2220 = vmatpush1.msra.mxu0 0.0
    %2221 = vmatprep.subr.mxu0 0.0
    %2222 = vmatpush1.msra.mxu0 0.0
    %2223 = vmatprep.subr.mxu0 0.0
    %2224 = vmatpush1.msra.mxu0 0.0
    %2225 = vmatprep.subr.mxu0 0.0
    %2226 = vmatpush1.msra.mxu0 0.0
    %2227 = vmatprep.mubr.f32.mxu0 0.0
    %2228 = vmatmul.mubr.f32.gmra.mrb[0].mxu0 %v1619
    %v2229 = vpop.f32.mrb[0].mxu0
    %v2230 = vadd.f32 %v1597, %v2229
    %v2231 = vpop.f32.mrb[0].mxu0
    %v2232 = vadd.f32 %v1601, %v2231
    %2233 = vmatprep.mubr.f32.mxu0 0.0
    %2234 = vmatmul.mubr.f32.gmra.mrb[0].mxu0 %v1622
    %v2235 = vpop.f32.mrb[0].mxu0
    %v2236 = vadd.f32 %v1597, %v2235
    %v2237 = vpop.f32.mrb[0].mxu0
    %v2238 = vadd.f32 %v1601, %v2237
    %2239 = vdwg.mxu0
    %v2240 = vmax.f32 %v1691, 0.0
    %v2241 = vmax.f32 %v1693, 0.0
    %v2242 = vmax.f32 %v1768, 0.0
    %v2243 = vmax.f32 %v1770, 0.0
    %v2244 = vmax.f32 %v1845, 0.0
    %v2245 = vmax.f32 %v1847, 0.0
    %v2246 = vmax.f32 %v1922, 0.0
    %v2247 = vmax.f32 %v1924, 0.0
    %v2248 = vmax.f32 %v1999, 0.0
    %v2249 = vmax.f32 %v2001, 0.0
    %v2250 = vmax.f32 %v2076, 0.0
    %v2251 = vmax.f32 %v2078, 0.0
    %v2252 = vmax.f32 %v2153, 0.0
    %v2253 = vmax.f32 %v2155, 0.0
    %v2254 = vmax.f32 %v2230, 0.0
    %v2255 = vmax.f32 %v2232, 0.0
    %v2256 = vmax.f32 %v1697, 0.0
    %v2257 = vmax.f32 %v1699, 0.0
    %v2258 = vmax.f32 %v1774, 0.0
    %v2259 = vmax.f32 %v1776, 0.0
    %v2260 = vmax.f32 %v1851, 0.0
    %v2261 = vmax.f32 %v1853, 0.0
    %v2262 = vmax.f32 %v1928, 0.0
    %v2263 = vmax.f32 %v1930, 0.0
    %v2264 = vmax.f32 %v2005, 0.0
    %v2265 = vmax.f32 %v2007, 0.0
    %v2266 = vmax.f32 %v2082, 0.0
    %v2267 = vmax.f32 %v2084, 0.0
    %v2268 = vmax.f32 %v2159, 0.0
    %v2269 = vmax.f32 %v2161, 0.0
    %v2270 = vmax.f32 %v2236, 0.0
    %v2271 = vmax.f32 %v2238, 0.0
    %v2272 = vld [vmem:[%s11] sm:$0xff]
    %v2273 = vld [vmem:[%s11 + $0x8] sm:$0xff]
    %v2274 = vld [vmem:[%s11 + $0x10] sm:$0xff]
    %v2275 = vld [vmem:[%s11 + $0x18] sm:$0xff]
    %v2276 = vld [vmem:[%s11 + $0x20] sm:$0xff]
    %v2277 = vld [vmem:[%s11 + $0x28] sm:$0xff]
    %v2278 = vld [vmem:[%s11 + $0x30] sm:$0xff]
    %v2279 = vld [vmem:[%s11 + $0x38] sm:$0xff]
    %v2280 = vld [vmem:[%s11 + $0x40] sm:$0xff]
    %v2281 = vld [vmem:[%s11 + $0x48] sm:$0xff]
    %v2282 = vld [vmem:[%s11 + $0x50] sm:$0xff]
    %v2283 = vld [vmem:[%s11 + $0x58] sm:$0xff]
    %v2284 = vld [vmem:[%s11 + $0x60] sm:$0xff]
    %v2285 = vld [vmem:[%s11 + $0x68] sm:$0xff]
    %v2286 = vld [vmem:[%s11 + $0x70] sm:$0xff]
    %v2287 = vld [vmem:[%s11 + $0x78] sm:$0xff]
    %v2288 = vld [vmem:[%s11 + $0x80] sm:$0xff]
    %v2289 = vld [vmem:[%s11 + $0x88] sm:$0xff]
    %v2290 = vld [vmem:[%s11 + $0x90] sm:$0xff]
    %v2291 = vld [vmem:[%s11 + $0x98] sm:$0xff]
    %v2292 = vld [vmem:[%s11 + $0xa0] sm:$0xff]
    %v2293 = vld [vmem:[%s11 + $0xa8] sm:$0xff]
    %v2294 = vld [vmem:[%s11 + $0xb0] sm:$0xff]
    %v2295 = vld [vmem:[%s11 + $0xb8] sm:$0xff]
    %v2296 = vld [vmem:[%s11 + $0xc0] sm:$0xff]
    %v2297 = vld [vmem:[%s11 + $0xc8] sm:$0xff]
    %v2298 = vld [vmem:[%s11 + $0xd0] sm:$0xff]
    %v2299 = vld [vmem:[%s11 + $0xd8] sm:$0xff]
    %v2300 = vld [vmem:[%s11 + $0xe0] sm:$0xff]
    %v2301 = vld [vmem:[%s11 + $0xe8] sm:$0xff]
    %v2302 = vld [vmem:[%s11 + $0xf0] sm:$0xff]
    %v2303 = vld [vmem:[%s11 + $0xf8] sm:$0xff]
    %v2304 = vld [vmem:[%s11 + $0x100] sm:$0xff]
    %v2305 = vld [vmem:[%s11 + $0x108] sm:$0xff]
    %v2306 = vld [vmem:[%s11 + $0x110] sm:$0xff]
    %v2307 = vld [vmem:[%s11 + $0x118] sm:$0xff]
    %v2308 = vld [vmem:[%s11 + $0x120] sm:$0xff]
    %v2309 = vld [vmem:[%s11 + $0x128] sm:$0xff]
    %v2310 = vld [vmem:[%s11 + $0x130] sm:$0xff]
    %v2311 = vld [vmem:[%s11 + $0x138] sm:$0xff]
    %v2312 = vld [vmem:[%s11 + $0x140] sm:$0xff]
    %v2313 = vld [vmem:[%s11 + $0x148] sm:$0xff]
    %v2314 = vld [vmem:[%s11 + $0x150] sm:$0xff]
    %v2315 = vld [vmem:[%s11 + $0x158] sm:$0xff]
    %v2316 = vld [vmem:[%s11 + $0x160] sm:$0xff]
    %v2317 = vld [vmem:[%s11 + $0x168] sm:$0xff]
    %v2318 = vld [vmem:[%s11 + $0x170] sm:$0xff]
    %v2319 = vld [vmem:[%s11 + $0x178] sm:$0xff]
    %v2320 = vld [vmem:[%s11 + $0x180] sm:$0xff]
    %v2321 = vld [vmem:[%s11 + $0x188] sm:$0xff]
    %v2322 = vld [vmem:[%s11 + $0x190] sm:$0xff]
    %v2323 = vld [vmem:[%s11 + $0x198] sm:$0xff]
    %v2324 = vld [vmem:[%s11 + $0x1a0] sm:$0xff]
    %v2325 = vld [vmem:[%s11 + $0x1a8] sm:$0xff]
    %v2326 = vld [vmem:[%s11 + $0x1b0] sm:$0xff]
    %v2327 = vld [vmem:[%s11 + $0x1b8] sm:$0xff]
    %v2328 = vld [vmem:[%s11 + $0x1c0] sm:$0xff]
    %v2329 = vld [vmem:[%s11 + $0x1c8] sm:$0xff]
    %v2330 = vld [vmem:[%s11 + $0x1d0] sm:$0xff]
    %v2331 = vld [vmem:[%s11 + $0x1d8] sm:$0xff]
    %v2332 = vld [vmem:[%s11 + $0x1e0] sm:$0xff]
    %v2333 = vld [vmem:[%s11 + $0x1e8] sm:$0xff]
    %v2334 = vld [vmem:[%s11 + $0x1f0] sm:$0xff]
    %v2335 = vld [vmem:[%s11 + $0x1f8] sm:$0xff]
    %v2336 = vld [vmem:[%s11 + $0x200] sm:$0xff]
    %v2337 = vld [vmem:[%s11 + $0x208] sm:$0xff]
    %v2338 = vld [vmem:[%s11 + $0x210] sm:$0xff]
    %v2339 = vld [vmem:[%s11 + $0x218] sm:$0xff]
    %v2340 = vld [vmem:[%s11 + $0x220] sm:$0xff]
    %v2341 = vld [vmem:[%s11 + $0x228] sm:$0xff]
    %v2342 = vld [vmem:[%s11 + $0x230] sm:$0xff]
    %v2343 = vld [vmem:[%s11 + $0x238] sm:$0xff]
    %v2344 = vld [vmem:[%s11 + $0x240] sm:$0xff]
    %v2345 = vld [vmem:[%s11 + $0x248] sm:$0xff]
    %v2346 = vld [vmem:[%s11 + $0x250] sm:$0xff]
    %v2347 = vld [vmem:[%s11 + $0x258] sm:$0xff]
    %v2348 = vld [vmem:[%s11 + $0x260] sm:$0xff]
    %v2349 = vld [vmem:[%s11 + $0x268] sm:$0xff]
    %v2350 = vld [vmem:[%s11 + $0x270] sm:$0xff]
    %v2351 = vld [vmem:[%s11 + $0x278] sm:$0xff]
    %v2352 = vld [vmem:[%s11 + $0x280] sm:$0xff]
    %v2353 = vld [vmem:[%s11 + $0x288] sm:$0xff]
    %v2354 = vld [vmem:[%s11 + $0x290] sm:$0xff]
    %v2355 = vld [vmem:[%s11 + $0x298] sm:$0xff]
    %v2356 = vld [vmem:[%s11 + $0x2a0] sm:$0xff]
    %v2357 = vld [vmem:[%s11 + $0x2a8] sm:$0xff]
    %v2358 = vld [vmem:[%s11 + $0x2b0] sm:$0xff]
    %v2359 = vld [vmem:[%s11 + $0x2b8] sm:$0xff]
    %v2360 = vld [vmem:[%s11 + $0x2c0] sm:$0xff]
    %v2361 = vld [vmem:[%s11 + $0x2c8] sm:$0xff]
    %v2362 = vld [vmem:[%s11 + $0x2d0] sm:$0xff]
    %v2363 = vld [vmem:[%s11 + $0x2d8] sm:$0xff]
    %v2364 = vld [vmem:[%s11 + $0x2e0] sm:$0xff]
    %v2365 = vld [vmem:[%s11 + $0x2e8] sm:$0xff]
    %v2366 = vld [vmem:[%s11 + $0x2f0] sm:$0xff]
    %v2367 = vld [vmem:[%s11 + $0x2f8] sm:$0xff]
    %v2368 = vld [vmem:[%s11 + $0x300] sm:$0xff]
    %v2369 = vld [vmem:[%s11 + $0x308] sm:$0xff]
    %v2370 = vld [vmem:[%s11 + $0x310] sm:$0xff]
    %v2371 = vld [vmem:[%s11 + $0x318] sm:$0xff]
    %v2372 = vld [vmem:[%s11 + $0x320] sm:$0xff]
    %v2373 = vld [vmem:[%s11 + $0x328] sm:$0xff]
    %v2374 = vld [vmem:[%s11 + $0x330] sm:$0xff]
    %v2375 = vld [vmem:[%s11 + $0x338] sm:$0xff]
    %v2376 = vld [vmem:[%s11 + $0x340] sm:$0xff]
    %v2377 = vld [vmem:[%s11 + $0x348] sm:$0xff]
    %v2378 = vld [vmem:[%s11 + $0x350] sm:$0xff]
    %v2379 = vld [vmem:[%s11 + $0x358] sm:$0xff]
    %v2380 = vld [vmem:[%s11 + $0x360] sm:$0xff]
    %v2381 = vld [vmem:[%s11 + $0x368] sm:$0xff]
    %v2382 = vld [vmem:[%s11 + $0x370] sm:$0xff]
    %v2383 = vld [vmem:[%s11 + $0x378] sm:$0xff]
    %v2384 = vld [vmem:[%s11 + $0x380] sm:$0xff]
    %v2385 = vld [vmem:[%s11 + $0x388] sm:$0xff]
    %v2386 = vld [vmem:[%s11 + $0x390] sm:$0xff]
    %v2387 = vld [vmem:[%s11 + $0x398] sm:$0xff]
    %v2388 = vld [vmem:[%s11 + $0x3a0] sm:$0xff]
    %v2389 = vld [vmem:[%s11 + $0x3a8] sm:$0xff]
    %v2390 = vld [vmem:[%s11 + $0x3b0] sm:$0xff]
    %v2391 = vld [vmem:[%s11 + $0x3b8] sm:$0xff]
    %v2392 = vld [vmem:[%s11 + $0x3c0] sm:$0xff]
    %v2393 = vld [vmem:[%s11 + $0x3c8] sm:$0xff]
    %v2394 = vld [vmem:[%s11 + $0x3d0] sm:$0xff]
    %v2395 = vld [vmem:[%s11 + $0x3d8] sm:$0xff]
    %v2396 = vld [vmem:[%s11 + $0x3e0] sm:$0xff]
    %v2397 = vld [vmem:[%s11 + $0x3e8] sm:$0xff]
    %v2398 = vld [vmem:[%s11 + $0x3f0] sm:$0xff]
    %v2399 = vld [vmem:[%s11 + $0x3f8] sm:$0xff]
    %v2400 = vld [vmem:[%s11 + $0x400] sm:$0xff]
    %v2401 = vld [vmem:[%s11 + $0x408] sm:$0xff]
    %v2402 = vld [vmem:[%s11 + $0x410] sm:$0xff]
    %v2403 = vld [vmem:[%s11 + $0x418] sm:$0xff]
    %v2404 = vld [vmem:[%s11 + $0x420] sm:$0xff]
    %v2405 = vld [vmem:[%s11 + $0x428] sm:$0xff]
    %v2406 = vld [vmem:[%s11 + $0x430] sm:$0xff]
    %v2407 = vld [vmem:[%s11 + $0x438] sm:$0xff]
    %v2408 = vld [vmem:[%s11 + $0x440] sm:$0xff]
    %v2409 = vld [vmem:[%s11 + $0x448] sm:$0xff]
    %v2410 = vld [vmem:[%s11 + $0x450] sm:$0xff]
    %v2411 = vld [vmem:[%s11 + $0x458] sm:$0xff]
    %v2412 = vld [vmem:[%s11 + $0x460] sm:$0xff]
    %v2413 = vld [vmem:[%s11 + $0x468] sm:$0xff]
    %v2414 = vld [vmem:[%s11 + $0x470] sm:$0xff]
    %v2415 = vld [vmem:[%s11 + $0x478] sm:$0xff]
    %v2416 = vld [vmem:[%s11 + $0x480] sm:$0xff]
    %v2417 = vld [vmem:[%s11 + $0x488] sm:$0xff]
    %v2418 = vld [vmem:[%s11 + $0x490] sm:$0xff]
    %v2419 = vld [vmem:[%s11 + $0x498] sm:$0xff]
    %v2420 = vld [vmem:[%s11 + $0x4a0] sm:$0xff]
    %v2421 = vld [vmem:[%s11 + $0x4a8] sm:$0xff]
    %v2422 = vld [vmem:[%s11 + $0x4b0] sm:$0xff]
    %v2423 = vld [vmem:[%s11 + $0x4b8] sm:$0xff]
    %v2424 = vld [vmem:[%s11 + $0x4c0] sm:$0xff]
    %v2425 = vld [vmem:[%s11 + $0x4c8] sm:$0xff]
    %v2426 = vld [vmem:[%s11 + $0x4d0] sm:$0xff]
    %v2427 = vld [vmem:[%s11 + $0x4d8] sm:$0xff]
    %v2428 = vld [vmem:[%s11 + $0x4e0] sm:$0xff]
    %v2429 = vld [vmem:[%s11 + $0x4e8] sm:$0xff]
    %v2430 = vld [vmem:[%s11 + $0x4f0] sm:$0xff]
    %v2431 = vld [vmem:[%s11 + $0x4f8] sm:$0xff]
    %v2432 = vld [vmem:[%s11 + $0x500] sm:$0xff]
    %v2433 = vld [vmem:[%s11 + $0x508] sm:$0xff]
    %v2434 = vld [vmem:[%s11 + $0x510] sm:$0xff]
    %v2435 = vld [vmem:[%s11 + $0x518] sm:$0xff]
    %v2436 = vld [vmem:[%s11 + $0x520] sm:$0xff]
    %v2437 = vld [vmem:[%s11 + $0x528] sm:$0xff]
    %v2438 = vld [vmem:[%s11 + $0x530] sm:$0xff]
    %v2439 = vld [vmem:[%s11 + $0x538] sm:$0xff]
    %v2440 = vld [vmem:[%s11 + $0x540] sm:$0xff]
    %v2441 = vld [vmem:[%s11 + $0x548] sm:$0xff]
    %v2442 = vld [vmem:[%s11 + $0x550] sm:$0xff]
    %v2443 = vld [vmem:[%s11 + $0x558] sm:$0xff]
    %v2444 = vld [vmem:[%s11 + $0x560] sm:$0xff]
    %v2445 = vld [vmem:[%s11 + $0x568] sm:$0xff]
    %v2446 = vld [vmem:[%s11 + $0x570] sm:$0xff]
    %v2447 = vld [vmem:[%s11 + $0x578] sm:$0xff]
    %v2448 = vld [vmem:[%s11 + $0x580] sm:$0xff]
    %v2449 = vld [vmem:[%s11 + $0x588] sm:$0xff]
    %v2450 = vld [vmem:[%s11 + $0x590] sm:$0xff]
    %v2451 = vld [vmem:[%s11 + $0x598] sm:$0xff]
    %v2452 = vld [vmem:[%s11 + $0x5a0] sm:$0xff]
    %v2453 = vld [vmem:[%s11 + $0x5a8] sm:$0xff]
    %v2454 = vld [vmem:[%s11 + $0x5b0] sm:$0xff]
    %v2455 = vld [vmem:[%s11 + $0x5b8] sm:$0xff]
    %v2456 = vld [vmem:[%s11 + $0x5c0] sm:$0xff]
    %v2457 = vld [vmem:[%s11 + $0x5c8] sm:$0xff]
    %v2458 = vld [vmem:[%s11 + $0x5d0] sm:$0xff]
    %v2459 = vld [vmem:[%s11 + $0x5d8] sm:$0xff]
    %v2460 = vld [vmem:[%s11 + $0x5e0] sm:$0xff]
    %v2461 = vld [vmem:[%s11 + $0x5e8] sm:$0xff]
    %v2462 = vld [vmem:[%s11 + $0x5f0] sm:$0xff]
    %v2463 = vld [vmem:[%s11 + $0x5f8] sm:$0xff]
    %v2464 = vld [vmem:[%s11 + $0x600] sm:$0xff]
    %v2465 = vld [vmem:[%s11 + $0x608] sm:$0xff]
    %v2466 = vld [vmem:[%s11 + $0x610] sm:$0xff]
    %v2467 = vld [vmem:[%s11 + $0x618] sm:$0xff]
    %v2468 = vld [vmem:[%s11 + $0x620] sm:$0xff]
    %v2469 = vld [vmem:[%s11 + $0x628] sm:$0xff]
    %v2470 = vld [vmem:[%s11 + $0x630] sm:$0xff]
    %v2471 = vld [vmem:[%s11 + $0x638] sm:$0xff]
    %v2472 = vld [vmem:[%s11 + $0x640] sm:$0xff]
    %v2473 = vld [vmem:[%s11 + $0x648] sm:$0xff]
    %v2474 = vld [vmem:[%s11 + $0x650] sm:$0xff]
    %v2475 = vld [vmem:[%s11 + $0x658] sm:$0xff]
    %v2476 = vld [vmem:[%s11 + $0x660] sm:$0xff]
    %v2477 = vld [vmem:[%s11 + $0x668] sm:$0xff]
    %v2478 = vld [vmem:[%s11 + $0x670] sm:$0xff]
    %v2479 = vld [vmem:[%s11 + $0x678] sm:$0xff]
    %v2480 = vld [vmem:[%s11 + $0x680] sm:$0xff]
    %v2481 = vld [vmem:[%s11 + $0x688] sm:$0xff]
    %v2482 = vld [vmem:[%s11 + $0x690] sm:$0xff]
    %v2483 = vld [vmem:[%s11 + $0x698] sm:$0xff]
    %v2484 = vld [vmem:[%s11 + $0x6a0] sm:$0xff]
    %v2485 = vld [vmem:[%s11 + $0x6a8] sm:$0xff]
    %v2486 = vld [vmem:[%s11 + $0x6b0] sm:$0xff]
    %v2487 = vld [vmem:[%s11 + $0x6b8] sm:$0xff]
    %v2488 = vld [vmem:[%s11 + $0x6c0] sm:$0xff]
    %v2489 = vld [vmem:[%s11 + $0x6c8] sm:$0xff]
    %v2490 = vld [vmem:[%s11 + $0x6d0] sm:$0xff]
    %v2491 = vld [vmem:[%s11 + $0x6d8] sm:$0xff]
    %v2492 = vld [vmem:[%s11 + $0x6e0] sm:$0xff]
    %v2493 = vld [vmem:[%s11 + $0x6e8] sm:$0xff]
    %v2494 = vld [vmem:[%s11 + $0x6f0] sm:$0xff]
    %v2495 = vld [vmem:[%s11 + $0x6f8] sm:$0xff]
    %v2496 = vld [vmem:[%s11 + $0x700] sm:$0xff]
    %v2497 = vld [vmem:[%s11 + $0x708] sm:$0xff]
    %v2498 = vld [vmem:[%s11 + $0x710] sm:$0xff]
    %v2499 = vld [vmem:[%s11 + $0x718] sm:$0xff]
    %v2500 = vld [vmem:[%s11 + $0x720] sm:$0xff]
    %v2501 = vld [vmem:[%s11 + $0x728] sm:$0xff]
    %v2502 = vld [vmem:[%s11 + $0x730] sm:$0xff]
    %v2503 = vld [vmem:[%s11 + $0x738] sm:$0xff]
    %v2504 = vld [vmem:[%s11 + $0x740] sm:$0xff]
    %v2505 = vld [vmem:[%s11 + $0x748] sm:$0xff]
    %v2506 = vld [vmem:[%s11 + $0x750] sm:$0xff]
    %v2507 = vld [vmem:[%s11 + $0x758] sm:$0xff]
    %v2508 = vld [vmem:[%s11 + $0x760] sm:$0xff]
    %v2509 = vld [vmem:[%s11 + $0x768] sm:$0xff]
    %v2510 = vld [vmem:[%s11 + $0x770] sm:$0xff]
    %v2511 = vld [vmem:[%s11 + $0x778] sm:$0xff]
    %v2512 = vld [vmem:[%s11 + $0x780] sm:$0xff]
    %v2513 = vld [vmem:[%s11 + $0x788] sm:$0xff]
    %v2514 = vld [vmem:[%s11 + $0x790] sm:$0xff]
    %v2515 = vld [vmem:[%s11 + $0x798] sm:$0xff]
    %v2516 = vld [vmem:[%s11 + $0x7a0] sm:$0xff]
    %v2517 = vld [vmem:[%s11 + $0x7a8] sm:$0xff]
    %v2518 = vld [vmem:[%s11 + $0x7b0] sm:$0xff]
    %v2519 = vld [vmem:[%s11 + $0x7b8] sm:$0xff]
    %v2520 = vld [vmem:[%s11 + $0x7c0] sm:$0xff]
    %v2521 = vld [vmem:[%s11 + $0x7c8] sm:$0xff]
    %v2522 = vld [vmem:[%s11 + $0x7d0] sm:$0xff]
    %v2523 = vld [vmem:[%s11 + $0x7d8] sm:$0xff]
    %v2524 = vld [vmem:[%s11 + $0x7e0] sm:$0xff]
    %v2525 = vld [vmem:[%s11 + $0x7e8] sm:$0xff]
    %v2526 = vld [vmem:[%s11 + $0x7f0] sm:$0xff]
    %v2527 = vld [vmem:[%s11 + $0x7f8] sm:$0xff]
    %v2528 = vld [vmem:[%s12] sm:$0x1]
    %v2530 = vlaneseq
    %v2531 = vshrl.u32 %v2530, 7
    %v2532 = vsub.s32 0, %v2531
    %v2533 = vrot.slane %v2528, %v2532
    %2535 = vmatprep.subr.mxu0 0.0
    %2536 = vmatpush1.msra.mxu0 %v2272
    %2537 = vmatprep.subr.mxu0 0.0
    %2538 = vmatpush1.msra.mxu0 %v2273
    %2539 = vmatprep.subr.mxu0 0.0
    %2540 = vmatpush1.msra.mxu0 %v2274
    %2541 = vmatprep.subr.mxu0 0.0
    %2542 = vmatpush1.msra.mxu0 %v2275
    %2543 = vmatprep.subr.mxu0 0.0
    %2544 = vmatpush1.msra.mxu0 %v2276
    %2545 = vmatprep.subr.mxu0 0.0
    %2546 = vmatpush1.msra.mxu0 %v2277
    %2547 = vmatprep.subr.mxu0 0.0
    %2548 = vmatpush1.msra.mxu0 %v2278
    %2549 = vmatprep.subr.mxu0 0.0
    %2550 = vmatpush1.msra.mxu0 %v2279
    %2551 = vmatprep.subr.mxu0 0.0
    %2552 = vmatpush1.msra.mxu0 %v2280
    %2553 = vmatprep.subr.mxu0 0.0
    %2554 = vmatpush1.msra.mxu0 %v2281
    %2555 = vmatprep.subr.mxu0 0.0
    %2556 = vmatpush1.msra.mxu0 %v2282
    %2557 = vmatprep.subr.mxu0 0.0
    %2558 = vmatpush1.msra.mxu0 %v2283
    %2559 = vmatprep.subr.mxu0 0.0
    %2560 = vmatpush1.msra.mxu0 %v2284
    %2561 = vmatprep.subr.mxu0 0.0
    %2562 = vmatpush1.msra.mxu0 %v2285
    %2563 = vmatprep.subr.mxu0 0.0
    %2564 = vmatpush1.msra.mxu0 %v2286
    %2565 = vmatprep.subr.mxu0 0.0
    %2566 = vmatpush1.msra.mxu0 %v2287
    %2567 = vmatprep.subr.mxu0 0.0
    %2568 = vmatpush1.msra.mxu0 %v2288
    %2569 = vmatprep.subr.mxu0 0.0
    %2570 = vmatpush1.msra.mxu0 %v2289
    %2571 = vmatprep.subr.mxu0 0.0
    %2572 = vmatpush1.msra.mxu0 %v2290
    %2573 = vmatprep.subr.mxu0 0.0
    %2574 = vmatpush1.msra.mxu0 %v2291
    %2575 = vmatprep.subr.mxu0 0.0
    %2576 = vmatpush1.msra.mxu0 %v2292
    %2577 = vmatprep.subr.mxu0 0.0
    %2578 = vmatpush1.msra.mxu0 %v2293
    %2579 = vmatprep.subr.mxu0 0.0
    %2580 = vmatpush1.msra.mxu0 %v2294
    %2581 = vmatprep.subr.mxu0 0.0
    %2582 = vmatpush1.msra.mxu0 %v2295
    %2583 = vmatprep.subr.mxu0 0.0
    %2584 = vmatpush1.msra.mxu0 %v2296
    %2585 = vmatprep.subr.mxu0 0.0
    %2586 = vmatpush1.msra.mxu0 %v2297
    %2587 = vmatprep.subr.mxu0 0.0
    %2588 = vmatpush1.msra.mxu0 %v2298
    %2589 = vmatprep.subr.mxu0 0.0
    %2590 = vmatpush1.msra.mxu0 %v2299
    %2591 = vmatprep.subr.mxu0 0.0
    %2592 = vmatpush1.msra.mxu0 %v2300
    %2593 = vmatprep.subr.mxu0 0.0
    %2594 = vmatpush1.msra.mxu0 %v2301
    %2595 = vmatprep.subr.mxu0 0.0
    %2596 = vmatpush1.msra.mxu0 %v2302
    %2597 = vmatprep.subr.mxu0 0.0
    %2598 = vmatpush1.msra.mxu0 %v2303
    %2599 = vmatprep.mubr.f32.mxu0 %v2241
    %2600 = vmatmul.mubr.f32.gmra.mrb[0].mxu0 %v2240
    %v2601 = vpop.f32.mrb[0].mxu0
    %v2602 = vadd.f32 %v2533, %v2601
    %v2603 = vpop.f32.mrb[0].mxu0
    %2604 = vmatprep.mubr.f32.mxu0 %v2257
    %2605 = vmatmul.mubr.f32.gmra.mrb[0].mxu0 %v2256
    %v2606 = vpop.f32.mrb[0].mxu0
    %v2607 = vadd.f32 %v2533, %v2606
    %v2608 = vpop.f32.mrb[0].mxu0
    %2609 = vdwg.mxu0
    %2610 = vmatprep.subr.mxu0 0.0
    %2611 = vmatpush1.msra.mxu0 %v2304
    %2612 = vmatprep.subr.mxu0 0.0
    %2613 = vmatpush1.msra.mxu0 %v2305
    %2614 = vmatprep.subr.mxu0 0.0
    %2615 = vmatpush1.msra.mxu0 %v2306
    %2616 = vmatprep.subr.mxu0 0.0
    %2617 = vmatpush1.msra.mxu0 %v2307
    %2618 = vmatprep.subr.mxu0 0.0
    %2619 = vmatpush1.msra.mxu0 %v2308
    %2620 = vmatprep.subr.mxu0 0.0
    %2621 = vmatpush1.msra.mxu0 %v2309
    %2622 = vmatprep.subr.mxu0 0.0
    %2623 = vmatpush1.msra.mxu0 %v2310
    %2624 = vmatprep.subr.mxu0 0.0
    %2625 = vmatpush1.msra.mxu0 %v2311
    %2626 = vmatprep.subr.mxu0 0.0
    %2627 = vmatpush1.msra.mxu0 %v2312
    %2628 = vmatprep.subr.mxu0 0.0
    %2629 = vmatpush1.msra.mxu0 %v2313
    %2630 = vmatprep.subr.mxu0 0.0
    %2631 = vmatpush1.msra.mxu0 %v2314
    %2632 = vmatprep.subr.mxu0 0.0
    %2633 = vmatpush1.msra.mxu0 %v2315
    %2634 = vmatprep.subr.mxu0 0.0
    %2635 = vmatpush1.msra.mxu0 %v2316
    %2636 = vmatprep.subr.mxu0 0.0
    %2637 = vmatpush1.msra.mxu0 %v2317
    %2638 = vmatprep.subr.mxu0 0.0
    %2639 = vmatpush1.msra.mxu0 %v2318
    %2640 = vmatprep.subr.mxu0 0.0
    %2641 = vmatpush1.msra.mxu0 %v2319
    %2642 = vmatprep.subr.mxu0 0.0
    %2643 = vmatpush1.msra.mxu0 %v2320
    %2644 = vmatprep.subr.mxu0 0.0
    %2645 = vmatpush1.msra.mxu0 %v2321
    %2646 = vmatprep.subr.mxu0 0.0
    %2647 = vmatpush1.msra.mxu0 %v2322
    %2648 = vmatprep.subr.mxu0 0.0
    %2649 = vmatpush1.msra.mxu0 %v2323
    %2650 = vmatprep.subr.mxu0 0.0
    %2651 = vmatpush1.msra.mxu0 %v2324
    %2652 = vmatprep.subr.mxu0 0.0
    %2653 = vmatpush1.msra.mxu0 %v2325
    %2654 = vmatprep.subr.mxu0 0.0
    %2655 = vmatpush1.msra.mxu0 %v2326
    %2656 = vmatprep.subr.mxu0 0.0
    %2657 = vmatpush1.msra.mxu0 %v2327
    %2658 = vmatprep.subr.mxu0 0.0
    %2659 = vmatpush1.msra.mxu0 %v2328
    %2660 = vmatprep.subr.mxu0 0.0
    %2661 = vmatpush1.msra.mxu0 %v2329
    %2662 = vmatprep.subr.mxu0 0.0
    %2663 = vmatpush1.msra.mxu0 %v2330
    %2664 = vmatprep.subr.mxu0 0.0
    %2665 = vmatpush1.msra.mxu0 %v2331
    %2666 = vmatprep.subr.mxu0 0.0
    %2667 = vmatpush1.msra.mxu0 %v2332
    %2668 = vmatprep.subr.mxu0 0.0
    %2669 = vmatpush1.msra.mxu0 %v2333
    %2670 = vmatprep.subr.mxu0 0.0
    %2671 = vmatpush1.msra.mxu0 %v2334
    %2672 = vmatprep.subr.mxu0 0.0
    %2673 = vmatpush1.msra.mxu0 %v2335
    %2674 = vmatprep.mubr.f32.mxu0 %v2243
    %2675 = vmatmul.mubr.f32.gmra.mrb[0].mxu0 %v2242
    %v2676 = vpop.f32.mrb[0].mxu0
    %v2677 = vadd.f32 %v2602, %v2676
    %v2678 = vpop.f32.mrb[0].mxu0
    %2679 = vmatprep.mubr.f32.mxu0 %v2259
    %2680 = vmatmul.mubr.f32.gmra.mrb[0].mxu0 %v2258
    %v2681 = vpop.f32.mrb[0].mxu0
    %v2682 = vadd.f32 %v2607, %v2681
    %v2683 = vpop.f32.mrb[0].mxu0
    %2684 = vdwg.mxu0
    %2685 = vmatprep.subr.mxu0 0.0
    %2686 = vmatpush1.msra.mxu0 %v2336
    %2687 = vmatprep.subr.mxu0 0.0
    %2688 = vmatpush1.msra.mxu0 %v2337
    %2689 = vmatprep.subr.mxu0 0.0
    %2690 = vmatpush1.msra.mxu0 %v2338
    %2691 = vmatprep.subr.mxu0 0.0
    %2692 = vmatpush1.msra.mxu0 %v2339
    %2693 = vmatprep.subr.mxu0 0.0
    %2694 = vmatpush1.msra.mxu0 %v2340
    %2695 = vmatprep.subr.mxu0 0.0
    %2696 = vmatpush1.msra.mxu0 %v2341
    %2697 = vmatprep.subr.mxu0 0.0
    %2698 = vmatpush1.msra.mxu0 %v2342
    %2699 = vmatprep.subr.mxu0 0.0
    %2700 = vmatpush1.msra.mxu0 %v2343
    %2701 = vmatprep.subr.mxu0 0.0
    %2702 = vmatpush1.msra.mxu0 %v2344
    %2703 = vmatprep.subr.mxu0 0.0
    %2704 = vmatpush1.msra.mxu0 %v2345
    %2705 = vmatprep.subr.mxu0 0.0
    %2706 = vmatpush1.msra.mxu0 %v2346
    %2707 = vmatprep.subr.mxu0 0.0
    %2708 = vmatpush1.msra.mxu0 %v2347
    %2709 = vmatprep.subr.mxu0 0.0
    %2710 = vmatpush1.msra.mxu0 %v2348
    %2711 = vmatprep.subr.mxu0 0.0
    %2712 = vmatpush1.msra.mxu0 %v2349
    %2713 = vmatprep.subr.mxu0 0.0
    %2714 = vmatpush1.msra.mxu0 %v2350
    %2715 = vmatprep.subr.mxu0 0.0
    %2716 = vmatpush1.msra.mxu0 %v2351
    %2717 = vmatprep.subr.mxu0 0.0
    %2718 = vmatpush1.msra.mxu0 %v2352
    %2719 = vmatprep.subr.mxu0 0.0
    %2720 = vmatpush1.msra.mxu0 %v2353
    %2721 = vmatprep.subr.mxu0 0.0
    %2722 = vmatpush1.msra.mxu0 %v2354
    %2723 = vmatprep.subr.mxu0 0.0
    %2724 = vmatpush1.msra.mxu0 %v2355
    %2725 = vmatprep.subr.mxu0 0.0
    %2726 = vmatpush1.msra.mxu0 %v2356
    %2727 = vmatprep.subr.mxu0 0.0
    %2728 = vmatpush1.msra.mxu0 %v2357
    %2729 = vmatprep.subr.mxu0 0.0
    %2730 = vmatpush1.msra.mxu0 %v2358
    %2731 = vmatprep.subr.mxu0 0.0
    %2732 = vmatpush1.msra.mxu0 %v2359
    %2733 = vmatprep.subr.mxu0 0.0
    %2734 = vmatpush1.msra.mxu0 %v2360
    %2735 = vmatprep.subr.mxu0 0.0
    %2736 = vmatpush1.msra.mxu0 %v2361
    %2737 = vmatprep.subr.mxu0 0.0
    %2738 = vmatpush1.msra.mxu0 %v2362
    %2739 = vmatprep.subr.mxu0 0.0
    %2740 = vmatpush1.msra.mxu0 %v2363
    %2741 = vmatprep.subr.mxu0 0.0
    %2742 = vmatpush1.msra.mxu0 %v2364
    %2743 = vmatprep.subr.mxu0 0.0
    %2744 = vmatpush1.msra.mxu0 %v2365
    %2745 = vmatprep.subr.mxu0 0.0
    %2746 = vmatpush1.msra.mxu0 %v2366
    %2747 = vmatprep.subr.mxu0 0.0
    %2748 = vmatpush1.msra.mxu0 %v2367
    %2749 = vmatprep.mubr.f32.mxu0 %v2245
    %2750 = vmatmul.mubr.f32.gmra.mrb[0].mxu0 %v2244
    %v2751 = vpop.f32.mrb[0].mxu0
    %v2752 = vadd.f32 %v2677, %v2751
    %v2753 = vpop.f32.mrb[0].mxu0
    %2754 = vmatprep.mubr.f32.mxu0 %v2261
    %2755 = vmatmul.mubr.f32.gmra.mrb[0].mxu0 %v2260
    %v2756 = vpop.f32.mrb[0].mxu0
    %v2757 = vadd.f32 %v2682, %v2756
    %v2758 = vpop.f32.mrb[0].mxu0
    %2759 = vdwg.mxu0
    %2760 = vmatprep.subr.mxu0 0.0
    %2761 = vmatpush1.msra.mxu0 %v2368
    %2762 = vmatprep.subr.mxu0 0.0
    %2763 = vmatpush1.msra.mxu0 %v2369
    %2764 = vmatprep.subr.mxu0 0.0
    %2765 = vmatpush1.msra.mxu0 %v2370
    %2766 = vmatprep.subr.mxu0 0.0
    %2767 = vmatpush1.msra.mxu0 %v2371
    %2768 = vmatprep.subr.mxu0 0.0
    %2769 = vmatpush1.msra.mxu0 %v2372
    %2770 = vmatprep.subr.mxu0 0.0
    %2771 = vmatpush1.msra.mxu0 %v2373
    %2772 = vmatprep.subr.mxu0 0.0
    %2773 = vmatpush1.msra.mxu0 %v2374
    %2774 = vmatprep.subr.mxu0 0.0
    %2775 = vmatpush1.msra.mxu0 %v2375
    %2776 = vmatprep.subr.mxu0 0.0
    %2777 = vmatpush1.msra.mxu0 %v2376
    %2778 = vmatprep.subr.mxu0 0.0
    %2779 = vmatpush1.msra.mxu0 %v2377
    %2780 = vmatprep.subr.mxu0 0.0
    %2781 = vmatpush1.msra.mxu0 %v2378
    %2782 = vmatprep.subr.mxu0 0.0
    %2783 = vmatpush1.msra.mxu0 %v2379
    %2784 = vmatprep.subr.mxu0 0.0
    %2785 = vmatpush1.msra.mxu0 %v2380
    %2786 = vmatprep.subr.mxu0 0.0
    %2787 = vmatpush1.msra.mxu0 %v2381
    %2788 = vmatprep.subr.mxu0 0.0
    %2789 = vmatpush1.msra.mxu0 %v2382
    %2790 = vmatprep.subr.mxu0 0.0
    %2791 = vmatpush1.msra.mxu0 %v2383
    %2792 = vmatprep.subr.mxu0 0.0
    %2793 = vmatpush1.msra.mxu0 %v2384
    %2794 = vmatprep.subr.mxu0 0.0
    %2795 = vmatpush1.msra.mxu0 %v2385
    %2796 = vmatprep.subr.mxu0 0.0
    %2797 = vmatpush1.msra.mxu0 %v2386
    %2798 = vmatprep.subr.mxu0 0.0
    %2799 = vmatpush1.msra.mxu0 %v2387
    %2800 = vmatprep.subr.mxu0 0.0
    %2801 = vmatpush1.msra.mxu0 %v2388
    %2802 = vmatprep.subr.mxu0 0.0
    %2803 = vmatpush1.msra.mxu0 %v2389
    %2804 = vmatprep.subr.mxu0 0.0
    %2805 = vmatpush1.msra.mxu0 %v2390
    %2806 = vmatprep.subr.mxu0 0.0
    %2807 = vmatpush1.msra.mxu0 %v2391
    %2808 = vmatprep.subr.mxu0 0.0
    %2809 = vmatpush1.msra.mxu0 %v2392
    %2810 = vmatprep.subr.mxu0 0.0
    %2811 = vmatpush1.msra.mxu0 %v2393
    %2812 = vmatprep.subr.mxu0 0.0
    %2813 = vmatpush1.msra.mxu0 %v2394
    %2814 = vmatprep.subr.mxu0 0.0
    %2815 = vmatpush1.msra.mxu0 %v2395
    %2816 = vmatprep.subr.mxu0 0.0
    %2817 = vmatpush1.msra.mxu0 %v2396
    %2818 = vmatprep.subr.mxu0 0.0
    %2819 = vmatpush1.msra.mxu0 %v2397
    %2820 = vmatprep.subr.mxu0 0.0
    %2821 = vmatpush1.msra.mxu0 %v2398
    %2822 = vmatprep.subr.mxu0 0.0
    %2823 = vmatpush1.msra.mxu0 %v2399
    %2824 = vmatprep.mubr.f32.mxu0 %v2247
    %2825 = vmatmul.mubr.f32.gmra.mrb[0].mxu0 %v2246
    %v2826 = vpop.f32.mrb[0].mxu0
    %v2827 = vadd.f32 %v2752, %v2826
    %v2828 = vpop.f32.mrb[0].mxu0
    %2829 = vmatprep.mubr.f32.mxu0 %v2263
    %2830 = vmatmul.mubr.f32.gmra.mrb[0].mxu0 %v2262
    %v2831 = vpop.f32.mrb[0].mxu0
    %v2832 = vadd.f32 %v2757, %v2831
    %v2833 = vpop.f32.mrb[0].mxu0
    %2834 = vdwg.mxu0
    %2835 = vmatprep.subr.mxu0 0.0
    %2836 = vmatpush1.msra.mxu0 %v2400
    %2837 = vmatprep.subr.mxu0 0.0
    %2838 = vmatpush1.msra.mxu0 %v2401
    %2839 = vmatprep.subr.mxu0 0.0
    %2840 = vmatpush1.msra.mxu0 %v2402
    %2841 = vmatprep.subr.mxu0 0.0
    %2842 = vmatpush1.msra.mxu0 %v2403
    %2843 = vmatprep.subr.mxu0 0.0
    %2844 = vmatpush1.msra.mxu0 %v2404
    %2845 = vmatprep.subr.mxu0 0.0
    %2846 = vmatpush1.msra.mxu0 %v2405
    %2847 = vmatprep.subr.mxu0 0.0
    %2848 = vmatpush1.msra.mxu0 %v2406
    %2849 = vmatprep.subr.mxu0 0.0
    %2850 = vmatpush1.msra.mxu0 %v2407
    %2851 = vmatprep.subr.mxu0 0.0
    %2852 = vmatpush1.msra.mxu0 %v2408
    %2853 = vmatprep.subr.mxu0 0.0
    %2854 = vmatpush1.msra.mxu0 %v2409
    %2855 = vmatprep.subr.mxu0 0.0
    %2856 = vmatpush1.msra.mxu0 %v2410
    %2857 = vmatprep.subr.mxu0 0.0
    %2858 = vmatpush1.msra.mxu0 %v2411
    %2859 = vmatprep.subr.mxu0 0.0
    %2860 = vmatpush1.msra.mxu0 %v2412
    %2861 = vmatprep.subr.mxu0 0.0
    %2862 = vmatpush1.msra.mxu0 %v2413
    %2863 = vmatprep.subr.mxu0 0.0
    %2864 = vmatpush1.msra.mxu0 %v2414
    %2865 = vmatprep.subr.mxu0 0.0
    %2866 = vmatpush1.msra.mxu0 %v2415
    %2867 = vmatprep.subr.mxu0 0.0
    %2868 = vmatpush1.msra.mxu0 %v2416
    %2869 = vmatprep.subr.mxu0 0.0
    %2870 = vmatpush1.msra.mxu0 %v2417
    %2871 = vmatprep.subr.mxu0 0.0
    %2872 = vmatpush1.msra.mxu0 %v2418
    %2873 = vmatprep.subr.mxu0 0.0
    %2874 = vmatpush1.msra.mxu0 %v2419
    %2875 = vmatprep.subr.mxu0 0.0
    %2876 = vmatpush1.msra.mxu0 %v2420
    %2877 = vmatprep.subr.mxu0 0.0
    %2878 = vmatpush1.msra.mxu0 %v2421
    %2879 = vmatprep.subr.mxu0 0.0
    %2880 = vmatpush1.msra.mxu0 %v2422
    %2881 = vmatprep.subr.mxu0 0.0
    %2882 = vmatpush1.msra.mxu0 %v2423
    %2883 = vmatprep.subr.mxu0 0.0
    %2884 = vmatpush1.msra.mxu0 %v2424
    %2885 = vmatprep.subr.mxu0 0.0
    %2886 = vmatpush1.msra.mxu0 %v2425
    %2887 = vmatprep.subr.mxu0 0.0
    %2888 = vmatpush1.msra.mxu0 %v2426
    %2889 = vmatprep.subr.mxu0 0.0
    %2890 = vmatpush1.msra.mxu0 %v2427
    %2891 = vmatprep.subr.mxu0 0.0
    %2892 = vmatpush1.msra.mxu0 %v2428
    %2893 = vmatprep.subr.mxu0 0.0
    %2894 = vmatpush1.msra.mxu0 %v2429
    %2895 = vmatprep.subr.mxu0 0.0
    %2896 = vmatpush1.msra.mxu0 %v2430
    %2897 = vmatprep.subr.mxu0 0.0
    %2898 = vmatpush1.msra.mxu0 %v2431
    %2899 = vmatprep.mubr.f32.mxu0 %v2249
    %2900 = vmatmul.mubr.f32.gmra.mrb[0].mxu0 %v2248
    %v2901 = vpop.f32.mrb[0].mxu0
    %v2902 = vadd.f32 %v2827, %v2901
    %v2903 = vpop.f32.mrb[0].mxu0
    %2904 = vmatprep.mubr.f32.mxu0 %v2265
    %2905 = vmatmul.mubr.f32.gmra.mrb[0].mxu0 %v2264
    %v2906 = vpop.f32.mrb[0].mxu0
    %v2907 = vadd.f32 %v2832, %v2906
    %v2908 = vpop.f32.mrb[0].mxu0
    %2909 = vdwg.mxu0
    %2910 = vmatprep.subr.mxu0 0.0
    %2911 = vmatpush1.msra.mxu0 %v2432
    %2912 = vmatprep.subr.mxu0 0.0
    %2913 = vmatpush1.msra.mxu0 %v2433
    %2914 = vmatprep.subr.mxu0 0.0
    %2915 = vmatpush1.msra.mxu0 %v2434
    %2916 = vmatprep.subr.mxu0 0.0
    %2917 = vmatpush1.msra.mxu0 %v2435
    %2918 = vmatprep.subr.mxu0 0.0
    %2919 = vmatpush1.msra.mxu0 %v2436
    %2920 = vmatprep.subr.mxu0 0.0
    %2921 = vmatpush1.msra.mxu0 %v2437
    %2922 = vmatprep.subr.mxu0 0.0
    %2923 = vmatpush1.msra.mxu0 %v2438
    %2924 = vmatprep.subr.mxu0 0.0
    %2925 = vmatpush1.msra.mxu0 %v2439
    %2926 = vmatprep.subr.mxu0 0.0
    %2927 = vmatpush1.msra.mxu0 %v2440
    %2928 = vmatprep.subr.mxu0 0.0
    %2929 = vmatpush1.msra.mxu0 %v2441
    %2930 = vmatprep.subr.mxu0 0.0
    %2931 = vmatpush1.msra.mxu0 %v2442
    %2932 = vmatprep.subr.mxu0 0.0
    %2933 = vmatpush1.msra.mxu0 %v2443
    %2934 = vmatprep.subr.mxu0 0.0
    %2935 = vmatpush1.msra.mxu0 %v2444
    %2936 = vmatprep.subr.mxu0 0.0
    %2937 = vmatpush1.msra.mxu0 %v2445
    %2938 = vmatprep.subr.mxu0 0.0
    %2939 = vmatpush1.msra.mxu0 %v2446
    %2940 = vmatprep.subr.mxu0 0.0
    %2941 = vmatpush1.msra.mxu0 %v2447
    %2942 = vmatprep.subr.mxu0 0.0
    %2943 = vmatpush1.msra.mxu0 %v2448
    %2944 = vmatprep.subr.mxu0 0.0
    %2945 = vmatpush1.msra.mxu0 %v2449
    %2946 = vmatprep.subr.mxu0 0.0
    %2947 = vmatpush1.msra.mxu0 %v2450
    %2948 = vmatprep.subr.mxu0 0.0
    %2949 = vmatpush1.msra.mxu0 %v2451
    %2950 = vmatprep.subr.mxu0 0.0
    %2951 = vmatpush1.msra.mxu0 %v2452
    %2952 = vmatprep.subr.mxu0 0.0
    %2953 = vmatpush1.msra.mxu0 %v2453
    %2954 = vmatprep.subr.mxu0 0.0
    %2955 = vmatpush1.msra.mxu0 %v2454
    %2956 = vmatprep.subr.mxu0 0.0
    %2957 = vmatpush1.msra.mxu0 %v2455
    %2958 = vmatprep.subr.mxu0 0.0
    %2959 = vmatpush1.msra.mxu0 %v2456
    %2960 = vmatprep.subr.mxu0 0.0
    %2961 = vmatpush1.msra.mxu0 %v2457
    %2962 = vmatprep.subr.mxu0 0.0
    %2963 = vmatpush1.msra.mxu0 %v2458
    %2964 = vmatprep.subr.mxu0 0.0
    %2965 = vmatpush1.msra.mxu0 %v2459
    %2966 = vmatprep.subr.mxu0 0.0
    %2967 = vmatpush1.msra.mxu0 %v2460
    %2968 = vmatprep.subr.mxu0 0.0
    %2969 = vmatpush1.msra.mxu0 %v2461
    %2970 = vmatprep.subr.mxu0 0.0
    %2971 = vmatpush1.msra.mxu0 %v2462
    %2972 = vmatprep.subr.mxu0 0.0
    %2973 = vmatpush1.msra.mxu0 %v2463
    %2974 = vmatprep.mubr.f32.mxu0 %v2251
    %2975 = vmatmul.mubr.f32.gmra.mrb[0].mxu0 %v2250
    %v2976 = vpop.f32.mrb[0].mxu0
    %v2977 = vadd.f32 %v2902, %v2976
    %v2978 = vpop.f32.mrb[0].mxu0
    %2979 = vmatprep.mubr.f32.mxu0 %v2267
    %2980 = vmatmul.mubr.f32.gmra.mrb[0].mxu0 %v2266
    %v2981 = vpop.f32.mrb[0].mxu0
    %v2982 = vadd.f32 %v2907, %v2981
    %v2983 = vpop.f32.mrb[0].mxu0
    %2984 = vdwg.mxu0
    %2985 = vmatprep.subr.mxu0 0.0
    %2986 = vmatpush1.msra.mxu0 %v2464
    %2987 = vmatprep.subr.mxu0 0.0
    %2988 = vmatpush1.msra.mxu0 %v2465
    %2989 = vmatprep.subr.mxu0 0.0
    %2990 = vmatpush1.msra.mxu0 %v2466
    %2991 = vmatprep.subr.mxu0 0.0
    %2992 = vmatpush1.msra.mxu0 %v2467
    %2993 = vmatprep.subr.mxu0 0.0
    %2994 = vmatpush1.msra.mxu0 %v2468
    %2995 = vmatprep.subr.mxu0 0.0
    %2996 = vmatpush1.msra.mxu0 %v2469
    %2997 = vmatprep.subr.mxu0 0.0
    %2998 = vmatpush1.msra.mxu0 %v2470
    %2999 = vmatprep.subr.mxu0 0.0
    %3000 = vmatpush1.msra.mxu0 %v2471
    %3001 = vmatprep.subr.mxu0 0.0
    %3002 = vmatpush1.msra.mxu0 %v2472
    %3003 = vmatprep.subr.mxu0 0.0
    %3004 = vmatpush1.msra.mxu0 %v2473
    %3005 = vmatprep.subr.mxu0 0.0
    %3006 = vmatpush1.msra.mxu0 %v2474
    %3007 = vmatprep.subr.mxu0 0.0
    %3008 = vmatpush1.msra.mxu0 %v2475
    %3009 = vmatprep.subr.mxu0 0.0
    %3010 = vmatpush1.msra.mxu0 %v2476
    %3011 = vmatprep.subr.mxu0 0.0
    %3012 = vmatpush1.msra.mxu0 %v2477
    %3013 = vmatprep.subr.mxu0 0.0
    %3014 = vmatpush1.msra.mxu0 %v2478
    %3015 = vmatprep.subr.mxu0 0.0
    %3016 = vmatpush1.msra.mxu0 %v2479
    %3017 = vmatprep.subr.mxu0 0.0
    %3018 = vmatpush1.msra.mxu0 %v2480
    %3019 = vmatprep.subr.mxu0 0.0
    %3020 = vmatpush1.msra.mxu0 %v2481
    %3021 = vmatprep.subr.mxu0 0.0
    %3022 = vmatpush1.msra.mxu0 %v2482
    %3023 = vmatprep.subr.mxu0 0.0
    %3024 = vmatpush1.msra.mxu0 %v2483
    %3025 = vmatprep.subr.mxu0 0.0
    %3026 = vmatpush1.msra.mxu0 %v2484
    %3027 = vmatprep.subr.mxu0 0.0
    %3028 = vmatpush1.msra.mxu0 %v2485
    %3029 = vmatprep.subr.mxu0 0.0
    %3030 = vmatpush1.msra.mxu0 %v2486
    %3031 = vmatprep.subr.mxu0 0.0
    %3032 = vmatpush1.msra.mxu0 %v2487
    %3033 = vmatprep.subr.mxu0 0.0
    %3034 = vmatpush1.msra.mxu0 %v2488
    %3035 = vmatprep.subr.mxu0 0.0
    %3036 = vmatpush1.msra.mxu0 %v2489
    %3037 = vmatprep.subr.mxu0 0.0
    %3038 = vmatpush1.msra.mxu0 %v2490
    %3039 = vmatprep.subr.mxu0 0.0
    %3040 = vmatpush1.msra.mxu0 %v2491
    %3041 = vmatprep.subr.mxu0 0.0
    %3042 = vmatpush1.msra.mxu0 %v2492
    %3043 = vmatprep.subr.mxu0 0.0
    %3044 = vmatpush1.msra.mxu0 %v2493
    %3045 = vmatprep.subr.mxu0 0.0
    %3046 = vmatpush1.msra.mxu0 %v2494
    %3047 = vmatprep.subr.mxu0 0.0
    %3048 = vmatpush1.msra.mxu0 %v2495
    %3049 = vmatprep.mubr.f32.mxu0 %v2253
    %3050 = vmatmul.mubr.f32.gmra.mrb[0].mxu0 %v2252
    %v3051 = vpop.f32.mrb[0].mxu0
    %v3052 = vadd.f32 %v2977, %v3051
    %v3053 = vpop.f32.mrb[0].mxu0
    %3054 = vmatprep.mubr.f32.mxu0 %v2269
    %3055 = vmatmul.mubr.f32.gmra.mrb[0].mxu0 %v2268
    %v3056 = vpop.f32.mrb[0].mxu0
    %v3057 = vadd.f32 %v2982, %v3056
    %v3058 = vpop.f32.mrb[0].mxu0
    %3059 = vdwg.mxu0
    %3060 = vmatprep.subr.mxu0 0.0
    %3061 = vmatpush1.msra.mxu0 %v2496
    %3062 = vmatprep.subr.mxu0 0.0
    %3063 = vmatpush1.msra.mxu0 %v2497
    %3064 = vmatprep.subr.mxu0 0.0
    %3065 = vmatpush1.msra.mxu0 %v2498
    %3066 = vmatprep.subr.mxu0 0.0
    %3067 = vmatpush1.msra.mxu0 %v2499
    %3068 = vmatprep.subr.mxu0 0.0
    %3069 = vmatpush1.msra.mxu0 %v2500
    %3070 = vmatprep.subr.mxu0 0.0
    %3071 = vmatpush1.msra.mxu0 %v2501
    %3072 = vmatprep.subr.mxu0 0.0
    %3073 = vmatpush1.msra.mxu0 %v2502
    %3074 = vmatprep.subr.mxu0 0.0
    %3075 = vmatpush1.msra.mxu0 %v2503
    %3076 = vmatprep.subr.mxu0 0.0
    %3077 = vmatpush1.msra.mxu0 %v2504
    %3078 = vmatprep.subr.mxu0 0.0
    %3079 = vmatpush1.msra.mxu0 %v2505
    %3080 = vmatprep.subr.mxu0 0.0
    %3081 = vmatpush1.msra.mxu0 %v2506
    %3082 = vmatprep.subr.mxu0 0.0
    %3083 = vmatpush1.msra.mxu0 %v2507
    %3084 = vmatprep.subr.mxu0 0.0
    %3085 = vmatpush1.msra.mxu0 %v2508
    %3086 = vmatprep.subr.mxu0 0.0
    %3087 = vmatpush1.msra.mxu0 %v2509
    %3088 = vmatprep.subr.mxu0 0.0
    %3089 = vmatpush1.msra.mxu0 %v2510
    %3090 = vmatprep.subr.mxu0 0.0
    %3091 = vmatpush1.msra.mxu0 %v2511
    %3092 = vmatprep.subr.mxu0 0.0
    %3093 = vmatpush1.msra.mxu0 %v2512
    %3094 = vmatprep.subr.mxu0 0.0
    %3095 = vmatpush1.msra.mxu0 %v2513
    %3096 = vmatprep.subr.mxu0 0.0
    %3097 = vmatpush1.msra.mxu0 %v2514
    %3098 = vmatprep.subr.mxu0 0.0
    %3099 = vmatpush1.msra.mxu0 %v2515
    %3100 = vmatprep.subr.mxu0 0.0
    %3101 = vmatpush1.msra.mxu0 %v2516
    %3102 = vmatprep.subr.mxu0 0.0
    %3103 = vmatpush1.msra.mxu0 %v2517
    %3104 = vmatprep.subr.mxu0 0.0
    %3105 = vmatpush1.msra.mxu0 %v2518
    %3106 = vmatprep.subr.mxu0 0.0
    %3107 = vmatpush1.msra.mxu0 %v2519
    %3108 = vmatprep.subr.mxu0 0.0
    %3109 = vmatpush1.msra.mxu0 %v2520
    %3110 = vmatprep.subr.mxu0 0.0
    %3111 = vmatpush1.msra.mxu0 %v2521
    %3112 = vmatprep.subr.mxu0 0.0
    %3113 = vmatpush1.msra.mxu0 %v2522
    %3114 = vmatprep.subr.mxu0 0.0
    %3115 = vmatpush1.msra.mxu0 %v2523
    %3116 = vmatprep.subr.mxu0 0.0
    %3117 = vmatpush1.msra.mxu0 %v2524
    %3118 = vmatprep.subr.mxu0 0.0
    %3119 = vmatpush1.msra.mxu0 %v2525
    %3120 = vmatprep.subr.mxu0 0.0
    %3121 = vmatpush1.msra.mxu0 %v2526
    %3122 = vmatprep.subr.mxu0 0.0
    %3123 = vmatpush1.msra.mxu0 %v2527
    %3124 = vmatprep.mubr.f32.mxu0 %v2255
    %3125 = vmatmul.mubr.f32.gmra.mrb[0].mxu0 %v2254
    %v3126 = vpop.f32.mrb[0].mxu0
    %v3127 = vadd.f32 %v3052, %v3126
    %v3128 = vpop.f32.mrb[0].mxu0
    %3129 = vmatprep.mubr.f32.mxu0 %v2271
    %3130 = vmatmul.mubr.f32.gmra.mrb[0].mxu0 %v2270
    %v3131 = vpop.f32.mrb[0].mxu0
    %v3132 = vadd.f32 %v3057, %v3131
    %v3133 = vpop.f32.mrb[0].mxu0
    %3134 = vdwg.mxu0
    %v3135 = vadd.f32 %v1468, %v3127
    %v3136 = vadd.f32 %v1469, %v3132
    %v3137 = vld [vmem:[%s13] sm:$0x1]
    %v3138 = vld [vmem:[%s14] sm:$0x1]
    %v3139 = vsel %vm150, %v3135, 0.0
    %3140 = vadd.xlane.f32.xlu0 %v3139
    %v3141 = vpop.xlane.xlu0 %3140
    %v3142 = vsel %vm150, %v3136, 0.0
    %3143 = vadd.xlane.f32.xlu0 %v3142
    %v3144 = vpop.xlane.xlu0 %3143
    %v3145 = vmul.f32 %v3141, %v1433
    %v3146 = vmul.f32 %v3144, %v1433
    %v3147 = vsub.f32 %v3135, %v3145
    %v3148 = vsub.f32 %v3136, %v3146
    %v3149 = vmul.f32 %v3147, %v3147
    %v3150 = vmul.f32 %v3148, %v3148
    %v3151 = vsel %vm150, %v3149, 0.0
    %3152 = vadd.xlane.f32.xlu0 %v3151
    %v3153 = vpop.xlane.xlu0 %3152
    %v3154 = vsel %vm150, %v3150, 0.0
    %3155 = vadd.xlane.f32.xlu0 %v3154
    %v3156 = vpop.xlane.xlu0 %3155
    %v3157 = vmul.f32 %v3153, %v1433
    %v3158 = vmul.f32 %v3156, %v1433
    %v3159 = vadd.f32 %v3157, 1e-05
    %v3160 = vadd.f32 %v3158, 1e-05
    %v3161 = vrsqrt.pop %v3159
    %v3162 = vrsqrt.pop %v3160
    %v3163 = vmul.f32 %v3147, %v3161
    %v3164 = vmul.f32 %v3148, %v3162
    %v3166 = vlaneseq
    %v3167 = vshrl.u32 %v3166, 7
    %v3168 = vsub.s32 0, %v3167
    %v3169 = vrot.slane %v3137, %v3168
    %v3171 = vmul.f32 %v3163, %v3169
    %v3172 = vmul.f32 %v3164, %v3169
    %v3174 = vlaneseq
    %v3175 = vshrl.u32 %v3174, 7
    %v3176 = vsub.s32 0, %v3175
    %v3177 = vrot.slane %v3138, %v3176
    %v3179 = vadd.f32 %v3171, %v3177
    %v3180 = vadd.f32 %v3172, %v3177
    %v3181 = vadd.f32 %v131, %v3179
    %v3182 = vadd.f32 %v136, %v3180
    %3183 = vst.msk [vmem:[#allocation2] sm:$0xff] %vm150, %v3181
    %3184 = vst.msk [vmem:[#allocation2 + $0x8] sm:$0xff] %vm150, %v3182
    // Predicated region
    $region62: #{tpu_custom_call.1} parent=1 // pred_check
      _
    $region63: #{tpu_custom_call.1} parent=1 // pred_check_branch
      %3186 = sbr.rel (0) target = $region65
    $region64: #{tpu_custom_call.1} parent=1 // pred_region
      %s3188 = ssub.s32 256, 256
      %3189 = vsyncadd [#allocation3], %s3188
      %s3190 = sshll.u32 [#allocation2], 4
      %s3191 = int_to_ptr.vmem [resolvable:$true] %s3190
      %3196 = dma.vmem_to_hbm [thread:$0]  %s3191, 256, %s15, [#allocation3], 128, 128, 8
    $region65: #{tpu_custom_call.1} parent=1 // pred_fallthru
      _
    // Predicated region
    $region66: #{tpu_custom_call.1} parent=1 // pred_check
      _
    $region67: #{tpu_custom_call.1} parent=1 // pred_check_branch
      %3198 = sbr.rel (0) target = $region69
    $region68: #{tpu_custom_call.1} parent=1 // pred_region
      %3199 = dma.done [#allocation3], 256
    $region69: #{tpu_custom_call.1} parent=1 // pred_fallthru
      _
    %3200 = vsyncpa [#allocation3], 1

</llo_original>
